<compile_context>
chip_gen: v7x
topology: tpu7x:2x2x1
jax: 0.10.0
libtpu: 0.0.40
codegen_flags: <defaults>
</compile_context>

<pallas_src>
from functools import partial

import numpy as np
import jax
import jax.numpy as jnp
from jax import lax
from jax.experimental import pallas as pl
from jax.experimental.pallas import tpu as pltpu


# ---------------------------------------------------------------------------
# Fused conv + bias + ReLU + 2x2 max-pool kernel (one image per grid step)
# ---------------------------------------------------------------------------
def _conv_relu_pool_kernel(xd_ref, wb_ref, b_ref, o_ref):
    # xd_ref : (1, 2, H//2, W*Cin)   input rows de-interleaved by row parity
    # wb_ref : (KH, 2, W*Cin, WO*Cout) banded weights, split by ow parity
    # b_ref  : (1, WO*Cout)          bias tiled over ow
    # o_ref  : (1, HO, WO*Cout)      pooled output, cols = (ow//2)*Cout + cout
    KH = wb_ref.shape[0]
    HO = o_ref.shape[1]
    bias = b_ref[...]                                    # (1, WO*Cout)

    acc = [[None, None], [None, None]]                   # [oh parity][ow parity]
    for kh in range(KH):
        lhs = []
        for a in (0, 1):                                 # conv-output row parity
            start = kh + a                               # input row offset
            p, r0 = start % 2, start // 2
            lhs.append(xd_ref[0, p, r0:r0 + HO, :])      # (HO, W*Cin) contiguous
        for b in (0, 1):                                 # conv-output col parity
            w_tap = wb_ref[kh, b]                        # (W*Cin, WO*Cout)
            for a in (0, 1):
                contrib = jnp.dot(lhs[a], w_tap,
                                  preferred_element_type=jnp.float32)
                acc[a][b] = contrib if acc[a][b] is None else acc[a][b] + contrib

    pooled = None
    for a in (0, 1):
        for b in (0, 1):
            y = jnp.maximum(acc[a][b] + bias, 0.0)       # bias + ReLU
            pooled = y if pooled is None else jnp.maximum(pooled, y)
    o_ref[0] = pooled.astype(o_ref.dtype)                # 2x2 max-pool done


def conv_relu_pool(xd, wb, bias_row, *, HO):
    """xd: (B, 2, H//2, W*Cin), wb: (KH, 2, W*Cin, WO*Cout) -> (B, HO, WO*Cout)."""
    B, _, Hp, Wc = xd.shape
    KH, _, _, half = wb.shape
    flops = int(2 * B * KH * 4 * HO * Wc * half)
    bytes_accessed = int(4 * (xd.size + wb.size + bias_row.size + B * HO * half))
    return pl.pallas_call(
        _conv_relu_pool_kernel,
        out_shape=jax.ShapeDtypeStruct((B, HO, half), jnp.float32),
        grid=(B,),
        in_specs=[
            pl.BlockSpec((1, 2, Hp, Wc), lambda i: (i, 0, 0, 0)),
            pl.BlockSpec((KH, 2, Wc, half), lambda i: (0, 0, 0, 0)),  # VMEM-resident
            pl.BlockSpec((1, half), lambda i: (0, 0)),
        ],
        out_specs=pl.BlockSpec((1, HO, half), lambda i: (i, 0, 0)),
        compiler_params=pltpu.CompilerParams(
            dimension_semantics=("parallel",),
            vmem_limit_bytes=32 * 1024 * 1024,
        ),
        cost_estimate=pl.CostEstimate(flops=flops, transcendentals=0,
                                      bytes_accessed=bytes_accessed),
    )(xd, wb, bias_row)


# ---------------------------------------------------------------------------
# Fused fc1 -> ReLU -> fc2 -> ReLU -> fc3 kernel
# ---------------------------------------------------------------------------
def _fc_kernel(x_ref, w1_ref, b1_ref, w2_ref, b2_ref, w3_ref, b3_ref, o_ref):
    h = jnp.dot(x_ref[...], w1_ref[...], preferred_element_type=jnp.float32) + b1_ref[...]
    h = jnp.maximum(h, 0.0)
    h = jnp.dot(h, w2_ref[...], preferred_element_type=jnp.float32) + b2_ref[...]
    h = jnp.maximum(h, 0.0)
    o = jnp.dot(h, w3_ref[...], preferred_element_type=jnp.float32) + b3_ref[...]
    o_ref[...] = o.astype(o_ref.dtype)


def fc_forward(x, w1, b1, w2, b2, w3, b3, *, tm=256):
    B, K = x.shape
    H1, H2, NC = w1.shape[1], w2.shape[1], w3.shape[1]
    if B <= tm:
        TM, xp = B, x
    else:
        TM = tm
        pad = (-B) % TM
        xp = jnp.pad(x, ((0, pad), (0, 0))) if pad else x
    Bp = xp.shape[0]
    flops = int(2 * Bp * (K * H1 + H1 * H2 + H2 * NC))
    bytes_accessed = int(4 * (Bp * K + K * H1 + H1 + H1 * H2 + H2 + H2 * NC + NC + Bp * NC))
    out = pl.pallas_call(
        _fc_kernel,
        out_shape=jax.ShapeDtypeStruct((Bp, NC), jnp.float32),
        grid=(Bp // TM,),
        in_specs=[
            pl.BlockSpec((TM, K), lambda m: (m, 0)),
            pl.BlockSpec((K, H1), lambda m: (0, 0)),
            pl.BlockSpec((1, H1), lambda m: (0, 0)),
            pl.BlockSpec((H1, H2), lambda m: (0, 0)),
            pl.BlockSpec((1, H2), lambda m: (0, 0)),
            pl.BlockSpec((H2, NC), lambda m: (0, 0)),
            pl.BlockSpec((1, NC), lambda m: (0, 0)),
        ],
        out_specs=pl.BlockSpec((TM, NC), lambda m: (m, 0)),
        compiler_params=pltpu.CompilerParams(
            dimension_semantics=("parallel",),
            vmem_limit_bytes=32 * 1024 * 1024,
        ),
        cost_estimate=pl.CostEstimate(flops=flops, transcendentals=0,
                                      bytes_accessed=bytes_accessed),
    )(xp, w1, b1, w2, b2, w3, b3)
    return out[:B]


# ---------------------------------------------------------------------------
# One-time weight lowering (done at init, never on the hot path)
# ---------------------------------------------------------------------------
def _banded_conv_weight(w_hwio, *, W, WO):
    """Lower a (KH,KW,Cin,Cout) kernel to banded matrices for row-slab matmuls.

    wb[kh, b, w*Cin + ci, j*Cout + co] = w_hwio[kh, w - (2j + b), ci, co]
    (zero outside [0, KW)), so that a contiguous input row-slab times wb[kh, b]
    gives the conv partial sums for output pixels (oh, ow = 2j + b); the 2x2
    pool partners then differ only in (a, b) accumulator index.
    """
    KH, KW, Cin, Cout = w_hwio.shape
    Wc, half = W * Cin, WO * Cout
    wb = np.zeros((KH, 2, Wc, half), np.float32)
    for b in range(2):
        for j in range(WO):
            for kw in range(KW):
                w_in = 2 * j + b + kw
                wb[:, b, w_in * Cin:(w_in + 1) * Cin,
                   j * Cout:(j + 1) * Cout] = w_hwio[:, kw, :, :]
    return jnp.asarray(wb)


def init_params(key, num_classes):
    ks = jax.random.split(key, 10)

    def u(k, shape, fan_in):
        bound = 1.0 / (fan_in ** 0.5)
        return jax.random.uniform(k, shape, jnp.float32, -bound, bound)

    raw = {  # torch-layout parameters
        "w1": u(ks[0], (6, 3, 5, 5), 75),            "b1": u(ks[1], (6,), 75),
        "w2": u(ks[2], (16, 6, 5, 5), 150),          "b2": u(ks[3], (16,), 150),
        "fc1_w": u(ks[4], (120, 400), 400),          "fc1_b": u(ks[5], (120,), 400),
        "fc2_w": u(ks[6], (84, 120), 120),           "fc2_b": u(ks[7], (84,), 120),
        "fc3_w": u(ks[8], (num_classes, 84), 84),    "fc3_b": u(ks[9], (num_classes,), 84),
    }

    w1_hwio = np.asarray(jnp.transpose(raw["w1"], (2, 3, 1, 0)))   # (5,5,3,6)
    w2_hwio = np.asarray(jnp.transpose(raw["w2"], (2, 3, 1, 0)))   # (5,5,6,16)

    params = {
        "wb1": _banded_conv_weight(w1_hwio, W=32, WO=14),          # (5,2,96,84)
        "b1_row": jnp.tile(raw["b1"], 14)[None, :],                # (1,84)
        "wb2": _banded_conv_weight(w2_hwio, W=14, WO=5),           # (5,2,84,80)
        "b2_row": jnp.tile(raw["b2"], 5)[None, :],                 # (1,80)
        # Fold torch's NCHW flatten into fc1: reorder rows (c,h,w) -> (h,w,c).
        "fc1_w": jnp.transpose(raw["fc1_w"].reshape(120, 16, 5, 5),
                               (2, 3, 1, 0)).reshape(400, 120),
        "fc1_b": raw["fc1_b"][None, :],
        "fc2_w": raw["fc2_w"].T, "fc2_b": raw["fc2_b"][None, :],
        "fc3_w": raw["fc3_w"].T, "fc3_b": raw["fc3_b"][None, :],
    }
    return params, raw


# ---------------------------------------------------------------------------
# Forward pass (mirrors CNNCifar.forward)
# ---------------------------------------------------------------------------
def cnn_cifar_forward(params, x_nchw):
    B = x_nchw.shape[0]
    # NCHW -> (B, H, W*C) NHWC-flat, then split rows by parity so the fused
    # conv+pool kernels only ever load contiguous row slabs (plain XLA reshape
    # of the tiny raw input; the big pre-pool activations never touch HBM).
    x = jnp.transpose(x_nchw, (0, 2, 3, 1)).reshape(B, 32, 96)
    xd = x.reshape(B, 16, 2, 96).transpose(0, 2, 1, 3)                  # (B,2,16,96)
    a1 = conv_relu_pool(xd, params["wb1"], params["b1_row"], HO=14)     # (B,14,84)
    a1d = a1.reshape(B, 7, 2, 84).transpose(0, 2, 1, 3)                 # (B,2,7,84)
    a2 = conv_relu_pool(a1d, params["wb2"], params["b2_row"], HO=5)     # (B,5,80)
    feat = a2.reshape(B, 400)            # NHWC-flat; fc1_w permuted to match torch
    return fc_forward(feat, params["fc1_w"], params["fc1_b"],
                      params["fc2_w"], params["fc2_b"],
                      params["fc3_w"], params["fc3_b"])


# ---------------------------------------------------------------------------
# Pure-JAX reference (torch-layout params) for in-script correctness check
# ---------------------------------------------------------------------------
def _reference_forward(raw, x_nchw):
    def conv(x, w, b):
        y = lax.conv_general_dilated(x, w, (1, 1), "VALID",
                                     dimension_numbers=("NCHW", "OIHW", "NCHW"))
        return jax.nn.relu(y + b[None, :, None, None])

    def pool(y):
        b, c, h, w = y.shape
        return y.reshape(b, c, h // 2, 2, w // 2, 2).max(axis=(3, 5))

    y = pool(conv(x_nchw, raw["w1"], raw["b1"]))
    y = pool(conv(y, raw["w2"], raw["b2"]))
    f = y.reshape(y.shape[0], -1)
    f = jax.nn.relu(f @ raw["fc1_w"].T + raw["fc1_b"])
    f = jax.nn.relu(f @ raw["fc2_w"].T + raw["fc2_b"])
    return f @ raw["fc3_w"].T + raw["fc3_b"]


if __name__ == "__main__":
    num_classes = 10
    key = jax.random.PRNGKey(0)
    pkey, xkey = jax.random.split(key)
    params, raw = init_params(pkey, num_classes)

    # CIFAR-shaped input (the hard-coded 16*5*5 flatten requires 3x32x32).
    x = jax.random.normal(xkey, (2, 3, 32, 32), dtype=jnp.float32)

    out = jax.block_until_ready(jax.jit(cnn_cifar_forward)(params, x))
    assert out.shape == (2, num_classes), out.shape
    assert bool(jnp.all(jnp.isfinite(out)))

    ref = jax.block_until_ready(jax.jit(_reference_forward)(raw, x))
    np.testing.assert_allclose(np.asarray(out), np.asarray(ref),
                               rtol=5e-2, atol=5e-2)
    print("KERNEL_OK")
</pallas_src>

<mosaic_0001>
module attributes {stable_mosaic.version = 11 : i64} {
  func.func @_conv_relu_pool_kernel(%arg0: i32, %arg1: memref<1x2x16x96xf32, #tpu.memory_space<vmem>>, %arg2: memref<5x2x96x84xf32, #tpu.memory_space<vmem>>, %arg3: memref<1x84xf32, #tpu.memory_space<vmem>>, %arg4: memref<1x14x84xf32, #tpu.memory_space<vmem>>) attributes {dimension_semantics = [#tpu.dimension_semantics<parallel>], iteration_bounds = array<i64: 2>, scalar_prefetch = 0 : i64, scratch_operands = 0 : i64, tpu.core_type = #tpu.core_type<tc>, window_params = [{transform_indices = @transform_0, window_bounds = array<i64: 1, 2, 16, 96>}, {pipeline_mode = #tpu.pipeline_mode<synchronous>, transform_indices = @transform_1, window_bounds = array<i64: 5, 2, 96, 84>}, {pipeline_mode = #tpu.pipeline_mode<synchronous>, transform_indices = @transform_2, window_bounds = array<i64: 1, 84>}, {transform_indices = @transform_3, window_bounds = array<i64: 1, 14, 84>}]} {
    %c0 = arith.constant 0 : index
    %c0_0 = arith.constant 0 : index
    %0 = vector.load %arg3[%c0, %c0_0] : memref<1x84xf32, #tpu.memory_space<vmem>>, vector<1x84xf32>
    %c0_1 = arith.constant 0 : index
    %c0_2 = arith.constant 0 : index
    %c0_3 = arith.constant 0 : index
    %c0_4 = arith.constant 0 : index
    %1 = vector.load %arg1[%c0_1, %c0_2, %c0_3, %c0_4] : memref<1x2x16x96xf32, #tpu.memory_space<vmem>>, vector<1x1x14x96xf32>
    %2 = vector.shape_cast %1 : vector<1x1x14x96xf32> to vector<14x96xf32>
    %c0_5 = arith.constant 0 : index
    %c1 = arith.constant 1 : index
    %c0_6 = arith.constant 0 : index
    %c0_7 = arith.constant 0 : index
    %3 = vector.load %arg1[%c0_5, %c1, %c0_6, %c0_7] : memref<1x2x16x96xf32, #tpu.memory_space<vmem>>, vector<1x1x14x96xf32>
    %4 = vector.shape_cast %3 : vector<1x1x14x96xf32> to vector<14x96xf32>
    %c0_8 = arith.constant 0 : index
    %c0_9 = arith.constant 0 : index
    %c0_10 = arith.constant 0 : index
    %c0_11 = arith.constant 0 : index
    %5 = vector.load %arg2[%c0_8, %c0_9, %c0_10, %c0_11] : memref<5x2x96x84xf32, #tpu.memory_space<vmem>>, vector<1x1x96x84xf32>
    %6 = vector.shape_cast %5 : vector<1x1x96x84xf32> to vector<96x84xf32>
    %cst = arith.constant dense<0.000000e+00> : vector<14x84xf32>
    %7 = tpu.matmul %2, %6, %cst {dimension_numbers = #tpu.dot_dimension_numbers<[1], [0], [0], [1], [0, 0, 1, 1], [], []>} : vector<14x96xf32>, vector<96x84xf32>, vector<14x84xf32> -> vector<14x84xf32>
    %cst_12 = arith.constant dense<0.000000e+00> : vector<14x84xf32>
    %8 = tpu.matmul %4, %6, %cst_12 {dimension_numbers = #tpu.dot_dimension_numbers<[1], [0], [0], [1], [0, 0, 1, 1], [], []>} : vector<14x96xf32>, vector<96x84xf32>, vector<14x84xf32> -> vector<14x84xf32>
    %c0_13 = arith.constant 0 : index
    %c1_14 = arith.constant 1 : index
    %c0_15 = arith.constant 0 : index
    %c0_16 = arith.constant 0 : index
    %9 = vector.load %arg2[%c0_13, %c1_14, %c0_15, %c0_16] : memref<5x2x96x84xf32, #tpu.memory_space<vmem>>, vector<1x1x96x84xf32>
    %10 = vector.shape_cast %9 : vector<1x1x96x84xf32> to vector<96x84xf32>
    %cst_17 = arith.constant dense<0.000000e+00> : vector<14x84xf32>
    %11 = tpu.matmul %2, %10, %cst_17 {dimension_numbers = #tpu.dot_dimension_numbers<[1], [0], [0], [1], [0, 0, 1, 1], [], []>} : vector<14x96xf32>, vector<96x84xf32>, vector<14x84xf32> -> vector<14x84xf32>
    %cst_18 = arith.constant dense<0.000000e+00> : vector<14x84xf32>
    %12 = tpu.matmul %4, %10, %cst_18 {dimension_numbers = #tpu.dot_dimension_numbers<[1], [0], [0], [1], [0, 0, 1, 1], [], []>} : vector<14x96xf32>, vector<96x84xf32>, vector<14x84xf32> -> vector<14x84xf32>
    %c0_19 = arith.constant 0 : index
    %c1_20 = arith.constant 1 : index
    %c0_21 = arith.constant 0 : index
    %c0_22 = arith.constant 0 : index
    %13 = vector.load %arg1[%c0_19, %c1_20, %c0_21, %c0_22] : memref<1x2x16x96xf32, #tpu.memory_space<vmem>>, vector<1x1x14x96xf32>
    %14 = vector.shape_cast %13 : vector<1x1x14x96xf32> to vector<14x96xf32>
    %c0_23 = arith.constant 0 : index
    %c0_24 = arith.constant 0 : index
    %c1_25 = arith.constant 1 : index
    %c0_26 = arith.constant 0 : index
    %15 = vector.load %arg1[%c0_23, %c0_24, %c1_25, %c0_26] : memref<1x2x16x96xf32, #tpu.memory_space<vmem>>, vector<1x1x14x96xf32>
    %16 = vector.shape_cast %15 : vector<1x1x14x96xf32> to vector<14x96xf32>
    %c1_27 = arith.constant 1 : index
    %c0_28 = arith.constant 0 : index
    %c0_29 = arith.constant 0 : index
    %c0_30 = arith.constant 0 : index
    %17 = vector.load %arg2[%c1_27, %c0_28, %c0_29, %c0_30] : memref<5x2x96x84xf32, #tpu.memory_space<vmem>>, vector<1x1x96x84xf32>
    %18 = vector.shape_cast %17 : vector<1x1x96x84xf32> to vector<96x84xf32>
    %cst_31 = arith.constant dense<0.000000e+00> : vector<14x84xf32>
    %19 = tpu.matmul %14, %18, %cst_31 {dimension_numbers = #tpu.dot_dimension_numbers<[1], [0], [0], [1], [0, 0, 1, 1], [], []>} : vector<14x96xf32>, vector<96x84xf32>, vector<14x84xf32> -> vector<14x84xf32>
    %20 = arith.addf %7, %19 : vector<14x84xf32>
    %cst_32 = arith.constant dense<0.000000e+00> : vector<14x84xf32>
    %21 = tpu.matmul %16, %18, %cst_32 {dimension_numbers = #tpu.dot_dimension_numbers<[1], [0], [0], [1], [0, 0, 1, 1], [], []>} : vector<14x96xf32>, vector<96x84xf32>, vector<14x84xf32> -> vector<14x84xf32>
    %22 = arith.addf %8, %21 : vector<14x84xf32>
    %c1_33 = arith.constant 1 : index
    %c1_34 = arith.constant 1 : index
    %c0_35 = arith.constant 0 : index
    %c0_36 = arith.constant 0 : index
    %23 = vector.load %arg2[%c1_33, %c1_34, %c0_35, %c0_36] : memref<5x2x96x84xf32, #tpu.memory_space<vmem>>, vector<1x1x96x84xf32>
    %24 = vector.shape_cast %23 : vector<1x1x96x84xf32> to vector<96x84xf32>
    %cst_37 = arith.constant dense<0.000000e+00> : vector<14x84xf32>
    %25 = tpu.matmul %14, %24, %cst_37 {dimension_numbers = #tpu.dot_dimension_numbers<[1], [0], [0], [1], [0, 0, 1, 1], [], []>} : vector<14x96xf32>, vector<96x84xf32>, vector<14x84xf32> -> vector<14x84xf32>
    %26 = arith.addf %11, %25 : vector<14x84xf32>
    %cst_38 = arith.constant dense<0.000000e+00> : vector<14x84xf32>
    %27 = tpu.matmul %16, %24, %cst_38 {dimension_numbers = #tpu.dot_dimension_numbers<[1], [0], [0], [1], [0, 0, 1, 1], [], []>} : vector<14x96xf32>, vector<96x84xf32>, vector<14x84xf32> -> vector<14x84xf32>
    %28 = arith.addf %12, %27 : vector<14x84xf32>
    %c0_39 = arith.constant 0 : index
    %c0_40 = arith.constant 0 : index
    %c1_41 = arith.constant 1 : index
    %c0_42 = arith.constant 0 : index
    %29 = vector.load %arg1[%c0_39, %c0_40, %c1_41, %c0_42] : memref<1x2x16x96xf32, #tpu.memory_space<vmem>>, vector<1x1x14x96xf32>
    %30 = vector.shape_cast %29 : vector<1x1x14x96xf32> to vector<14x96xf32>
    %c0_43 = arith.constant 0 : index
    %c1_44 = arith.constant 1 : index
    %c1_45 = arith.constant 1 : index
    %c0_46 = arith.constant 0 : index
    %31 = vector.load %arg1[%c0_43, %c1_44, %c1_45, %c0_46] : memref<1x2x16x96xf32, #tpu.memory_space<vmem>>, vector<1x1x14x96xf32>
    %32 = vector.shape_cast %31 : vector<1x1x14x96xf32> to vector<14x96xf32>
    %c2 = arith.constant 2 : index
    %c0_47 = arith.constant 0 : index
    %c0_48 = arith.constant 0 : index
    %c0_49 = arith.constant 0 : index
    %33 = vector.load %arg2[%c2, %c0_47, %c0_48, %c0_49] : memref<5x2x96x84xf32, #tpu.memory_space<vmem>>, vector<1x1x96x84xf32>
    %34 = vector.shape_cast %33 : vector<1x1x96x84xf32> to vector<96x84xf32>
    %cst_50 = arith.constant dense<0.000000e+00> : vector<14x84xf32>
    %35 = tpu.matmul %30, %34, %cst_50 {dimension_numbers = #tpu.dot_dimension_numbers<[1], [0], [0], [1], [0, 0, 1, 1], [], []>} : vector<14x96xf32>, vector<96x84xf32>, vector<14x84xf32> -> vector<14x84xf32>
    %36 = arith.addf %20, %35 : vector<14x84xf32>
    %cst_51 = arith.constant dense<0.000000e+00> : vector<14x84xf32>
    %37 = tpu.matmul %32, %34, %cst_51 {dimension_numbers = #tpu.dot_dimension_numbers<[1], [0], [0], [1], [0, 0, 1, 1], [], []>} : vector<14x96xf32>, vector<96x84xf32>, vector<14x84xf32> -> vector<14x84xf32>
    %38 = arith.addf %22, %37 : vector<14x84xf32>
    %c2_52 = arith.constant 2 : index
    %c1_53 = arith.constant 1 : index
    %c0_54 = arith.constant 0 : index
    %c0_55 = arith.constant 0 : index
    %39 = vector.load %arg2[%c2_52, %c1_53, %c0_54, %c0_55] : memref<5x2x96x84xf32, #tpu.memory_space<vmem>>, vector<1x1x96x84xf32>
    %40 = vector.shape_cast %39 : vector<1x1x96x84xf32> to vector<96x84xf32>
    %cst_56 = arith.constant dense<0.000000e+00> : vector<14x84xf32>
    %41 = tpu.matmul %30, %40, %cst_56 {dimension_numbers = #tpu.dot_dimension_numbers<[1], [0], [0], [1], [0, 0, 1, 1], [], []>} : vector<14x96xf32>, vector<96x84xf32>, vector<14x84xf32> -> vector<14x84xf32>
    %42 = arith.addf %26, %41 : vector<14x84xf32>
    %cst_57 = arith.constant dense<0.000000e+00> : vector<14x84xf32>
    %43 = tpu.matmul %32, %40, %cst_57 {dimension_numbers = #tpu.dot_dimension_numbers<[1], [0], [0], [1], [0, 0, 1, 1], [], []>} : vector<14x96xf32>, vector<96x84xf32>, vector<14x84xf32> -> vector<14x84xf32>
    %44 = arith.addf %28, %43 : vector<14x84xf32>
    %c0_58 = arith.constant 0 : index
    %c1_59 = arith.constant 1 : index
    %c1_60 = arith.constant 1 : index
    %c0_61 = arith.constant 0 : index
    %45 = vector.load %arg1[%c0_58, %c1_59, %c1_60, %c0_61] : memref<1x2x16x96xf32, #tpu.memory_space<vmem>>, vector<1x1x14x96xf32>
    %46 = vector.shape_cast %45 : vector<1x1x14x96xf32> to vector<14x96xf32>
    %c0_62 = arith.constant 0 : index
    %c0_63 = arith.constant 0 : index
    %c2_64 = arith.constant 2 : index
    %c0_65 = arith.constant 0 : index
    %47 = vector.load %arg1[%c0_62, %c0_63, %c2_64, %c0_65] : memref<1x2x16x96xf32, #tpu.memory_space<vmem>>, vector<1x1x14x96xf32>
    %48 = vector.shape_cast %47 : vector<1x1x14x96xf32> to vector<14x96xf32>
    %c3 = arith.constant 3 : index
    %c0_66 = arith.constant 0 : index
    %c0_67 = arith.constant 0 : index
    %c0_68 = arith.constant 0 : index
    %49 = vector.load %arg2[%c3, %c0_66, %c0_67, %c0_68] : memref<5x2x96x84xf32, #tpu.memory_space<vmem>>, vector<1x1x96x84xf32>
    %50 = vector.shape_cast %49 : vector<1x1x96x84xf32> to vector<96x84xf32>
    %cst_69 = arith.constant dense<0.000000e+00> : vector<14x84xf32>
    %51 = tpu.matmul %46, %50, %cst_69 {dimension_numbers = #tpu.dot_dimension_numbers<[1], [0], [0], [1], [0, 0, 1, 1], [], []>} : vector<14x96xf32>, vector<96x84xf32>, vector<14x84xf32> -> vector<14x84xf32>
    %52 = arith.addf %36, %51 : vector<14x84xf32>
    %cst_70 = arith.constant dense<0.000000e+00> : vector<14x84xf32>
    %53 = tpu.matmul %48, %50, %cst_70 {dimension_numbers = #tpu.dot_dimension_numbers<[1], [0], [0], [1], [0, 0, 1, 1], [], []>} : vector<14x96xf32>, vector<96x84xf32>, vector<14x84xf32> -> vector<14x84xf32>
    %54 = arith.addf %38, %53 : vector<14x84xf32>
    %c3_71 = arith.constant 3 : index
    %c1_72 = arith.constant 1 : index
    %c0_73 = arith.constant 0 : index
    %c0_74 = arith.constant 0 : index
    %55 = vector.load %arg2[%c3_71, %c1_72, %c0_73, %c0_74] : memref<5x2x96x84xf32, #tpu.memory_space<vmem>>, vector<1x1x96x84xf32>
    %56 = vector.shape_cast %55 : vector<1x1x96x84xf32> to vector<96x84xf32>
    %cst_75 = arith.constant dense<0.000000e+00> : vector<14x84xf32>
    %57 = tpu.matmul %46, %56, %cst_75 {dimension_numbers = #tpu.dot_dimension_numbers<[1], [0], [0], [1], [0, 0, 1, 1], [], []>} : vector<14x96xf32>, vector<96x84xf32>, vector<14x84xf32> -> vector<14x84xf32>
    %58 = arith.addf %42, %57 : vector<14x84xf32>
    %cst_76 = arith.constant dense<0.000000e+00> : vector<14x84xf32>
    %59 = tpu.matmul %48, %56, %cst_76 {dimension_numbers = #tpu.dot_dimension_numbers<[1], [0], [0], [1], [0, 0, 1, 1], [], []>} : vector<14x96xf32>, vector<96x84xf32>, vector<14x84xf32> -> vector<14x84xf32>
    %60 = arith.addf %44, %59 : vector<14x84xf32>
    %c0_77 = arith.constant 0 : index
    %c0_78 = arith.constant 0 : index
    %c2_79 = arith.constant 2 : index
    %c0_80 = arith.constant 0 : index
    %61 = vector.load %arg1[%c0_77, %c0_78, %c2_79, %c0_80] : memref<1x2x16x96xf32, #tpu.memory_space<vmem>>, vector<1x1x14x96xf32>
    %62 = vector.shape_cast %61 : vector<1x1x14x96xf32> to vector<14x96xf32>
    %c0_81 = arith.constant 0 : index
    %c1_82 = arith.constant 1 : index
    %c2_83 = arith.constant 2 : index
    %c0_84 = arith.constant 0 : index
    %63 = vector.load %arg1[%c0_81, %c1_82, %c2_83, %c0_84] : memref<1x2x16x96xf32, #tpu.memory_space<vmem>>, vector<1x1x14x96xf32>
    %64 = vector.shape_cast %63 : vector<1x1x14x96xf32> to vector<14x96xf32>
    %c4 = arith.constant 4 : index
    %c0_85 = arith.constant 0 : index
    %c0_86 = arith.constant 0 : index
    %c0_87 = arith.constant 0 : index
    %65 = vector.load %arg2[%c4, %c0_85, %c0_86, %c0_87] : memref<5x2x96x84xf32, #tpu.memory_space<vmem>>, vector<1x1x96x84xf32>
    %66 = vector.shape_cast %65 : vector<1x1x96x84xf32> to vector<96x84xf32>
    %cst_88 = arith.constant dense<0.000000e+00> : vector<14x84xf32>
    %67 = tpu.matmul %62, %66, %cst_88 {dimension_numbers = #tpu.dot_dimension_numbers<[1], [0], [0], [1], [0, 0, 1, 1], [], []>} : vector<14x96xf32>, vector<96x84xf32>, vector<14x84xf32> -> vector<14x84xf32>
    %68 = arith.addf %52, %67 : vector<14x84xf32>
    %cst_89 = arith.constant dense<0.000000e+00> : vector<14x84xf32>
    %69 = tpu.matmul %64, %66, %cst_89 {dimension_numbers = #tpu.dot_dimension_numbers<[1], [0], [0], [1], [0, 0, 1, 1], [], []>} : vector<14x96xf32>, vector<96x84xf32>, vector<14x84xf32> -> vector<14x84xf32>
    %70 = arith.addf %54, %69 : vector<14x84xf32>
    %c4_90 = arith.constant 4 : index
    %c1_91 = arith.constant 1 : index
    %c0_92 = arith.constant 0 : index
    %c0_93 = arith.constant 0 : index
    %71 = vector.load %arg2[%c4_90, %c1_91, %c0_92, %c0_93] : memref<5x2x96x84xf32, #tpu.memory_space<vmem>>, vector<1x1x96x84xf32>
    %72 = vector.shape_cast %71 : vector<1x1x96x84xf32> to vector<96x84xf32>
    %cst_94 = arith.constant dense<0.000000e+00> : vector<14x84xf32>
    %73 = tpu.matmul %62, %72, %cst_94 {dimension_numbers = #tpu.dot_dimension_numbers<[1], [0], [0], [1], [0, 0, 1, 1], [], []>} : vector<14x96xf32>, vector<96x84xf32>, vector<14x84xf32> -> vector<14x84xf32>
    %74 = arith.addf %58, %73 : vector<14x84xf32>
    %cst_95 = arith.constant dense<0.000000e+00> : vector<14x84xf32>
    %75 = tpu.matmul %64, %72, %cst_95 {dimension_numbers = #tpu.dot_dimension_numbers<[1], [0], [0], [1], [0, 0, 1, 1], [], []>} : vector<14x96xf32>, vector<96x84xf32>, vector<14x84xf32> -> vector<14x84xf32>
    %76 = arith.addf %60, %75 : vector<14x84xf32>
    %77 = vector.broadcast %0 : vector<1x84xf32> to vector<14x84xf32>
    %78 = arith.addf %68, %77 : vector<14x84xf32>
    %cst_96 = arith.constant 0.000000e+00 : f32
    %79 = vector.broadcast %cst_96 : f32 to vector<14x84xf32>
    %80 = arith.maximumf %78, %79 : vector<14x84xf32>
    %81 = vector.broadcast %0 : vector<1x84xf32> to vector<14x84xf32>
    %82 = arith.addf %74, %81 : vector<14x84xf32>
    %cst_97 = arith.constant 0.000000e+00 : f32
    %83 = vector.broadcast %cst_97 : f32 to vector<14x84xf32>
    %84 = arith.maximumf %82, %83 : vector<14x84xf32>
    %85 = arith.maximumf %80, %84 : vector<14x84xf32>
    %86 = vector.broadcast %0 : vector<1x84xf32> to vector<14x84xf32>
    %87 = arith.addf %70, %86 : vector<14x84xf32>
    %cst_98 = arith.constant 0.000000e+00 : f32
    %88 = vector.broadcast %cst_98 : f32 to vector<14x84xf32>
    %89 = arith.maximumf %87, %88 : vector<14x84xf32>
    %90 = arith.maximumf %85, %89 : vector<14x84xf32>
    %91 = vector.broadcast %0 : vector<1x84xf32> to vector<14x84xf32>
    %92 = arith.addf %76, %91 : vector<14x84xf32>
    %cst_99 = arith.constant 0.000000e+00 : f32
    %93 = vector.broadcast %cst_99 : f32 to vector<14x84xf32>
    %94 = arith.maximumf %92, %93 : vector<14x84xf32>
    %95 = arith.maximumf %90, %94 : vector<14x84xf32>
    %c0_100 = arith.constant 0 : index
    %c0_101 = arith.constant 0 : index
    %c0_102 = arith.constant 0 : index
    %96 = vector.load %arg4[%c0_100, %c0_101, %c0_102] : memref<1x14x84xf32, #tpu.memory_space<vmem>>, vector<1x14x84xf32>
    %97 = vector.shape_cast %96 : vector<1x14x84xf32> to vector<14x84xf32>
    %98 = vector.shape_cast %95 : vector<14x84xf32> to vector<1x14x84xf32>
    tpu.vector_store %arg4[%c0_100, %c0_101, %c0_102], %98 {strides = array<i32>} : memref<1x14x84xf32, #tpu.memory_space<vmem>>, vector<1x14x84xf32>,
    return
  }
  func.func @transform_0(%arg0: i32) -> (i32, i32, i32, i32) {
    %c0_i32 = arith.constant 0 : i32
    %c0_i32_0 = arith.constant 0 : i32
    %c0_i32_1 = arith.constant 0 : i32
    %c0_i32_2 = arith.constant 0 : i32
    return %arg0, %c0_i32, %c0_i32_0, %c0_i32_1 : i32, i32, i32, i32
  }
  func.func @transform_1(%arg0: i32) -> (i32, i32, i32, i32) {
    %c0_i32 = arith.constant 0 : i32
    %c0_i32_0 = arith.constant 0 : i32
    %c0_i32_1 = arith.constant 0 : i32
    %c0_i32_2 = arith.constant 0 : i32
    %c0_i32_3 = arith.constant 0 : i32
    return %c0_i32, %c0_i32_0, %c0_i32_1, %c0_i32_2 : i32, i32, i32, i32
  }
  func.func @transform_2(%arg0: i32) -> (i32, i32) {
    %c0_i32 = arith.constant 0 : i32
    %c0_i32_0 = arith.constant 0 : i32
    %c0_i32_1 = arith.constant 0 : i32
    return %c0_i32, %c0_i32_0 : i32, i32
  }
  func.func @transform_3(%arg0: i32) -> (i32, i32, i32) {
    %c0_i32 = arith.constant 0 : i32
    %c0_i32_0 = arith.constant 0 : i32
    %c0_i32_1 = arith.constant 0 : i32
    return %arg0, %c0_i32, %c0_i32_0 : i32, i32, i32
  }
}

module attributes {stable_mosaic.version = 11 : i64} {
  func.func @_conv_relu_pool_kernel(%arg0: i32, %arg1: memref<1x2x7x84xf32, #tpu.memory_space<vmem>>, %arg2: memref<5x2x84x80xf32, #tpu.memory_space<vmem>>, %arg3: memref<1x80xf32, #tpu.memory_space<vmem>>, %arg4: memref<1x5x80xf32, #tpu.memory_space<vmem>>) attributes {dimension_semantics = [#tpu.dimension_semantics<parallel>], iteration_bounds = array<i64: 2>, scalar_prefetch = 0 : i64, scratch_operands = 0 : i64, tpu.core_type = #tpu.core_type<tc>, window_params = [{transform_indices = @transform_0, window_bounds = array<i64: 1, 2, 7, 84>}, {pipeline_mode = #tpu.pipeline_mode<synchronous>, transform_indices = @transform_1, window_bounds = array<i64: 5, 2, 84, 80>}, {pipeline_mode = #tpu.pipeline_mode<synchronous>, transform_indices = @transform_2, window_bounds = array<i64: 1, 80>}, {transform_indices = @transform_3, window_bounds = array<i64: 1, 5, 80>}]} {
    %c0 = arith.constant 0 : index
    %c0_0 = arith.constant 0 : index
    %0 = vector.load %arg3[%c0, %c0_0] : memref<1x80xf32, #tpu.memory_space<vmem>>, vector<1x80xf32>
    %c0_1 = arith.constant 0 : index
    %c0_2 = arith.constant 0 : index
    %c0_3 = arith.constant 0 : index
    %c0_4 = arith.constant 0 : index
    %1 = vector.load %arg1[%c0_1, %c0_2, %c0_3, %c0_4] : memref<1x2x7x84xf32, #tpu.memory_space<vmem>>, vector<1x1x5x84xf32>
    %2 = vector.shape_cast %1 : vector<1x1x5x84xf32> to vector<5x84xf32>
    %c0_5 = arith.constant 0 : index
    %c1 = arith.constant 1 : index
    %c0_6 = arith.constant 0 : index
    %c0_7 = arith.constant 0 : index
    %3 = vector.load %arg1[%c0_5, %c1, %c0_6, %c0_7] : memref<1x2x7x84xf32, #tpu.memory_space<vmem>>, vector<1x1x5x84xf32>
    %4 = vector.shape_cast %3 : vector<1x1x5x84xf32> to vector<5x84xf32>
    %c0_8 = arith.constant 0 : index
    %c0_9 = arith.constant 0 : index
    %c0_10 = arith.constant 0 : index
    %c0_11 = arith.constant 0 : index
    %5 = vector.load %arg2[%c0_8, %c0_9, %c0_10, %c0_11] : memref<5x2x84x80xf32, #tpu.memory_space<vmem>>, vector<1x1x84x80xf32>
    %6 = vector.shape_cast %5 : vector<1x1x84x80xf32> to vector<84x80xf32>
    %cst = arith.constant dense<0.000000e+00> : vector<5x80xf32>
    %7 = tpu.matmul %2, %6, %cst {dimension_numbers = #tpu.dot_dimension_numbers<[1], [0], [0], [1], [0, 0, 1, 1], [], []>} : vector<5x84xf32>, vector<84x80xf32>, vector<5x80xf32> -> vector<5x80xf32>
    %cst_12 = arith.constant dense<0.000000e+00> : vector<5x80xf32>
    %8 = tpu.matmul %4, %6, %cst_12 {dimension_numbers = #tpu.dot_dimension_numbers<[1], [0], [0], [1], [0, 0, 1, 1], [], []>} : vector<5x84xf32>, vector<84x80xf32>, vector<5x80xf32> -> vector<5x80xf32>
    %c0_13 = arith.constant 0 : index
    %c1_14 = arith.constant 1 : index
    %c0_15 = arith.constant 0 : index
    %c0_16 = arith.constant 0 : index
    %9 = vector.load %arg2[%c0_13, %c1_14, %c0_15, %c0_16] : memref<5x2x84x80xf32, #tpu.memory_space<vmem>>, vector<1x1x84x80xf32>
    %10 = vector.shape_cast %9 : vector<1x1x84x80xf32> to vector<84x80xf32>
    %cst_17 = arith.constant dense<0.000000e+00> : vector<5x80xf32>
    %11 = tpu.matmul %2, %10, %cst_17 {dimension_numbers = #tpu.dot_dimension_numbers<[1], [0], [0], [1], [0, 0, 1, 1], [], []>} : vector<5x84xf32>, vector<84x80xf32>, vector<5x80xf32> -> vector<5x80xf32>
    %cst_18 = arith.constant dense<0.000000e+00> : vector<5x80xf32>
    %12 = tpu.matmul %4, %10, %cst_18 {dimension_numbers = #tpu.dot_dimension_numbers<[1], [0], [0], [1], [0, 0, 1, 1], [], []>} : vector<5x84xf32>, vector<84x80xf32>, vector<5x80xf32> -> vector<5x80xf32>
    %c0_19 = arith.constant 0 : index
    %c1_20 = arith.constant 1 : index
    %c0_21 = arith.constant 0 : index
    %c0_22 = arith.constant 0 : index
    %13 = vector.load %arg1[%c0_19, %c1_20, %c0_21, %c0_22] : memref<1x2x7x84xf32, #tpu.memory_space<vmem>>, vector<1x1x5x84xf32>
    %14 = vector.shape_cast %13 : vector<1x1x5x84xf32> to vector<5x84xf32>
    %c0_23 = arith.constant 0 : index
    %c0_24 = arith.constant 0 : index
    %c1_25 = arith.constant 1 : index
    %c0_26 = arith.constant 0 : index
    %15 = vector.load %arg1[%c0_23, %c0_24, %c1_25, %c0_26] : memref<1x2x7x84xf32, #tpu.memory_space<vmem>>, vector<1x1x5x84xf32>
    %16 = vector.shape_cast %15 : vector<1x1x5x84xf32> to vector<5x84xf32>
    %c1_27 = arith.constant 1 : index
    %c0_28 = arith.constant 0 : index
    %c0_29 = arith.constant 0 : index
    %c0_30 = arith.constant 0 : index
    %17 = vector.load %arg2[%c1_27, %c0_28, %c0_29, %c0_30] : memref<5x2x84x80xf32, #tpu.memory_space<vmem>>, vector<1x1x84x80xf32>
    %18 = vector.shape_cast %17 : vector<1x1x84x80xf32> to vector<84x80xf32>
    %cst_31 = arith.constant dense<0.000000e+00> : vector<5x80xf32>
    %19 = tpu.matmul %14, %18, %cst_31 {dimension_numbers = #tpu.dot_dimension_numbers<[1], [0], [0], [1], [0, 0, 1, 1], [], []>} : vector<5x84xf32>, vector<84x80xf32>, vector<5x80xf32> -> vector<5x80xf32>
    %20 = arith.addf %7, %19 : vector<5x80xf32>
    %cst_32 = arith.constant dense<0.000000e+00> : vector<5x80xf32>
    %21 = tpu.matmul %16, %18, %cst_32 {dimension_numbers = #tpu.dot_dimension_numbers<[1], [0], [0], [1], [0, 0, 1, 1], [], []>} : vector<5x84xf32>, vector<84x80xf32>, vector<5x80xf32> -> vector<5x80xf32>
    %22 = arith.addf %8, %21 : vector<5x80xf32>
    %c1_33 = arith.constant 1 : index
    %c1_34 = arith.constant 1 : index
    %c0_35 = arith.constant 0 : index
    %c0_36 = arith.constant 0 : index
    %23 = vector.load %arg2[%c1_33, %c1_34, %c0_35, %c0_36] : memref<5x2x84x80xf32, #tpu.memory_space<vmem>>, vector<1x1x84x80xf32>
    %24 = vector.shape_cast %23 : vector<1x1x84x80xf32> to vector<84x80xf32>
    %cst_37 = arith.constant dense<0.000000e+00> : vector<5x80xf32>
    %25 = tpu.matmul %14, %24, %cst_37 {dimension_numbers = #tpu.dot_dimension_numbers<[1], [0], [0], [1], [0, 0, 1, 1], [], []>} : vector<5x84xf32>, vector<84x80xf32>, vector<5x80xf32> -> vector<5x80xf32>
    %26 = arith.addf %11, %25 : vector<5x80xf32>
    %cst_38 = arith.constant dense<0.000000e+00> : vector<5x80xf32>
    %27 = tpu.matmul %16, %24, %cst_38 {dimension_numbers = #tpu.dot_dimension_numbers<[1], [0], [0], [1], [0, 0, 1, 1], [], []>} : vector<5x84xf32>, vector<84x80xf32>, vector<5x80xf32> -> vector<5x80xf32>
    %28 = arith.addf %12, %27 : vector<5x80xf32>
    %c0_39 = arith.constant 0 : index
    %c0_40 = arith.constant 0 : index
    %c1_41 = arith.constant 1 : index
    %c0_42 = arith.constant 0 : index
    %29 = vector.load %arg1[%c0_39, %c0_40, %c1_41, %c0_42] : memref<1x2x7x84xf32, #tpu.memory_space<vmem>>, vector<1x1x5x84xf32>
    %30 = vector.shape_cast %29 : vector<1x1x5x84xf32> to vector<5x84xf32>
    %c0_43 = arith.constant 0 : index
    %c1_44 = arith.constant 1 : index
    %c1_45 = arith.constant 1 : index
    %c0_46 = arith.constant 0 : index
    %31 = vector.load %arg1[%c0_43, %c1_44, %c1_45, %c0_46] : memref<1x2x7x84xf32, #tpu.memory_space<vmem>>, vector<1x1x5x84xf32>
    %32 = vector.shape_cast %31 : vector<1x1x5x84xf32> to vector<5x84xf32>
    %c2 = arith.constant 2 : index
    %c0_47 = arith.constant 0 : index
    %c0_48 = arith.constant 0 : index
    %c0_49 = arith.constant 0 : index
    %33 = vector.load %arg2[%c2, %c0_47, %c0_48, %c0_49] : memref<5x2x84x80xf32, #tpu.memory_space<vmem>>, vector<1x1x84x80xf32>
    %34 = vector.shape_cast %33 : vector<1x1x84x80xf32> to vector<84x80xf32>
    %cst_50 = arith.constant dense<0.000000e+00> : vector<5x80xf32>
    %35 = tpu.matmul %30, %34, %cst_50 {dimension_numbers = #tpu.dot_dimension_numbers<[1], [0], [0], [1], [0, 0, 1, 1], [], []>} : vector<5x84xf32>, vector<84x80xf32>, vector<5x80xf32> -> vector<5x80xf32>
    %36 = arith.addf %20, %35 : vector<5x80xf32>
    %cst_51 = arith.constant dense<0.000000e+00> : vector<5x80xf32>
    %37 = tpu.matmul %32, %34, %cst_51 {dimension_numbers = #tpu.dot_dimension_numbers<[1], [0], [0], [1], [0, 0, 1, 1], [], []>} : vector<5x84xf32>, vector<84x80xf32>, vector<5x80xf32> -> vector<5x80xf32>
    %38 = arith.addf %22, %37 : vector<5x80xf32>
    %c2_52 = arith.constant 2 : index
    %c1_53 = arith.constant 1 : index
    %c0_54 = arith.constant 0 : index
    %c0_55 = arith.constant 0 : index
    %39 = vector.load %arg2[%c2_52, %c1_53, %c0_54, %c0_55] : memref<5x2x84x80xf32, #tpu.memory_space<vmem>>, vector<1x1x84x80xf32>
    %40 = vector.shape_cast %39 : vector<1x1x84x80xf32> to vector<84x80xf32>
    %cst_56 = arith.constant dense<0.000000e+00> : vector<5x80xf32>
    %41 = tpu.matmul %30, %40, %cst_56 {dimension_numbers = #tpu.dot_dimension_numbers<[1], [0], [0], [1], [0, 0, 1, 1], [], []>} : vector<5x84xf32>, vector<84x80xf32>, vector<5x80xf32> -> vector<5x80xf32>
    %42 = arith.addf %26, %41 : vector<5x80xf32>
    %cst_57 = arith.constant dense<0.000000e+00> : vector<5x80xf32>
    %43 = tpu.matmul %32, %40, %cst_57 {dimension_numbers = #tpu.dot_dimension_numbers<[1], [0], [0], [1], [0, 0, 1, 1], [], []>} : vector<5x84xf32>, vector<84x80xf32>, vector<5x80xf32> -> vector<5x80xf32>
    %44 = arith.addf %28, %43 : vector<5x80xf32>
    %c0_58 = arith.constant 0 : index
    %c1_59 = arith.constant 1 : index
    %c1_60 = arith.constant 1 : index
    %c0_61 = arith.constant 0 : index
    %45 = vector.load %arg1[%c0_58, %c1_59, %c1_60, %c0_61] : memref<1x2x7x84xf32, #tpu.memory_space<vmem>>, vector<1x1x5x84xf32>
    %46 = vector.shape_cast %45 : vector<1x1x5x84xf32> to vector<5x84xf32>
    %c0_62 = arith.constant 0 : index
    %c0_63 = arith.constant 0 : index
    %c2_64 = arith.constant 2 : index
    %c0_65 = arith.constant 0 : index
    %47 = vector.load %arg1[%c0_62, %c0_63, %c2_64, %c0_65] : memref<1x2x7x84xf32, #tpu.memory_space<vmem>>, vector<1x1x5x84xf32>
    %48 = vector.shape_cast %47 : vector<1x1x5x84xf32> to vector<5x84xf32>
    %c3 = arith.constant 3 : index
    %c0_66 = arith.constant 0 : index
    %c0_67 = arith.constant 0 : index
    %c0_68 = arith.constant 0 : index
    %49 = vector.load %arg2[%c3, %c0_66, %c0_67, %c0_68] : memref<5x2x84x80xf32, #tpu.memory_space<vmem>>, vector<1x1x84x80xf32>
    %50 = vector.shape_cast %49 : vector<1x1x84x80xf32> to vector<84x80xf32>
    %cst_69 = arith.constant dense<0.000000e+00> : vector<5x80xf32>
    %51 = tpu.matmul %46, %50, %cst_69 {dimension_numbers = #tpu.dot_dimension_numbers<[1], [0], [0], [1], [0, 0, 1, 1], [], []>} : vector<5x84xf32>, vector<84x80xf32>, vector<5x80xf32> -> vector<5x80xf32>
    %52 = arith.addf %36, %51 : vector<5x80xf32>
    %cst_70 = arith.constant dense<0.000000e+00> : vector<5x80xf32>
    %53 = tpu.matmul %48, %50, %cst_70 {dimension_numbers = #tpu.dot_dimension_numbers<[1], [0], [0], [1], [0, 0, 1, 1], [], []>} : vector<5x84xf32>, vector<84x80xf32>, vector<5x80xf32> -> vector<5x80xf32>
    %54 = arith.addf %38, %53 : vector<5x80xf32>
    %c3_71 = arith.constant 3 : index
    %c1_72 = arith.constant 1 : index
    %c0_73 = arith.constant 0 : index
    %c0_74 = arith.constant 0 : index
    %55 = vector.load %arg2[%c3_71, %c1_72, %c0_73, %c0_74] : memref<5x2x84x80xf32, #tpu.memory_space<vmem>>, vector<1x1x84x80xf32>
    %56 = vector.shape_cast %55 : vector<1x1x84x80xf32> to vector<84x80xf32>
    %cst_75 = arith.constant dense<0.000000e+00> : vector<5x80xf32>
    %57 = tpu.matmul %46, %56, %cst_75 {dimension_numbers = #tpu.dot_dimension_numbers<[1], [0], [0], [1], [0, 0, 1, 1], [], []>} : vector<5x84xf32>, vector<84x80xf32>, vector<5x80xf32> -> vector<5x80xf32>
    %58 = arith.addf %42, %57 : vector<5x80xf32>
    %cst_76 = arith.constant dense<0.000000e+00> : vector<5x80xf32>
    %59 = tpu.matmul %48, %56, %cst_76 {dimension_numbers = #tpu.dot_dimension_numbers<[1], [0], [0], [1], [0, 0, 1, 1], [], []>} : vector<5x84xf32>, vector<84x80xf32>, vector<5x80xf32> -> vector<5x80xf32>
    %60 = arith.addf %44, %59 : vector<5x80xf32>
    %c0_77 = arith.constant 0 : index
    %c0_78 = arith.constant 0 : index
    %c2_79 = arith.constant 2 : index
    %c0_80 = arith.constant 0 : index
    %61 = vector.load %arg1[%c0_77, %c0_78, %c2_79, %c0_80] : memref<1x2x7x84xf32, #tpu.memory_space<vmem>>, vector<1x1x5x84xf32>
    %62 = vector.shape_cast %61 : vector<1x1x5x84xf32> to vector<5x84xf32>
    %c0_81 = arith.constant 0 : index
    %c1_82 = arith.constant 1 : index
    %c2_83 = arith.constant 2 : index
    %c0_84 = arith.constant 0 : index
    %63 = vector.load %arg1[%c0_81, %c1_82, %c2_83, %c0_84] : memref<1x2x7x84xf32, #tpu.memory_space<vmem>>, vector<1x1x5x84xf32>
    %64 = vector.shape_cast %63 : vector<1x1x5x84xf32> to vector<5x84xf32>
    %c4 = arith.constant 4 : index
    %c0_85 = arith.constant 0 : index
    %c0_86 = arith.constant 0 : index
    %c0_87 = arith.constant 0 : index
    %65 = vector.load %arg2[%c4, %c0_85, %c0_86, %c0_87] : memref<5x2x84x80xf32, #tpu.memory_space<vmem>>, vector<1x1x84x80xf32>
    %66 = vector.shape_cast %65 : vector<1x1x84x80xf32> to vector<84x80xf32>
    %cst_88 = arith.constant dense<0.000000e+00> : vector<5x80xf32>
    %67 = tpu.matmul %62, %66, %cst_88 {dimension_numbers = #tpu.dot_dimension_numbers<[1], [0], [0], [1], [0, 0, 1, 1], [], []>} : vector<5x84xf32>, vector<84x80xf32>, vector<5x80xf32> -> vector<5x80xf32>
    %68 = arith.addf %52, %67 : vector<5x80xf32>
    %cst_89 = arith.constant dense<0.000000e+00> : vector<5x80xf32>
    %69 = tpu.matmul %64, %66, %cst_89 {dimension_numbers = #tpu.dot_dimension_numbers<[1], [0], [0], [1], [0, 0, 1, 1], [], []>} : vector<5x84xf32>, vector<84x80xf32>, vector<5x80xf32> -> vector<5x80xf32>
    %70 = arith.addf %54, %69 : vector<5x80xf32>
    %c4_90 = arith.constant 4 : index
    %c1_91 = arith.constant 1 : index
    %c0_92 = arith.constant 0 : index
    %c0_93 = arith.constant 0 : index
    %71 = vector.load %arg2[%c4_90, %c1_91, %c0_92, %c0_93] : memref<5x2x84x80xf32, #tpu.memory_space<vmem>>, vector<1x1x84x80xf32>
    %72 = vector.shape_cast %71 : vector<1x1x84x80xf32> to vector<84x80xf32>
    %cst_94 = arith.constant dense<0.000000e+00> : vector<5x80xf32>
    %73 = tpu.matmul %62, %72, %cst_94 {dimension_numbers = #tpu.dot_dimension_numbers<[1], [0], [0], [1], [0, 0, 1, 1], [], []>} : vector<5x84xf32>, vector<84x80xf32>, vector<5x80xf32> -> vector<5x80xf32>
    %74 = arith.addf %58, %73 : vector<5x80xf32>
    %cst_95 = arith.constant dense<0.000000e+00> : vector<5x80xf32>
    %75 = tpu.matmul %64, %72, %cst_95 {dimension_numbers = #tpu.dot_dimension_numbers<[1], [0], [0], [1], [0, 0, 1, 1], [], []>} : vector<5x84xf32>, vector<84x80xf32>, vector<5x80xf32> -> vector<5x80xf32>
    %76 = arith.addf %60, %75 : vector<5x80xf32>
    %77 = vector.broadcast %0 : vector<1x80xf32> to vector<5x80xf32>
    %78 = arith.addf %68, %77 : vector<5x80xf32>
    %cst_96 = arith.constant 0.000000e+00 : f32
    %79 = vector.broadcast %cst_96 : f32 to vector<5x80xf32>
    %80 = arith.maximumf %78, %79 : vector<5x80xf32>
    %81 = vector.broadcast %0 : vector<1x80xf32> to vector<5x80xf32>
    %82 = arith.addf %74, %81 : vector<5x80xf32>
    %cst_97 = arith.constant 0.000000e+00 : f32
    %83 = vector.broadcast %cst_97 : f32 to vector<5x80xf32>
    %84 = arith.maximumf %82, %83 : vector<5x80xf32>
    %85 = arith.maximumf %80, %84 : vector<5x80xf32>
    %86 = vector.broadcast %0 : vector<1x80xf32> to vector<5x80xf32>
    %87 = arith.addf %70, %86 : vector<5x80xf32>
    %cst_98 = arith.constant 0.000000e+00 : f32
    %88 = vector.broadcast %cst_98 : f32 to vector<5x80xf32>
    %89 = arith.maximumf %87, %88 : vector<5x80xf32>
    %90 = arith.maximumf %85, %89 : vector<5x80xf32>
    %91 = vector.broadcast %0 : vector<1x80xf32> to vector<5x80xf32>
    %92 = arith.addf %76, %91 : vector<5x80xf32>
    %cst_99 = arith.constant 0.000000e+00 : f32
    %93 = vector.broadcast %cst_99 : f32 to vector<5x80xf32>
    %94 = arith.maximumf %92, %93 : vector<5x80xf32>
    %95 = arith.maximumf %90, %94 : vector<5x80xf32>
    %c0_100 = arith.constant 0 : index
    %c0_101 = arith.constant 0 : index
    %c0_102 = arith.constant 0 : index
    %96 = vector.load %arg4[%c0_100, %c0_101, %c0_102] : memref<1x5x80xf32, #tpu.memory_space<vmem>>, vector<1x5x80xf32>
    %97 = vector.shape_cast %96 : vector<1x5x80xf32> to vector<5x80xf32>
    %98 = vector.shape_cast %95 : vector<5x80xf32> to vector<1x5x80xf32>
    tpu.vector_store %arg4[%c0_100, %c0_101, %c0_102], %98 {strides = array<i32>} : memref<1x5x80xf32, #tpu.memory_space<vmem>>, vector<1x5x80xf32>,
    return
  }
  func.func @transform_0(%arg0: i32) -> (i32, i32, i32, i32) {
    %c0_i32 = arith.constant 0 : i32
    %c0_i32_0 = arith.constant 0 : i32
    %c0_i32_1 = arith.constant 0 : i32
    %c0_i32_2 = arith.constant 0 : i32
    return %arg0, %c0_i32, %c0_i32_0, %c0_i32_1 : i32, i32, i32, i32
  }
  func.func @transform_1(%arg0: i32) -> (i32, i32, i32, i32) {
    %c0_i32 = arith.constant 0 : i32
    %c0_i32_0 = arith.constant 0 : i32
    %c0_i32_1 = arith.constant 0 : i32
    %c0_i32_2 = arith.constant 0 : i32
    %c0_i32_3 = arith.constant 0 : i32
    return %c0_i32, %c0_i32_0, %c0_i32_1, %c0_i32_2 : i32, i32, i32, i32
  }
  func.func @transform_2(%arg0: i32) -> (i32, i32) {
    %c0_i32 = arith.constant 0 : i32
    %c0_i32_0 = arith.constant 0 : i32
    %c0_i32_1 = arith.constant 0 : i32
    return %c0_i32, %c0_i32_0 : i32, i32
  }
  func.func @transform_3(%arg0: i32) -> (i32, i32, i32) {
    %c0_i32 = arith.constant 0 : i32
    %c0_i32_0 = arith.constant 0 : i32
    %c0_i32_1 = arith.constant 0 : i32
    return %arg0, %c0_i32, %c0_i32_0 : i32, i32, i32
  }
}

module attributes {stable_mosaic.version = 11 : i64} {
  func.func @_fc_kernel(%arg0: i32, %arg1: memref<2x400xf32, #tpu.memory_space<vmem>>, %arg2: memref<400x120xf32, #tpu.memory_space<vmem>>, %arg3: memref<1x120xf32, #tpu.memory_space<vmem>>, %arg4: memref<120x84xf32, #tpu.memory_space<vmem>>, %arg5: memref<1x84xf32, #tpu.memory_space<vmem>>, %arg6: memref<84x10xf32, #tpu.memory_space<vmem>>, %arg7: memref<1x10xf32, #tpu.memory_space<vmem>>, %arg8: memref<2x10xf32, #tpu.memory_space<vmem>>) attributes {dimension_semantics = [#tpu.dimension_semantics<parallel>], iteration_bounds = array<i64: 1>, scalar_prefetch = 0 : i64, scratch_operands = 0 : i64, tpu.core_type = #tpu.core_type<tc>, window_params = [{transform_indices = @transform_0, window_bounds = array<i64: 2, 400>}, {pipeline_mode = #tpu.pipeline_mode<synchronous>, transform_indices = @transform_1, window_bounds = array<i64: 400, 120>}, {pipeline_mode = #tpu.pipeline_mode<synchronous>, transform_indices = @transform_2, window_bounds = array<i64: 1, 120>}, {pipeline_mode = #tpu.pipeline_mode<synchronous>, transform_indices = @transform_3, window_bounds = array<i64: 120, 84>}, {pipeline_mode = #tpu.pipeline_mode<synchronous>, transform_indices = @transform_4, window_bounds = array<i64: 1, 84>}, {pipeline_mode = #tpu.pipeline_mode<synchronous>, transform_indices = @transform_5, window_bounds = array<i64: 84, 10>}, {pipeline_mode = #tpu.pipeline_mode<synchronous>, transform_indices = @transform_6, window_bounds = array<i64: 1, 10>}, {transform_indices = @transform_7, window_bounds = array<i64: 2, 10>}]} {
    %c0 = arith.constant 0 : index
    %c0_0 = arith.constant 0 : index
    %0 = vector.load %arg1[%c0, %c0_0] : memref<2x400xf32, #tpu.memory_space<vmem>>, vector<2x400xf32>
    %c0_1 = arith.constant 0 : index
    %c0_2 = arith.constant 0 : index
    %1 = vector.load %arg2[%c0_1, %c0_2] : memref<400x120xf32, #tpu.memory_space<vmem>>, vector<400x120xf32>
    %cst = arith.constant dense<0.000000e+00> : vector<2x120xf32>
    %2 = tpu.matmul %0, %1, %cst {dimension_numbers = #tpu.dot_dimension_numbers<[1], [0], [0], [1], [0, 0, 1, 1], [], []>} : vector<2x400xf32>, vector<400x120xf32>, vector<2x120xf32> -> vector<2x120xf32>
    %c0_3 = arith.constant 0 : index
    %c0_4 = arith.constant 0 : index
    %3 = vector.load %arg3[%c0_3, %c0_4] : memref<1x120xf32, #tpu.memory_space<vmem>>, vector<1x120xf32>
    %4 = vector.broadcast %3 : vector<1x120xf32> to vector<2x120xf32>
    %5 = arith.addf %2, %4 : vector<2x120xf32>
    %cst_5 = arith.constant 0.000000e+00 : f32
    %6 = vector.broadcast %cst_5 : f32 to vector<2x120xf32>
    %7 = arith.maximumf %5, %6 : vector<2x120xf32>
    %c0_6 = arith.constant 0 : index
    %c0_7 = arith.constant 0 : index
    %8 = vector.load %arg4[%c0_6, %c0_7] : memref<120x84xf32, #tpu.memory_space<vmem>>, vector<120x84xf32>
    %cst_8 = arith.constant dense<0.000000e+00> : vector<2x84xf32>
    %9 = tpu.matmul %7, %8, %cst_8 {dimension_numbers = #tpu.dot_dimension_numbers<[1], [0], [0], [1], [0, 0, 1, 1], [], []>} : vector<2x120xf32>, vector<120x84xf32>, vector<2x84xf32> -> vector<2x84xf32>
    %c0_9 = arith.constant 0 : index
    %c0_10 = arith.constant 0 : index
    %10 = vector.load %arg5[%c0_9, %c0_10] : memref<1x84xf32, #tpu.memory_space<vmem>>, vector<1x84xf32>
    %11 = vector.broadcast %10 : vector<1x84xf32> to vector<2x84xf32>
    %12 = arith.addf %9, %11 : vector<2x84xf32>
    %cst_11 = arith.constant 0.000000e+00 : f32
    %13 = vector.broadcast %cst_11 : f32 to vector<2x84xf32>
    %14 = arith.maximumf %12, %13 : vector<2x84xf32>
    %c0_12 = arith.constant 0 : index
    %c0_13 = arith.constant 0 : index
    %15 = vector.load %arg6[%c0_12, %c0_13] : memref<84x10xf32, #tpu.memory_space<vmem>>, vector<84x10xf32>
    %cst_14 = arith.constant dense<0.000000e+00> : vector<2x10xf32>
    %16 = tpu.matmul %14, %15, %cst_14 {dimension_numbers = #tpu.dot_dimension_numbers<[1], [0], [0], [1], [0, 0, 1, 1], [], []>} : vector<2x84xf32>, vector<84x10xf32>, vector<2x10xf32> -> vector<2x10xf32>
    %c0_15 = arith.constant 0 : index
    %c0_16 = arith.constant 0 : index
    %17 = vector.load %arg7[%c0_15, %c0_16] : memref<1x10xf32, #tpu.memory_space<vmem>>, vector<1x10xf32>
    %18 = vector.broadcast %17 : vector<1x10xf32> to vector<2x10xf32>
    %19 = arith.addf %16, %18 : vector<2x10xf32>
    %c0_17 = arith.constant 0 : index
    %c0_18 = arith.constant 0 : index
    %20 = vector.load %arg8[%c0_17, %c0_18] : memref<2x10xf32, #tpu.memory_space<vmem>>, vector<2x10xf32>
    tpu.vector_store %arg8[%c0_17, %c0_18], %19 {strides = array<i32>} : memref<2x10xf32, #tpu.memory_space<vmem>>, vector<2x10xf32>,
    return
  }
  func.func @transform_0(%arg0: i32) -> (i32, i32) {
    %c0_i32 = arith.constant 0 : i32
    %c0_i32_0 = arith.constant 0 : i32
    return %arg0, %c0_i32 : i32, i32
  }
  func.func @transform_1(%arg0: i32) -> (i32, i32) {
    %c0_i32 = arith.constant 0 : i32
    %c0_i32_0 = arith.constant 0 : i32
    %c0_i32_1 = arith.constant 0 : i32
    return %c0_i32, %c0_i32_0 : i32, i32
  }
  func.func @transform_2(%arg0: i32) -> (i32, i32) {
    %c0_i32 = arith.constant 0 : i32
    %c0_i32_0 = arith.constant 0 : i32
    %c0_i32_1 = arith.constant 0 : i32
    return %c0_i32, %c0_i32_0 : i32, i32
  }
  func.func @transform_3(%arg0: i32) -> (i32, i32) {
    %c0_i32 = arith.constant 0 : i32
    %c0_i32_0 = arith.constant 0 : i32
    %c0_i32_1 = arith.constant 0 : i32
    return %c0_i32, %c0_i32_0 : i32, i32
  }
  func.func @transform_4(%arg0: i32) -> (i32, i32) {
    %c0_i32 = arith.constant 0 : i32
    %c0_i32_0 = arith.constant 0 : i32
    %c0_i32_1 = arith.constant 0 : i32
    return %c0_i32, %c0_i32_0 : i32, i32
  }
  func.func @transform_5(%arg0: i32) -> (i32, i32) {
    %c0_i32 = arith.constant 0 : i32
    %c0_i32_0 = arith.constant 0 : i32
    %c0_i32_1 = arith.constant 0 : i32
    return %c0_i32, %c0_i32_0 : i32, i32
  }
  func.func @transform_6(%arg0: i32) -> (i32, i32) {
    %c0_i32 = arith.constant 0 : i32
    %c0_i32_0 = arith.constant 0 : i32
    %c0_i32_1 = arith.constant 0 : i32
    return %c0_i32, %c0_i32_0 : i32, i32
  }
  func.func @transform_7(%arg0: i32) -> (i32, i32) {
    %c0_i32 = arith.constant 0 : i32
    %c0_i32_0 = arith.constant 0 : i32
    return %arg0, %c0_i32 : i32, i32
  }
}

</mosaic_0001>

<llo_original>
// kernel: cnn_cifar_forward.3
$region0: #{cnn_cifar_forward.3}
  #allocation0 [shape = 'u32[]', space=smem, size = 0x4, offset = 0x4, fixed_abs, tag = 'smem constant byte address 0x4 - core index']
  #allocation1 [shape = 'u32[144,128]{1,0:T(1,128)}', space=vmem, size = 0x12000, scoped, tag = 'internal scratch']
  %s0 = inlined_call_operand.vmem [shape: f32[2,2,16,96], index: 0, kind: input, shape index: {}]
  %s1 = inlined_call_operand.vmem [shape: f32[5,2,96,84], index: 1, kind: input, shape index: {}]
  %s2 = inlined_call_operand.vmem [shape: f32[1,84], index: 2, kind: input, shape index: {}]
  %s3 = inlined_call_operand.vmem [shape: f32[2,14,84], index: 3, kind: output, shape index: {}]
  %s4 = sld [smem:[#allocation0]]
  $region45: #{cnn_cifar_forward.3} parent=0
    _
  %s6 = ssub.s32 1, %s4
  %s7 = scalar_select 0, %s6, %s4
  loop: start=0, step=1, limit=4
  $region2: #{cnn_cifar_forward.3} parent=0 // loop_pre_header
    _
  $region3: #{cnn_cifar_forward.3} parent=0 // loop_header
    %s9 = sphi 0, %s13
    %p10 = scmp.ge.s32.totalorder %s9, 4
    %s19 = sphi 0, %s21
    %s22 = sphi 0, %s19
    %s23 = sphi 0, %s22
    %s39 = sphi 0, %s23
    %s43 = sphi 0, %s43
    %s45 = sphi 0, %s43
    %s46 = sphi 0, %s45
    %s60 = sphi 0, %s46
    %s64 = sphi 0, %s64
    %s66 = sphi 0, %s64
    %s67 = sphi 0, %s66
    %s81 = sphi 0, %s67
    %s87 = sphi 0, %s89
    %s90 = sphi 0, %s87
    %s91 = sphi 0, %s90
    %s107 = sphi 0, %s91
  $region4: #{cnn_cifar_forward.3} parent=0 // loop_header_branch
    %12 = sbr.rel (%p10) target = $region8
  $region5: #{cnn_cifar_forward.3} parent=0 // loop_body
    %s14 = ssub.s32 %s9, 1
    %s15 = ssub.s32 %s9, 2
    %s16 = sadd.s32 %s9, 1
    %s17 = ssub.s32 %s9, %s16
    %p18 = scmp.eq.s32.totalorder %s17, 0
    %s20 = sadd.s32 %s19, 1
    %s21 = scalar_select %p18, %s19, %s20
    %p24 = pneg %p18
    %p25 = scmp.eq.s32.totalorder %s9, 1
    %p26 = por %p24, %p25
    %p27 = scmp.ne.s32.totalorder %s19, %s22
    %p28 = scmp.eq.s32.totalorder %s9, 0
    %p29 = por %p27, %p28
    %p30 = scmp.ne.s32.totalorder %s19, %s22
    %p31 = scmp.eq.s32.totalorder %s14, 1
    %p32 = por %p30, %p31
    %p33 = scmp.ne.s32.totalorder %s22, %s23
    %p34 = scmp.eq.s32.totalorder %s14, 0
    %p35 = por %p33, %p34
    %p36 = scmp.ne.s32.totalorder %s22, %s23
    %p37 = scmp.eq.s32.totalorder %s15, 1
    %p38 = por %p36, %p37
    %p40 = scmp.ne.s32.totalorder %s23, %s39
    %p41 = scmp.eq.s32.totalorder %s15, 0
    %p42 = por %p40, %p41
    %s44 = sadd.s32 %s43, 1
    %p47 = scmp.eq.s32.totalorder %s9, 1
    %p48 = scmp.ne.s32.totalorder %s43, %s45
    %p49 = scmp.eq.s32.totalorder %s9, 0
    %p50 = por %p48, %p49
    %p51 = scmp.ne.s32.totalorder %s43, %s45
    %p52 = scmp.eq.s32.totalorder %s14, 1
    %p53 = por %p51, %p52
    %p54 = scmp.ne.s32.totalorder %s45, %s46
    %p55 = scmp.eq.s32.totalorder %s14, 0
    %p56 = por %p54, %p55
    %p57 = scmp.ne.s32.totalorder %s45, %s46
    %p58 = scmp.eq.s32.totalorder %s15, 1
    %p59 = por %p57, %p58
    %p61 = scmp.ne.s32.totalorder %s46, %s60
    %p62 = scmp.eq.s32.totalorder %s15, 0
    %p63 = por %p61, %p62
    %s65 = sadd.s32 %s64, 1
    %p68 = scmp.eq.s32.totalorder %s9, 1
    %p69 = scmp.ne.s32.totalorder %s64, %s66
    %p70 = scmp.eq.s32.totalorder %s9, 0
    %p71 = por %p69, %p70
    %p72 = scmp.ne.s32.totalorder %s64, %s66
    %p73 = scmp.eq.s32.totalorder %s14, 1
    %p74 = por %p72, %p73
    %p75 = scmp.ne.s32.totalorder %s66, %s67
    %p76 = scmp.eq.s32.totalorder %s14, 0
    %p77 = por %p75, %p76
    %p78 = scmp.ne.s32.totalorder %s66, %s67
    %p79 = scmp.eq.s32.totalorder %s15, 1
    %p80 = por %p78, %p79
    %p82 = scmp.ne.s32.totalorder %s67, %s81
    %p83 = scmp.eq.s32.totalorder %s15, 0
    %p84 = por %p82, %p83
    %s85 = ssub.s32 %s9, %s16
    %p86 = scmp.eq.s32.totalorder %s85, 0
    %s88 = sadd.s32 %s87, 1
    %s89 = scalar_select %p86, %s87, %s88
    %p92 = pneg %p86
    %p93 = scmp.eq.s32.totalorder %s9, 1
    %p94 = por %p92, %p93
    %p95 = scmp.ne.s32.totalorder %s87, %s90
    %p96 = scmp.eq.s32.totalorder %s9, 0
    %p97 = por %p95, %p96
    %p98 = scmp.ne.s32.totalorder %s87, %s90
    %p99 = scmp.eq.s32.totalorder %s14, 1
    %p100 = por %p98, %p99
    %p101 = scmp.ne.s32.totalorder %s90, %s91
    %p102 = scmp.eq.s32.totalorder %s14, 0
    %p103 = por %p101, %p102
    %p104 = scmp.ne.s32.totalorder %s90, %s91
    %p105 = scmp.eq.s32.totalorder %s15, 1
    %p106 = por %p104, %p105
    %p108 = scmp.ne.s32.totalorder %s91, %s107
    %p109 = scmp.eq.s32.totalorder %s15, 0
    %p110 = por %p108, %p109
    %p111 = scmp.le.s32.totalorder 1, %s9
    %p112 = scmp.lt.s32.totalorder %s9, 3
    %p113 = pnand %p111, %p112
    %p114 = pneg %p113
    // Predicated region
    $region9: #{cnn_cifar_forward.3} parent=5 // pred_check
      _
    $region10: #{cnn_cifar_forward.3} parent=5 // pred_check_branch
      %116 = sbr.rel (%p113) target = $region12
    $region11: #{cnn_cifar_forward.3} parent=5 // pred_region
      %s117 = ssub.s32 %s9, 1
      // Predicated region
      $region13: #{cnn_cifar_forward.3} parent=11 // pred_check
        %p118 = pneg %p56
      $region14: #{cnn_cifar_forward.3} parent=11 // pred_check_branch
        %120 = sbr.rel (%p118) target = $region16
      $region15: #{cnn_cifar_forward.3} parent=11 // pred_region
        _
      $region16: #{cnn_cifar_forward.3} parent=11 // pred_fallthru
        _
      // Predicated region
      $region17: #{cnn_cifar_forward.3} parent=11 // pred_check
        %p121 = pneg %p77
      $region18: #{cnn_cifar_forward.3} parent=11 // pred_check_branch
        %123 = sbr.rel (%p121) target = $region20
      $region19: #{cnn_cifar_forward.3} parent=11 // pred_region
        _
      $region20: #{cnn_cifar_forward.3} parent=11 // pred_fallthru
        _
    $region12: #{cnn_cifar_forward.3} parent=5 // pred_fallthru
      _
    %p124 = scmp.lt.s32.totalorder %s9, 2
    // Predicated region
    $region21: #{cnn_cifar_forward.3} parent=5 // pred_check
      %p125 = pneg %p124
    $region22: #{cnn_cifar_forward.3} parent=5 // pred_check_branch
      %127 = sbr.rel (%p125) target = $region24
    $region23: #{cnn_cifar_forward.3} parent=5 // pred_region
      // Predicated region
      $region25: #{cnn_cifar_forward.3} parent=23 // pred_check
        %p128 = pneg %p29
      $region26: #{cnn_cifar_forward.3} parent=23 // pred_check_branch
        %130 = sbr.rel (%p128) target = $region28
      $region27: #{cnn_cifar_forward.3} parent=23 // pred_region
        %p131 = scmp.lt.s32.totalorder %s9, 1
        %s132 = scalar_select %p131, %s9, 1
        %s133 = smul.addr %s132, 4
        %s134 = smul.addr %s133, 8
        %s135 = scalar_lea.vmem %s0, %s134
      $region28: #{cnn_cifar_forward.3} parent=23 // pred_fallthru
        _
    $region24: #{cnn_cifar_forward.3} parent=5 // pred_fallthru
      _
    %p136 = scmp.le.s32.totalorder 1, %s9
    %p137 = scmp.lt.s32.totalorder %s9, 3
    %p138 = pnand %p136, %p137
    %p139 = pneg %p138
    // Predicated region
    $region29: #{cnn_cifar_forward.3} parent=5 // pred_check
      _
    $region30: #{cnn_cifar_forward.3} parent=5 // pred_check_branch
      %141 = sbr.rel (%p138) target = $region32
    $region31: #{cnn_cifar_forward.3} parent=5 // pred_region
      %s142 = ssub.s32 %s9, 1
      %p143 = scmp.lt.s32.totalorder %s14, 1
      %s144 = scalar_select %p143, %s14, 1
      %s145 = smul.addr %s144, 4
      %s146 = smul.addr %s145, 8
      %s147 = scalar_lea.vmem %s0, %s146
      %p148 = pneg %p35
      %p149 = pneg %p32
      %p150 = pneg %p56
      %p151 = pneg %p53
      %p152 = pneg %p77
      %p153 = pneg %p74
      %p154 = pneg %p103
      %p155 = pneg %p100
      %p156 = scmp.lt.s32.totalorder %s14, 1
      %s157 = scalar_select %p156, %s14, 1
      %s158 = smul.addr %s157, 2
      %s159 = smul.addr %s158, 8
      %s160 = scalar_lea.vmem %s3, %s159
      %p161 = scmp.lt.s32.totalorder %s14, 1
      %s162 = scalar_select %p161, %s14, 1
      %s163 = smul.addr %s162, 4
      %s164 = smul.addr %s163, 8
      %s165 = scalar_lea.vmem %s0, %s164
      %p166 = scmp.lt.s32.totalorder %s14, 1
      %s167 = scalar_select %p166, %s14, 1
      %s168 = smul.addr %s167, 2
      %s169 = smul.addr %s168, 8
      %s170 = scalar_lea.vmem %s3, %s169
      %v171 = vld [vmem:[%s2] sm:$0x1]
      %v172 = vld [vmem:[%s165] sm:$0xff]
      %v173 = vld [vmem:[%s165 + $0x8] sm:$0x3f]
      %s174 = scalar_lea.vmem %s165, 16
      %v175 = vld [vmem:[%s174] sm:$0xff]
      %v176 = vld [vmem:[%s174 + $0x8] sm:$0x3f]
      %v177 = vld [vmem:[%s1] sm:$0xff]
      %v178 = vld [vmem:[%s1 + $0x8] sm:$0xff]
      %v179 = vld [vmem:[%s1 + $0x10] sm:$0xff]
      %v180 = vld [vmem:[%s1 + $0x18] sm:$0xff]
      %v181 = vld [vmem:[%s1 + $0x20] sm:$0xff]
      %v182 = vld [vmem:[%s1 + $0x28] sm:$0xff]
      %v183 = vld [vmem:[%s1 + $0x30] sm:$0xff]
      %v184 = vld [vmem:[%s1 + $0x38] sm:$0xff]
      %v185 = vld [vmem:[%s1 + $0x40] sm:$0xff]
      %v186 = vld [vmem:[%s1 + $0x48] sm:$0xff]
      %v187 = vld [vmem:[%s1 + $0x50] sm:$0xff]
      %v188 = vld [vmem:[%s1 + $0x58] sm:$0xff]
      %s189 = scalar_lea.vmem %s1, 96
      %v190 = vld [vmem:[%s189] sm:$0xff]
      %v191 = vld [vmem:[%s189 + $0x8] sm:$0xff]
      %v192 = vld [vmem:[%s189 + $0x10] sm:$0xff]
      %v193 = vld [vmem:[%s189 + $0x18] sm:$0xff]
      %v194 = vld [vmem:[%s189 + $0x20] sm:$0xff]
      %v195 = vld [vmem:[%s189 + $0x28] sm:$0xff]
      %v196 = vld [vmem:[%s189 + $0x30] sm:$0xff]
      %v197 = vld [vmem:[%s189 + $0x38] sm:$0xff]
      %v198 = vld [vmem:[%s189 + $0x40] sm:$0xff]
      %v199 = vld [vmem:[%s189 + $0x48] sm:$0xff]
      %v200 = vld [vmem:[%s189 + $0x50] sm:$0xff]
      %v201 = vld [vmem:[%s189 + $0x58] sm:$0xff]
      %v202 = vld [vmem:[%s165 + $0x1] sm:$0xff]
      %v203 = vld [vmem:[%s165 + $0x9] sm:$0x3f]
      %s204 = scalar_lea.vmem %s1, 192
      %v205 = vld [vmem:[%s204] sm:$0xff]
      %v206 = vld [vmem:[%s204 + $0x8] sm:$0xff]
      %v207 = vld [vmem:[%s204 + $0x10] sm:$0xff]
      %v208 = vld [vmem:[%s204 + $0x18] sm:$0xff]
      %v209 = vld [vmem:[%s204 + $0x20] sm:$0xff]
      %v210 = vld [vmem:[%s204 + $0x28] sm:$0xff]
      %v211 = vld [vmem:[%s204 + $0x30] sm:$0xff]
      %v212 = vld [vmem:[%s204 + $0x38] sm:$0xff]
      %v213 = vld [vmem:[%s204 + $0x40] sm:$0xff]
      %v214 = vld [vmem:[%s204 + $0x48] sm:$0xff]
      %v215 = vld [vmem:[%s204 + $0x50] sm:$0xff]
      %v216 = vld [vmem:[%s204 + $0x58] sm:$0xff]
      %vm217 = vcmask 785408
      %v219 = vsel %vm217, %v175, 0
      %v222 = vsel %vm217, %v176, 0
      %224 = vmatprep.subr.mxu0 0.0
      %225 = vmatpush1.msra.mxu0 %v205
      %226 = vmatprep.subr.mxu0 0.0
      %227 = vmatpush1.msra.mxu0 %v206
      %228 = vmatprep.subr.mxu0 0.0
      %229 = vmatpush1.msra.mxu0 %v207
      %230 = vmatprep.subr.mxu0 0.0
      %231 = vmatpush1.msra.mxu0 %v208
      %232 = vmatprep.subr.mxu0 0.0
      %233 = vmatpush1.msra.mxu0 %v209
      %234 = vmatprep.subr.mxu0 0.0
      %235 = vmatpush1.msra.mxu0 %v210
      %236 = vmatprep.subr.mxu0 0.0
      %237 = vmatpush1.msra.mxu0 %v211
      %238 = vmatprep.subr.mxu0 0.0
      %239 = vmatpush1.msra.mxu0 %v212
      %240 = vmatprep.subr.mxu0 0.0
      %241 = vmatpush1.msra.mxu0 %v213
      %242 = vmatprep.subr.mxu0 0.0
      %243 = vmatpush1.msra.mxu0 %v214
      %244 = vmatprep.subr.mxu0 0.0
      %245 = vmatpush1.msra.mxu0 %v215
      %246 = vmatprep.subr.mxu0 0.0
      %247 = vmatpush1.msra.mxu0 %v216
      %248 = vmatprep.subr.mxu0 0.0
      %249 = vmatpush1.msra.mxu0 0.0
      %250 = vmatprep.subr.mxu0 0.0
      %251 = vmatpush1.msra.mxu0 0.0
      %252 = vmatprep.subr.mxu0 0.0
      %253 = vmatpush1.msra.mxu0 0.0
      %254 = vmatprep.subr.mxu0 0.0
      %255 = vmatpush1.msra.mxu0 0.0
      %256 = vmatprep.subr.mxu0 0.0
      %257 = vmatpush1.msra.mxu0 0.0
      %258 = vmatprep.subr.mxu0 0.0
      %259 = vmatpush1.msra.mxu0 0.0
      %260 = vmatprep.subr.mxu0 0.0
      %261 = vmatpush1.msra.mxu0 0.0
      %262 = vmatprep.subr.mxu0 0.0
      %263 = vmatpush1.msra.mxu0 0.0
      %264 = vmatprep.subr.mxu0 0.0
      %265 = vmatpush1.msra.mxu0 0.0
      %266 = vmatprep.subr.mxu0 0.0
      %267 = vmatpush1.msra.mxu0 0.0
      %268 = vmatprep.subr.mxu0 0.0
      %269 = vmatpush1.msra.mxu0 0.0
      %270 = vmatprep.subr.mxu0 0.0
      %271 = vmatpush1.msra.mxu0 0.0
      %272 = vmatprep.subr.mxu0 0.0
      %273 = vmatpush1.msra.mxu0 0.0
      %274 = vmatprep.subr.mxu0 0.0
      %275 = vmatpush1.msra.mxu0 0.0
      %276 = vmatprep.subr.mxu0 0.0
      %277 = vmatpush1.msra.mxu0 0.0
      %278 = vmatprep.subr.mxu0 0.0
      %279 = vmatpush1.msra.mxu0 0.0
      %280 = vmatprep.subr.mxu0 0.0
      %281 = vmatpush1.msra.mxu0 0.0
      %282 = vmatprep.subr.mxu0 0.0
      %283 = vmatpush1.msra.mxu0 0.0
      %284 = vmatprep.subr.mxu0 0.0
      %285 = vmatpush1.msra.mxu0 0.0
      %286 = vmatprep.subr.mxu0 0.0
      %287 = vmatpush1.msra.mxu0 0.0
      %288 = vmatprep.mubr.f32.mxu0 0.0
      %289 = vmatmul.mubr.f32.gmra.mrb[0].mxu0 %v219
      %v290 = vpop.f32.mrb[0].mxu0
      %v291 = vadd.f32 0.0, %v290
      %v292 = vpop.f32.mrb[0].mxu0
      %293 = vmatprep.mubr.f32.mxu0 0.0
      %294 = vmatmul.mubr.f32.gmra.mrb[0].mxu0 %v222
      %v295 = vpop.f32.mrb[0].mxu0
      %v296 = vadd.f32 0.0, %v295
      %v297 = vpop.f32.mrb[0].mxu0
      %298 = vdwg.mxu0
      %v300 = vsel %vm217, %v172, 0
      %v303 = vsel %vm217, %v173, 0
      %305 = vmatprep.subr.mxu0 0.0
      %306 = vmatpush1.msra.mxu0 %v177
      %307 = vmatprep.subr.mxu0 0.0
      %308 = vmatpush1.msra.mxu0 %v178
      %309 = vmatprep.subr.mxu0 0.0
      %310 = vmatpush1.msra.mxu0 %v179
      %311 = vmatprep.subr.mxu0 0.0
      %312 = vmatpush1.msra.mxu0 %v180
      %313 = vmatprep.subr.mxu0 0.0
      %314 = vmatpush1.msra.mxu0 %v181
      %315 = vmatprep.subr.mxu0 0.0
      %316 = vmatpush1.msra.mxu0 %v182
      %317 = vmatprep.subr.mxu0 0.0
      %318 = vmatpush1.msra.mxu0 %v183
      %319 = vmatprep.subr.mxu0 0.0
      %320 = vmatpush1.msra.mxu0 %v184
      %321 = vmatprep.subr.mxu0 0.0
      %322 = vmatpush1.msra.mxu0 %v185
      %323 = vmatprep.subr.mxu0 0.0
      %324 = vmatpush1.msra.mxu0 %v186
      %325 = vmatprep.subr.mxu0 0.0
      %326 = vmatpush1.msra.mxu0 %v187
      %327 = vmatprep.subr.mxu0 0.0
      %328 = vmatpush1.msra.mxu0 %v188
      %329 = vmatprep.subr.mxu0 0.0
      %330 = vmatpush1.msra.mxu0 0.0
      %331 = vmatprep.subr.mxu0 0.0
      %332 = vmatpush1.msra.mxu0 0.0
      %333 = vmatprep.subr.mxu0 0.0
      %334 = vmatpush1.msra.mxu0 0.0
      %335 = vmatprep.subr.mxu0 0.0
      %336 = vmatpush1.msra.mxu0 0.0
      %337 = vmatprep.subr.mxu0 0.0
      %338 = vmatpush1.msra.mxu0 0.0
      %339 = vmatprep.subr.mxu0 0.0
      %340 = vmatpush1.msra.mxu0 0.0
      %341 = vmatprep.subr.mxu0 0.0
      %342 = vmatpush1.msra.mxu0 0.0
      %343 = vmatprep.subr.mxu0 0.0
      %344 = vmatpush1.msra.mxu0 0.0
      %345 = vmatprep.subr.mxu0 0.0
      %346 = vmatpush1.msra.mxu0 0.0
      %347 = vmatprep.subr.mxu0 0.0
      %348 = vmatpush1.msra.mxu0 0.0
      %349 = vmatprep.subr.mxu0 0.0
      %350 = vmatpush1.msra.mxu0 0.0
      %351 = vmatprep.subr.mxu0 0.0
      %352 = vmatpush1.msra.mxu0 0.0
      %353 = vmatprep.subr.mxu0 0.0
      %354 = vmatpush1.msra.mxu0 0.0
      %355 = vmatprep.subr.mxu0 0.0
      %356 = vmatpush1.msra.mxu0 0.0
      %357 = vmatprep.subr.mxu0 0.0
      %358 = vmatpush1.msra.mxu0 0.0
      %359 = vmatprep.subr.mxu0 0.0
      %360 = vmatpush1.msra.mxu0 0.0
      %361 = vmatprep.subr.mxu0 0.0
      %362 = vmatpush1.msra.mxu0 0.0
      %363 = vmatprep.subr.mxu0 0.0
      %364 = vmatpush1.msra.mxu0 0.0
      %365 = vmatprep.subr.mxu0 0.0
      %366 = vmatpush1.msra.mxu0 0.0
      %367 = vmatprep.subr.mxu0 0.0
      %368 = vmatpush1.msra.mxu0 0.0
      %369 = vmatprep.mubr.f32.mxu0 0.0
      %370 = vmatmul.mubr.f32.gmra.mrb[0].mxu0 %v300
      %v371 = vpop.f32.mrb[0].mxu0
      %v372 = vadd.f32 %v291, %v371
      %v373 = vpop.f32.mrb[0].mxu0
      %374 = vmatprep.mubr.f32.mxu0 0.0
      %375 = vmatmul.mubr.f32.gmra.mrb[0].mxu0 %v303
      %v376 = vpop.f32.mrb[0].mxu0
      %v377 = vadd.f32 %v296, %v376
      %v378 = vpop.f32.mrb[0].mxu0
      %379 = vdwg.mxu0
      %v381 = vsel %vm217, %v202, 0
      %v384 = vsel %vm217, %v203, 0
      %386 = vmatprep.subr.mxu0 0.0
      %387 = vmatpush1.msra.mxu0 %v205
      %388 = vmatprep.subr.mxu0 0.0
      %389 = vmatpush1.msra.mxu0 %v206
      %390 = vmatprep.subr.mxu0 0.0
      %391 = vmatpush1.msra.mxu0 %v207
      %392 = vmatprep.subr.mxu0 0.0
      %393 = vmatpush1.msra.mxu0 %v208
      %394 = vmatprep.subr.mxu0 0.0
      %395 = vmatpush1.msra.mxu0 %v209
      %396 = vmatprep.subr.mxu0 0.0
      %397 = vmatpush1.msra.mxu0 %v210
      %398 = vmatprep.subr.mxu0 0.0
      %399 = vmatpush1.msra.mxu0 %v211
      %400 = vmatprep.subr.mxu0 0.0
      %401 = vmatpush1.msra.mxu0 %v212
      %402 = vmatprep.subr.mxu0 0.0
      %403 = vmatpush1.msra.mxu0 %v213
      %404 = vmatprep.subr.mxu0 0.0
      %405 = vmatpush1.msra.mxu0 %v214
      %406 = vmatprep.subr.mxu0 0.0
      %407 = vmatpush1.msra.mxu0 %v215
      %408 = vmatprep.subr.mxu0 0.0
      %409 = vmatpush1.msra.mxu0 %v216
      %410 = vmatprep.subr.mxu0 0.0
      %411 = vmatpush1.msra.mxu0 0.0
      %412 = vmatprep.subr.mxu0 0.0
      %413 = vmatpush1.msra.mxu0 0.0
      %414 = vmatprep.subr.mxu0 0.0
      %415 = vmatpush1.msra.mxu0 0.0
      %416 = vmatprep.subr.mxu0 0.0
      %417 = vmatpush1.msra.mxu0 0.0
      %418 = vmatprep.subr.mxu0 0.0
      %419 = vmatpush1.msra.mxu0 0.0
      %420 = vmatprep.subr.mxu0 0.0
      %421 = vmatpush1.msra.mxu0 0.0
      %422 = vmatprep.subr.mxu0 0.0
      %423 = vmatpush1.msra.mxu0 0.0
      %424 = vmatprep.subr.mxu0 0.0
      %425 = vmatpush1.msra.mxu0 0.0
      %426 = vmatprep.subr.mxu0 0.0
      %427 = vmatpush1.msra.mxu0 0.0
      %428 = vmatprep.subr.mxu0 0.0
      %429 = vmatpush1.msra.mxu0 0.0
      %430 = vmatprep.subr.mxu0 0.0
      %431 = vmatpush1.msra.mxu0 0.0
      %432 = vmatprep.subr.mxu0 0.0
      %433 = vmatpush1.msra.mxu0 0.0
      %434 = vmatprep.subr.mxu0 0.0
      %435 = vmatpush1.msra.mxu0 0.0
      %436 = vmatprep.subr.mxu0 0.0
      %437 = vmatpush1.msra.mxu0 0.0
      %438 = vmatprep.subr.mxu0 0.0
      %439 = vmatpush1.msra.mxu0 0.0
      %440 = vmatprep.subr.mxu0 0.0
      %441 = vmatpush1.msra.mxu0 0.0
      %442 = vmatprep.subr.mxu0 0.0
      %443 = vmatpush1.msra.mxu0 0.0
      %444 = vmatprep.subr.mxu0 0.0
      %445 = vmatpush1.msra.mxu0 0.0
      %446 = vmatprep.subr.mxu0 0.0
      %447 = vmatpush1.msra.mxu0 0.0
      %448 = vmatprep.subr.mxu0 0.0
      %449 = vmatpush1.msra.mxu0 0.0
      %450 = vmatprep.mubr.f32.mxu0 0.0
      %451 = vmatmul.mubr.f32.gmra.mrb[0].mxu0 %v381
      %v452 = vpop.f32.mrb[0].mxu0
      %v453 = vadd.f32 0.0, %v452
      %v454 = vpop.f32.mrb[0].mxu0
      %455 = vmatprep.mubr.f32.mxu0 0.0
      %456 = vmatmul.mubr.f32.gmra.mrb[0].mxu0 %v384
      %v457 = vpop.f32.mrb[0].mxu0
      %v458 = vadd.f32 0.0, %v457
      %v459 = vpop.f32.mrb[0].mxu0
      %460 = vdwg.mxu0
      %461 = vmatprep.subr.mxu0 0.0
      %462 = vmatpush1.msra.mxu0 %v177
      %463 = vmatprep.subr.mxu0 0.0
      %464 = vmatpush1.msra.mxu0 %v178
      %465 = vmatprep.subr.mxu0 0.0
      %466 = vmatpush1.msra.mxu0 %v179
      %467 = vmatprep.subr.mxu0 0.0
      %468 = vmatpush1.msra.mxu0 %v180
      %469 = vmatprep.subr.mxu0 0.0
      %470 = vmatpush1.msra.mxu0 %v181
      %471 = vmatprep.subr.mxu0 0.0
      %472 = vmatpush1.msra.mxu0 %v182
      %473 = vmatprep.subr.mxu0 0.0
      %474 = vmatpush1.msra.mxu0 %v183
      %475 = vmatprep.subr.mxu0 0.0
      %476 = vmatpush1.msra.mxu0 %v184
      %477 = vmatprep.subr.mxu0 0.0
      %478 = vmatpush1.msra.mxu0 %v185
      %479 = vmatprep.subr.mxu0 0.0
      %480 = vmatpush1.msra.mxu0 %v186
      %481 = vmatprep.subr.mxu0 0.0
      %482 = vmatpush1.msra.mxu0 %v187
      %483 = vmatprep.subr.mxu0 0.0
      %484 = vmatpush1.msra.mxu0 %v188
      %485 = vmatprep.subr.mxu0 0.0
      %486 = vmatpush1.msra.mxu0 0.0
      %487 = vmatprep.subr.mxu0 0.0
      %488 = vmatpush1.msra.mxu0 0.0
      %489 = vmatprep.subr.mxu0 0.0
      %490 = vmatpush1.msra.mxu0 0.0
      %491 = vmatprep.subr.mxu0 0.0
      %492 = vmatpush1.msra.mxu0 0.0
      %493 = vmatprep.subr.mxu0 0.0
      %494 = vmatpush1.msra.mxu0 0.0
      %495 = vmatprep.subr.mxu0 0.0
      %496 = vmatpush1.msra.mxu0 0.0
      %497 = vmatprep.subr.mxu0 0.0
      %498 = vmatpush1.msra.mxu0 0.0
      %499 = vmatprep.subr.mxu0 0.0
      %500 = vmatpush1.msra.mxu0 0.0
      %501 = vmatprep.subr.mxu0 0.0
      %502 = vmatpush1.msra.mxu0 0.0
      %503 = vmatprep.subr.mxu0 0.0
      %504 = vmatpush1.msra.mxu0 0.0
      %505 = vmatprep.subr.mxu0 0.0
      %506 = vmatpush1.msra.mxu0 0.0
      %507 = vmatprep.subr.mxu0 0.0
      %508 = vmatpush1.msra.mxu0 0.0
      %509 = vmatprep.subr.mxu0 0.0
      %510 = vmatpush1.msra.mxu0 0.0
      %511 = vmatprep.subr.mxu0 0.0
      %512 = vmatpush1.msra.mxu0 0.0
      %513 = vmatprep.subr.mxu0 0.0
      %514 = vmatpush1.msra.mxu0 0.0
      %515 = vmatprep.subr.mxu0 0.0
      %516 = vmatpush1.msra.mxu0 0.0
      %517 = vmatprep.subr.mxu0 0.0
      %518 = vmatpush1.msra.mxu0 0.0
      %519 = vmatprep.subr.mxu0 0.0
      %520 = vmatpush1.msra.mxu0 0.0
      %521 = vmatprep.subr.mxu0 0.0
      %522 = vmatpush1.msra.mxu0 0.0
      %523 = vmatprep.subr.mxu0 0.0
      %524 = vmatpush1.msra.mxu0 0.0
      %525 = vmatprep.mubr.f32.mxu0 0.0
      %526 = vmatmul.mubr.f32.gmra.mrb[0].mxu0 %v219
      %v527 = vpop.f32.mrb[0].mxu0
      %v528 = vadd.f32 %v453, %v527
      %v529 = vpop.f32.mrb[0].mxu0
      %530 = vmatprep.mubr.f32.mxu0 0.0
      %531 = vmatmul.mubr.f32.gmra.mrb[0].mxu0 %v222
      %v532 = vpop.f32.mrb[0].mxu0
      %v533 = vadd.f32 %v458, %v532
      %v534 = vpop.f32.mrb[0].mxu0
      %535 = vdwg.mxu0
      %s536 = scalar_lea.vmem %s1, 288
      %v537 = vld [vmem:[%s536] sm:$0xff]
      %v538 = vld [vmem:[%s536 + $0x8] sm:$0xff]
      %v539 = vld [vmem:[%s536 + $0x10] sm:$0xff]
      %v540 = vld [vmem:[%s536 + $0x18] sm:$0xff]
      %v541 = vld [vmem:[%s536 + $0x20] sm:$0xff]
      %v542 = vld [vmem:[%s536 + $0x28] sm:$0xff]
      %v543 = vld [vmem:[%s536 + $0x30] sm:$0xff]
      %v544 = vld [vmem:[%s536 + $0x38] sm:$0xff]
      %v545 = vld [vmem:[%s536 + $0x40] sm:$0xff]
      %v546 = vld [vmem:[%s536 + $0x48] sm:$0xff]
      %v547 = vld [vmem:[%s536 + $0x50] sm:$0xff]
      %v548 = vld [vmem:[%s536 + $0x58] sm:$0xff]
      %549 = vmatprep.subr.mxu0 0.0
      %550 = vmatpush1.msra.mxu0 %v537
      %551 = vmatprep.subr.mxu0 0.0
      %552 = vmatpush1.msra.mxu0 %v538
      %553 = vmatprep.subr.mxu0 0.0
      %554 = vmatpush1.msra.mxu0 %v539
      %555 = vmatprep.subr.mxu0 0.0
      %556 = vmatpush1.msra.mxu0 %v540
      %557 = vmatprep.subr.mxu0 0.0
      %558 = vmatpush1.msra.mxu0 %v541
      %559 = vmatprep.subr.mxu0 0.0
      %560 = vmatpush1.msra.mxu0 %v542
      %561 = vmatprep.subr.mxu0 0.0
      %562 = vmatpush1.msra.mxu0 %v543
      %563 = vmatprep.subr.mxu0 0.0
      %564 = vmatpush1.msra.mxu0 %v544
      %565 = vmatprep.subr.mxu0 0.0
      %566 = vmatpush1.msra.mxu0 %v545
      %567 = vmatprep.subr.mxu0 0.0
      %568 = vmatpush1.msra.mxu0 %v546
      %569 = vmatprep.subr.mxu0 0.0
      %570 = vmatpush1.msra.mxu0 %v547
      %571 = vmatprep.subr.mxu0 0.0
      %572 = vmatpush1.msra.mxu0 %v548
      %573 = vmatprep.subr.mxu0 0.0
      %574 = vmatpush1.msra.mxu0 0.0
      %575 = vmatprep.subr.mxu0 0.0
      %576 = vmatpush1.msra.mxu0 0.0
      %577 = vmatprep.subr.mxu0 0.0
      %578 = vmatpush1.msra.mxu0 0.0
      %579 = vmatprep.subr.mxu0 0.0
      %580 = vmatpush1.msra.mxu0 0.0
      %581 = vmatprep.subr.mxu0 0.0
      %582 = vmatpush1.msra.mxu0 0.0
      %583 = vmatprep.subr.mxu0 0.0
      %584 = vmatpush1.msra.mxu0 0.0
      %585 = vmatprep.subr.mxu0 0.0
      %586 = vmatpush1.msra.mxu0 0.0
      %587 = vmatprep.subr.mxu0 0.0
      %588 = vmatpush1.msra.mxu0 0.0
      %589 = vmatprep.subr.mxu0 0.0
      %590 = vmatpush1.msra.mxu0 0.0
      %591 = vmatprep.subr.mxu0 0.0
      %592 = vmatpush1.msra.mxu0 0.0
      %593 = vmatprep.subr.mxu0 0.0
      %594 = vmatpush1.msra.mxu0 0.0
      %595 = vmatprep.subr.mxu0 0.0
      %596 = vmatpush1.msra.mxu0 0.0
      %597 = vmatprep.subr.mxu0 0.0
      %598 = vmatpush1.msra.mxu0 0.0
      %599 = vmatprep.subr.mxu0 0.0
      %600 = vmatpush1.msra.mxu0 0.0
      %601 = vmatprep.subr.mxu0 0.0
      %602 = vmatpush1.msra.mxu0 0.0
      %603 = vmatprep.subr.mxu0 0.0
      %604 = vmatpush1.msra.mxu0 0.0
      %605 = vmatprep.subr.mxu0 0.0
      %606 = vmatpush1.msra.mxu0 0.0
      %607 = vmatprep.subr.mxu0 0.0
      %608 = vmatpush1.msra.mxu0 0.0
      %609 = vmatprep.subr.mxu0 0.0
      %610 = vmatpush1.msra.mxu0 0.0
      %611 = vmatprep.subr.mxu0 0.0
      %612 = vmatpush1.msra.mxu0 0.0
      %613 = vmatprep.mubr.f32.mxu0 0.0
      %614 = vmatmul.mubr.f32.gmra.mrb[0].mxu0 %v219
      %v615 = vpop.f32.mrb[0].mxu0
      %v616 = vadd.f32 0.0, %v615
      %v617 = vpop.f32.mrb[0].mxu0
      %618 = vmatprep.mubr.f32.mxu0 0.0
      %619 = vmatmul.mubr.f32.gmra.mrb[0].mxu0 %v222
      %v620 = vpop.f32.mrb[0].mxu0
      %v621 = vadd.f32 0.0, %v620
      %v622 = vpop.f32.mrb[0].mxu0
      %623 = vdwg.mxu0
      %624 = vmatprep.subr.mxu0 0.0
      %625 = vmatpush1.msra.mxu0 %v190
      %626 = vmatprep.subr.mxu0 0.0
      %627 = vmatpush1.msra.mxu0 %v191
      %628 = vmatprep.subr.mxu0 0.0
      %629 = vmatpush1.msra.mxu0 %v192
      %630 = vmatprep.subr.mxu0 0.0
      %631 = vmatpush1.msra.mxu0 %v193
      %632 = vmatprep.subr.mxu0 0.0
      %633 = vmatpush1.msra.mxu0 %v194
      %634 = vmatprep.subr.mxu0 0.0
      %635 = vmatpush1.msra.mxu0 %v195
      %636 = vmatprep.subr.mxu0 0.0
      %637 = vmatpush1.msra.mxu0 %v196
      %638 = vmatprep.subr.mxu0 0.0
      %639 = vmatpush1.msra.mxu0 %v197
      %640 = vmatprep.subr.mxu0 0.0
      %641 = vmatpush1.msra.mxu0 %v198
      %642 = vmatprep.subr.mxu0 0.0
      %643 = vmatpush1.msra.mxu0 %v199
      %644 = vmatprep.subr.mxu0 0.0
      %645 = vmatpush1.msra.mxu0 %v200
      %646 = vmatprep.subr.mxu0 0.0
      %647 = vmatpush1.msra.mxu0 %v201
      %648 = vmatprep.subr.mxu0 0.0
      %649 = vmatpush1.msra.mxu0 0.0
      %650 = vmatprep.subr.mxu0 0.0
      %651 = vmatpush1.msra.mxu0 0.0
      %652 = vmatprep.subr.mxu0 0.0
      %653 = vmatpush1.msra.mxu0 0.0
      %654 = vmatprep.subr.mxu0 0.0
      %655 = vmatpush1.msra.mxu0 0.0
      %656 = vmatprep.subr.mxu0 0.0
      %657 = vmatpush1.msra.mxu0 0.0
      %658 = vmatprep.subr.mxu0 0.0
      %659 = vmatpush1.msra.mxu0 0.0
      %660 = vmatprep.subr.mxu0 0.0
      %661 = vmatpush1.msra.mxu0 0.0
      %662 = vmatprep.subr.mxu0 0.0
      %663 = vmatpush1.msra.mxu0 0.0
      %664 = vmatprep.subr.mxu0 0.0
      %665 = vmatpush1.msra.mxu0 0.0
      %666 = vmatprep.subr.mxu0 0.0
      %667 = vmatpush1.msra.mxu0 0.0
      %668 = vmatprep.subr.mxu0 0.0
      %669 = vmatpush1.msra.mxu0 0.0
      %670 = vmatprep.subr.mxu0 0.0
      %671 = vmatpush1.msra.mxu0 0.0
      %672 = vmatprep.subr.mxu0 0.0
      %673 = vmatpush1.msra.mxu0 0.0
      %674 = vmatprep.subr.mxu0 0.0
      %675 = vmatpush1.msra.mxu0 0.0
      %676 = vmatprep.subr.mxu0 0.0
      %677 = vmatpush1.msra.mxu0 0.0
      %678 = vmatprep.subr.mxu0 0.0
      %679 = vmatpush1.msra.mxu0 0.0
      %680 = vmatprep.subr.mxu0 0.0
      %681 = vmatpush1.msra.mxu0 0.0
      %682 = vmatprep.subr.mxu0 0.0
      %683 = vmatpush1.msra.mxu0 0.0
      %684 = vmatprep.subr.mxu0 0.0
      %685 = vmatpush1.msra.mxu0 0.0
      %686 = vmatprep.subr.mxu0 0.0
      %687 = vmatpush1.msra.mxu0 0.0
      %688 = vmatprep.mubr.f32.mxu0 0.0
      %689 = vmatmul.mubr.f32.gmra.mrb[0].mxu0 %v300
      %v690 = vpop.f32.mrb[0].mxu0
      %v691 = vadd.f32 %v616, %v690
      %v692 = vpop.f32.mrb[0].mxu0
      %693 = vmatprep.mubr.f32.mxu0 0.0
      %694 = vmatmul.mubr.f32.gmra.mrb[0].mxu0 %v303
      %v695 = vpop.f32.mrb[0].mxu0
      %v696 = vadd.f32 %v621, %v695
      %v697 = vpop.f32.mrb[0].mxu0
      %698 = vdwg.mxu0
      %699 = vmatprep.subr.mxu0 0.0
      %700 = vmatpush1.msra.mxu0 %v537
      %701 = vmatprep.subr.mxu0 0.0
      %702 = vmatpush1.msra.mxu0 %v538
      %703 = vmatprep.subr.mxu0 0.0
      %704 = vmatpush1.msra.mxu0 %v539
      %705 = vmatprep.subr.mxu0 0.0
      %706 = vmatpush1.msra.mxu0 %v540
      %707 = vmatprep.subr.mxu0 0.0
      %708 = vmatpush1.msra.mxu0 %v541
      %709 = vmatprep.subr.mxu0 0.0
      %710 = vmatpush1.msra.mxu0 %v542
      %711 = vmatprep.subr.mxu0 0.0
      %712 = vmatpush1.msra.mxu0 %v543
      %713 = vmatprep.subr.mxu0 0.0
      %714 = vmatpush1.msra.mxu0 %v544
      %715 = vmatprep.subr.mxu0 0.0
      %716 = vmatpush1.msra.mxu0 %v545
      %717 = vmatprep.subr.mxu0 0.0
      %718 = vmatpush1.msra.mxu0 %v546
      %719 = vmatprep.subr.mxu0 0.0
      %720 = vmatpush1.msra.mxu0 %v547
      %721 = vmatprep.subr.mxu0 0.0
      %722 = vmatpush1.msra.mxu0 %v548
      %723 = vmatprep.subr.mxu0 0.0
      %724 = vmatpush1.msra.mxu0 0.0
      %725 = vmatprep.subr.mxu0 0.0
      %726 = vmatpush1.msra.mxu0 0.0
      %727 = vmatprep.subr.mxu0 0.0
      %728 = vmatpush1.msra.mxu0 0.0
      %729 = vmatprep.subr.mxu0 0.0
      %730 = vmatpush1.msra.mxu0 0.0
      %731 = vmatprep.subr.mxu0 0.0
      %732 = vmatpush1.msra.mxu0 0.0
      %733 = vmatprep.subr.mxu0 0.0
      %734 = vmatpush1.msra.mxu0 0.0
      %735 = vmatprep.subr.mxu0 0.0
      %736 = vmatpush1.msra.mxu0 0.0
      %737 = vmatprep.subr.mxu0 0.0
      %738 = vmatpush1.msra.mxu0 0.0
      %739 = vmatprep.subr.mxu0 0.0
      %740 = vmatpush1.msra.mxu0 0.0
      %741 = vmatprep.subr.mxu0 0.0
      %742 = vmatpush1.msra.mxu0 0.0
      %743 = vmatprep.subr.mxu0 0.0
      %744 = vmatpush1.msra.mxu0 0.0
      %745 = vmatprep.subr.mxu0 0.0
      %746 = vmatpush1.msra.mxu0 0.0
      %747 = vmatprep.subr.mxu0 0.0
      %748 = vmatpush1.msra.mxu0 0.0
      %749 = vmatprep.subr.mxu0 0.0
      %750 = vmatpush1.msra.mxu0 0.0
      %751 = vmatprep.subr.mxu0 0.0
      %752 = vmatpush1.msra.mxu0 0.0
      %753 = vmatprep.subr.mxu0 0.0
      %754 = vmatpush1.msra.mxu0 0.0
      %755 = vmatprep.subr.mxu0 0.0
      %756 = vmatpush1.msra.mxu0 0.0
      %757 = vmatprep.subr.mxu0 0.0
      %758 = vmatpush1.msra.mxu0 0.0
      %759 = vmatprep.subr.mxu0 0.0
      %760 = vmatpush1.msra.mxu0 0.0
      %761 = vmatprep.subr.mxu0 0.0
      %762 = vmatpush1.msra.mxu0 0.0
      %763 = vmatprep.mubr.f32.mxu0 0.0
      %764 = vmatmul.mubr.f32.gmra.mrb[0].mxu0 %v381
      %v765 = vpop.f32.mrb[0].mxu0
      %v766 = vadd.f32 0.0, %v765
      %v767 = vpop.f32.mrb[0].mxu0
      %768 = vmatprep.mubr.f32.mxu0 0.0
      %769 = vmatmul.mubr.f32.gmra.mrb[0].mxu0 %v384
      %v770 = vpop.f32.mrb[0].mxu0
      %v771 = vadd.f32 0.0, %v770
      %v772 = vpop.f32.mrb[0].mxu0
      %773 = vdwg.mxu0
      %774 = vmatprep.subr.mxu0 0.0
      %775 = vmatpush1.msra.mxu0 %v190
      %776 = vmatprep.subr.mxu0 0.0
      %777 = vmatpush1.msra.mxu0 %v191
      %778 = vmatprep.subr.mxu0 0.0
      %779 = vmatpush1.msra.mxu0 %v192
      %780 = vmatprep.subr.mxu0 0.0
      %781 = vmatpush1.msra.mxu0 %v193
      %782 = vmatprep.subr.mxu0 0.0
      %783 = vmatpush1.msra.mxu0 %v194
      %784 = vmatprep.subr.mxu0 0.0
      %785 = vmatpush1.msra.mxu0 %v195
      %786 = vmatprep.subr.mxu0 0.0
      %787 = vmatpush1.msra.mxu0 %v196
      %788 = vmatprep.subr.mxu0 0.0
      %789 = vmatpush1.msra.mxu0 %v197
      %790 = vmatprep.subr.mxu0 0.0
      %791 = vmatpush1.msra.mxu0 %v198
      %792 = vmatprep.subr.mxu0 0.0
      %793 = vmatpush1.msra.mxu0 %v199
      %794 = vmatprep.subr.mxu0 0.0
      %795 = vmatpush1.msra.mxu0 %v200
      %796 = vmatprep.subr.mxu0 0.0
      %797 = vmatpush1.msra.mxu0 %v201
      %798 = vmatprep.subr.mxu0 0.0
      %799 = vmatpush1.msra.mxu0 0.0
      %800 = vmatprep.subr.mxu0 0.0
      %801 = vmatpush1.msra.mxu0 0.0
      %802 = vmatprep.subr.mxu0 0.0
      %803 = vmatpush1.msra.mxu0 0.0
      %804 = vmatprep.subr.mxu0 0.0
      %805 = vmatpush1.msra.mxu0 0.0
      %806 = vmatprep.subr.mxu0 0.0
      %807 = vmatpush1.msra.mxu0 0.0
      %808 = vmatprep.subr.mxu0 0.0
      %809 = vmatpush1.msra.mxu0 0.0
      %810 = vmatprep.subr.mxu0 0.0
      %811 = vmatpush1.msra.mxu0 0.0
      %812 = vmatprep.subr.mxu0 0.0
      %813 = vmatpush1.msra.mxu0 0.0
      %814 = vmatprep.subr.mxu0 0.0
      %815 = vmatpush1.msra.mxu0 0.0
      %816 = vmatprep.subr.mxu0 0.0
      %817 = vmatpush1.msra.mxu0 0.0
      %818 = vmatprep.subr.mxu0 0.0
      %819 = vmatpush1.msra.mxu0 0.0
      %820 = vmatprep.subr.mxu0 0.0
      %821 = vmatpush1.msra.mxu0 0.0
      %822 = vmatprep.subr.mxu0 0.0
      %823 = vmatpush1.msra.mxu0 0.0
      %824 = vmatprep.subr.mxu0 0.0
      %825 = vmatpush1.msra.mxu0 0.0
      %826 = vmatprep.subr.mxu0 0.0
      %827 = vmatpush1.msra.mxu0 0.0
      %828 = vmatprep.subr.mxu0 0.0
      %829 = vmatpush1.msra.mxu0 0.0
      %830 = vmatprep.subr.mxu0 0.0
      %831 = vmatpush1.msra.mxu0 0.0
      %832 = vmatprep.subr.mxu0 0.0
      %833 = vmatpush1.msra.mxu0 0.0
      %834 = vmatprep.subr.mxu0 0.0
      %835 = vmatpush1.msra.mxu0 0.0
      %836 = vmatprep.subr.mxu0 0.0
      %837 = vmatpush1.msra.mxu0 0.0
      %838 = vmatprep.mubr.f32.mxu0 0.0
      %839 = vmatmul.mubr.f32.gmra.mrb[0].mxu0 %v219
      %v840 = vpop.f32.mrb[0].mxu0
      %v841 = vadd.f32 %v766, %v840
      %v842 = vpop.f32.mrb[0].mxu0
      %843 = vmatprep.mubr.f32.mxu0 0.0
      %844 = vmatmul.mubr.f32.gmra.mrb[0].mxu0 %v222
      %v845 = vpop.f32.mrb[0].mxu0
      %v846 = vadd.f32 %v771, %v845
      %v847 = vpop.f32.mrb[0].mxu0
      %848 = vdwg.mxu0
      %v849 = vld [vmem:[%s174 + $0x1] sm:$0xff]
      %v850 = vld [vmem:[%s174 + $0x9] sm:$0x3f]
      %s851 = scalar_lea.vmem %s1, 384
      %v852 = vld [vmem:[%s851] sm:$0xff]
      %v853 = vld [vmem:[%s851 + $0x8] sm:$0xff]
      %v854 = vld [vmem:[%s851 + $0x10] sm:$0xff]
      %v855 = vld [vmem:[%s851 + $0x18] sm:$0xff]
      %v856 = vld [vmem:[%s851 + $0x20] sm:$0xff]
      %v857 = vld [vmem:[%s851 + $0x28] sm:$0xff]
      %v858 = vld [vmem:[%s851 + $0x30] sm:$0xff]
      %v859 = vld [vmem:[%s851 + $0x38] sm:$0xff]
      %v860 = vld [vmem:[%s851 + $0x40] sm:$0xff]
      %v861 = vld [vmem:[%s851 + $0x48] sm:$0xff]
      %v862 = vld [vmem:[%s851 + $0x50] sm:$0xff]
      %v863 = vld [vmem:[%s851 + $0x58] sm:$0xff]
      %864 = vmatprep.subr.mxu0 0.0
      %865 = vmatpush1.msra.mxu0 %v852
      %866 = vmatprep.subr.mxu0 0.0
      %867 = vmatpush1.msra.mxu0 %v853
      %868 = vmatprep.subr.mxu0 0.0
      %869 = vmatpush1.msra.mxu0 %v854
      %870 = vmatprep.subr.mxu0 0.0
      %871 = vmatpush1.msra.mxu0 %v855
      %872 = vmatprep.subr.mxu0 0.0
      %873 = vmatpush1.msra.mxu0 %v856
      %874 = vmatprep.subr.mxu0 0.0
      %875 = vmatpush1.msra.mxu0 %v857
      %876 = vmatprep.subr.mxu0 0.0
      %877 = vmatpush1.msra.mxu0 %v858
      %878 = vmatprep.subr.mxu0 0.0
      %879 = vmatpush1.msra.mxu0 %v859
      %880 = vmatprep.subr.mxu0 0.0
      %881 = vmatpush1.msra.mxu0 %v860
      %882 = vmatprep.subr.mxu0 0.0
      %883 = vmatpush1.msra.mxu0 %v861
      %884 = vmatprep.subr.mxu0 0.0
      %885 = vmatpush1.msra.mxu0 %v862
      %886 = vmatprep.subr.mxu0 0.0
      %887 = vmatpush1.msra.mxu0 %v863
      %888 = vmatprep.subr.mxu0 0.0
      %889 = vmatpush1.msra.mxu0 0.0
      %890 = vmatprep.subr.mxu0 0.0
      %891 = vmatpush1.msra.mxu0 0.0
      %892 = vmatprep.subr.mxu0 0.0
      %893 = vmatpush1.msra.mxu0 0.0
      %894 = vmatprep.subr.mxu0 0.0
      %895 = vmatpush1.msra.mxu0 0.0
      %896 = vmatprep.subr.mxu0 0.0
      %897 = vmatpush1.msra.mxu0 0.0
      %898 = vmatprep.subr.mxu0 0.0
      %899 = vmatpush1.msra.mxu0 0.0
      %900 = vmatprep.subr.mxu0 0.0
      %901 = vmatpush1.msra.mxu0 0.0
      %902 = vmatprep.subr.mxu0 0.0
      %903 = vmatpush1.msra.mxu0 0.0
      %904 = vmatprep.subr.mxu0 0.0
      %905 = vmatpush1.msra.mxu0 0.0
      %906 = vmatprep.subr.mxu0 0.0
      %907 = vmatpush1.msra.mxu0 0.0
      %908 = vmatprep.subr.mxu0 0.0
      %909 = vmatpush1.msra.mxu0 0.0
      %910 = vmatprep.subr.mxu0 0.0
      %911 = vmatpush1.msra.mxu0 0.0
      %912 = vmatprep.subr.mxu0 0.0
      %913 = vmatpush1.msra.mxu0 0.0
      %914 = vmatprep.subr.mxu0 0.0
      %915 = vmatpush1.msra.mxu0 0.0
      %916 = vmatprep.subr.mxu0 0.0
      %917 = vmatpush1.msra.mxu0 0.0
      %918 = vmatprep.subr.mxu0 0.0
      %919 = vmatpush1.msra.mxu0 0.0
      %920 = vmatprep.subr.mxu0 0.0
      %921 = vmatpush1.msra.mxu0 0.0
      %922 = vmatprep.subr.mxu0 0.0
      %923 = vmatpush1.msra.mxu0 0.0
      %924 = vmatprep.subr.mxu0 0.0
      %925 = vmatpush1.msra.mxu0 0.0
      %926 = vmatprep.subr.mxu0 0.0
      %927 = vmatpush1.msra.mxu0 0.0
      %928 = vmatprep.mubr.f32.mxu0 0.0
      %929 = vmatmul.mubr.f32.gmra.mrb[0].mxu0 %v381
      %v930 = vpop.f32.mrb[0].mxu0
      %v931 = vadd.f32 0.0, %v930
      %v932 = vpop.f32.mrb[0].mxu0
      %933 = vmatprep.mubr.f32.mxu0 0.0
      %934 = vmatmul.mubr.f32.gmra.mrb[0].mxu0 %v384
      %v935 = vpop.f32.mrb[0].mxu0
      %v936 = vadd.f32 0.0, %v935
      %v937 = vpop.f32.mrb[0].mxu0
      %938 = vdwg.mxu0
      %v939 = vadd.f32 %v372, %v931
      %v940 = vadd.f32 %v377, %v936
      %v942 = vsel %vm217, %v849, 0
      %v945 = vsel %vm217, %v850, 0
      %947 = vmatprep.subr.mxu0 0.0
      %948 = vmatpush1.msra.mxu0 %v852
      %949 = vmatprep.subr.mxu0 0.0
      %950 = vmatpush1.msra.mxu0 %v853
      %951 = vmatprep.subr.mxu0 0.0
      %952 = vmatpush1.msra.mxu0 %v854
      %953 = vmatprep.subr.mxu0 0.0
      %954 = vmatpush1.msra.mxu0 %v855
      %955 = vmatprep.subr.mxu0 0.0
      %956 = vmatpush1.msra.mxu0 %v856
      %957 = vmatprep.subr.mxu0 0.0
      %958 = vmatpush1.msra.mxu0 %v857
      %959 = vmatprep.subr.mxu0 0.0
      %960 = vmatpush1.msra.mxu0 %v858
      %961 = vmatprep.subr.mxu0 0.0
      %962 = vmatpush1.msra.mxu0 %v859
      %963 = vmatprep.subr.mxu0 0.0
      %964 = vmatpush1.msra.mxu0 %v860
      %965 = vmatprep.subr.mxu0 0.0
      %966 = vmatpush1.msra.mxu0 %v861
      %967 = vmatprep.subr.mxu0 0.0
      %968 = vmatpush1.msra.mxu0 %v862
      %969 = vmatprep.subr.mxu0 0.0
      %970 = vmatpush1.msra.mxu0 %v863
      %971 = vmatprep.subr.mxu0 0.0
      %972 = vmatpush1.msra.mxu0 0.0
      %973 = vmatprep.subr.mxu0 0.0
      %974 = vmatpush1.msra.mxu0 0.0
      %975 = vmatprep.subr.mxu0 0.0
      %976 = vmatpush1.msra.mxu0 0.0
      %977 = vmatprep.subr.mxu0 0.0
      %978 = vmatpush1.msra.mxu0 0.0
      %979 = vmatprep.subr.mxu0 0.0
      %980 = vmatpush1.msra.mxu0 0.0
      %981 = vmatprep.subr.mxu0 0.0
      %982 = vmatpush1.msra.mxu0 0.0
      %983 = vmatprep.subr.mxu0 0.0
      %984 = vmatpush1.msra.mxu0 0.0
      %985 = vmatprep.subr.mxu0 0.0
      %986 = vmatpush1.msra.mxu0 0.0
      %987 = vmatprep.subr.mxu0 0.0
      %988 = vmatpush1.msra.mxu0 0.0
      %989 = vmatprep.subr.mxu0 0.0
      %990 = vmatpush1.msra.mxu0 0.0
      %991 = vmatprep.subr.mxu0 0.0
      %992 = vmatpush1.msra.mxu0 0.0
      %993 = vmatprep.subr.mxu0 0.0
      %994 = vmatpush1.msra.mxu0 0.0
      %995 = vmatprep.subr.mxu0 0.0
      %996 = vmatpush1.msra.mxu0 0.0
      %997 = vmatprep.subr.mxu0 0.0
      %998 = vmatpush1.msra.mxu0 0.0
      %999 = vmatprep.subr.mxu0 0.0
      %1000 = vmatpush1.msra.mxu0 0.0
      %1001 = vmatprep.subr.mxu0 0.0
      %1002 = vmatpush1.msra.mxu0 0.0
      %1003 = vmatprep.subr.mxu0 0.0
      %1004 = vmatpush1.msra.mxu0 0.0
      %1005 = vmatprep.subr.mxu0 0.0
      %1006 = vmatpush1.msra.mxu0 0.0
      %1007 = vmatprep.subr.mxu0 0.0
      %1008 = vmatpush1.msra.mxu0 0.0
      %1009 = vmatprep.subr.mxu0 0.0
      %1010 = vmatpush1.msra.mxu0 0.0
      %1011 = vmatprep.mubr.f32.mxu0 0.0
      %1012 = vmatmul.mubr.f32.gmra.mrb[0].mxu0 %v942
      %v1013 = vpop.f32.mrb[0].mxu0
      %v1014 = vadd.f32 0.0, %v1013
      %v1015 = vpop.f32.mrb[0].mxu0
      %1016 = vmatprep.mubr.f32.mxu0 0.0
      %1017 = vmatmul.mubr.f32.gmra.mrb[0].mxu0 %v945
      %v1018 = vpop.f32.mrb[0].mxu0
      %v1019 = vadd.f32 0.0, %v1018
      %v1020 = vpop.f32.mrb[0].mxu0
      %1021 = vdwg.mxu0
      %v1022 = vadd.f32 %v528, %v1014
      %v1023 = vadd.f32 %v533, %v1019
      %s1024 = scalar_lea.vmem %s1, 480
      %v1025 = vld [vmem:[%s1024] sm:$0xff]
      %v1026 = vld [vmem:[%s1024 + $0x8] sm:$0xff]
      %v1027 = vld [vmem:[%s1024 + $0x10] sm:$0xff]
      %v1028 = vld [vmem:[%s1024 + $0x18] sm:$0xff]
      %v1029 = vld [vmem:[%s1024 + $0x20] sm:$0xff]
      %v1030 = vld [vmem:[%s1024 + $0x28] sm:$0xff]
      %v1031 = vld [vmem:[%s1024 + $0x30] sm:$0xff]
      %v1032 = vld [vmem:[%s1024 + $0x38] sm:$0xff]
      %v1033 = vld [vmem:[%s1024 + $0x40] sm:$0xff]
      %v1034 = vld [vmem:[%s1024 + $0x48] sm:$0xff]
      %v1035 = vld [vmem:[%s1024 + $0x50] sm:$0xff]
      %v1036 = vld [vmem:[%s1024 + $0x58] sm:$0xff]
      %1037 = vmatprep.subr.mxu0 0.0
      %1038 = vmatpush1.msra.mxu0 %v1025
      %1039 = vmatprep.subr.mxu0 0.0
      %1040 = vmatpush1.msra.mxu0 %v1026
      %1041 = vmatprep.subr.mxu0 0.0
      %1042 = vmatpush1.msra.mxu0 %v1027
      %1043 = vmatprep.subr.mxu0 0.0
      %1044 = vmatpush1.msra.mxu0 %v1028
      %1045 = vmatprep.subr.mxu0 0.0
      %1046 = vmatpush1.msra.mxu0 %v1029
      %1047 = vmatprep.subr.mxu0 0.0
      %1048 = vmatpush1.msra.mxu0 %v1030
      %1049 = vmatprep.subr.mxu0 0.0
      %1050 = vmatpush1.msra.mxu0 %v1031
      %1051 = vmatprep.subr.mxu0 0.0
      %1052 = vmatpush1.msra.mxu0 %v1032
      %1053 = vmatprep.subr.mxu0 0.0
      %1054 = vmatpush1.msra.mxu0 %v1033
      %1055 = vmatprep.subr.mxu0 0.0
      %1056 = vmatpush1.msra.mxu0 %v1034
      %1057 = vmatprep.subr.mxu0 0.0
      %1058 = vmatpush1.msra.mxu0 %v1035
      %1059 = vmatprep.subr.mxu0 0.0
      %1060 = vmatpush1.msra.mxu0 %v1036
      %1061 = vmatprep.subr.mxu0 0.0
      %1062 = vmatpush1.msra.mxu0 0.0
      %1063 = vmatprep.subr.mxu0 0.0
      %1064 = vmatpush1.msra.mxu0 0.0
      %1065 = vmatprep.subr.mxu0 0.0
      %1066 = vmatpush1.msra.mxu0 0.0
      %1067 = vmatprep.subr.mxu0 0.0
      %1068 = vmatpush1.msra.mxu0 0.0
      %1069 = vmatprep.subr.mxu0 0.0
      %1070 = vmatpush1.msra.mxu0 0.0
      %1071 = vmatprep.subr.mxu0 0.0
      %1072 = vmatpush1.msra.mxu0 0.0
      %1073 = vmatprep.subr.mxu0 0.0
      %1074 = vmatpush1.msra.mxu0 0.0
      %1075 = vmatprep.subr.mxu0 0.0
      %1076 = vmatpush1.msra.mxu0 0.0
      %1077 = vmatprep.subr.mxu0 0.0
      %1078 = vmatpush1.msra.mxu0 0.0
      %1079 = vmatprep.subr.mxu0 0.0
      %1080 = vmatpush1.msra.mxu0 0.0
      %1081 = vmatprep.subr.mxu0 0.0
      %1082 = vmatpush1.msra.mxu0 0.0
      %1083 = vmatprep.subr.mxu0 0.0
      %1084 = vmatpush1.msra.mxu0 0.0
      %1085 = vmatprep.subr.mxu0 0.0
      %1086 = vmatpush1.msra.mxu0 0.0
      %1087 = vmatprep.subr.mxu0 0.0
      %1088 = vmatpush1.msra.mxu0 0.0
      %1089 = vmatprep.subr.mxu0 0.0
      %1090 = vmatpush1.msra.mxu0 0.0
      %1091 = vmatprep.subr.mxu0 0.0
      %1092 = vmatpush1.msra.mxu0 0.0
      %1093 = vmatprep.subr.mxu0 0.0
      %1094 = vmatpush1.msra.mxu0 0.0
      %1095 = vmatprep.subr.mxu0 0.0
      %1096 = vmatpush1.msra.mxu0 0.0
      %1097 = vmatprep.subr.mxu0 0.0
      %1098 = vmatpush1.msra.mxu0 0.0
      %1099 = vmatprep.subr.mxu0 0.0
      %1100 = vmatpush1.msra.mxu0 0.0
      %1101 = vmatprep.mubr.f32.mxu0 0.0
      %1102 = vmatmul.mubr.f32.gmra.mrb[0].mxu0 %v381
      %v1103 = vpop.f32.mrb[0].mxu0
      %v1104 = vadd.f32 0.0, %v1103
      %v1105 = vpop.f32.mrb[0].mxu0
      %1106 = vmatprep.mubr.f32.mxu0 0.0
      %1107 = vmatmul.mubr.f32.gmra.mrb[0].mxu0 %v384
      %v1108 = vpop.f32.mrb[0].mxu0
      %v1109 = vadd.f32 0.0, %v1108
      %v1110 = vpop.f32.mrb[0].mxu0
      %1111 = vdwg.mxu0
      %v1112 = vadd.f32 %v691, %v1104
      %v1113 = vadd.f32 %v696, %v1109
      %1114 = vmatprep.subr.mxu0 0.0
      %1115 = vmatpush1.msra.mxu0 %v1025
      %1116 = vmatprep.subr.mxu0 0.0
      %1117 = vmatpush1.msra.mxu0 %v1026
      %1118 = vmatprep.subr.mxu0 0.0
      %1119 = vmatpush1.msra.mxu0 %v1027
      %1120 = vmatprep.subr.mxu0 0.0
      %1121 = vmatpush1.msra.mxu0 %v1028
      %1122 = vmatprep.subr.mxu0 0.0
      %1123 = vmatpush1.msra.mxu0 %v1029
      %1124 = vmatprep.subr.mxu0 0.0
      %1125 = vmatpush1.msra.mxu0 %v1030
      %1126 = vmatprep.subr.mxu0 0.0
      %1127 = vmatpush1.msra.mxu0 %v1031
      %1128 = vmatprep.subr.mxu0 0.0
      %1129 = vmatpush1.msra.mxu0 %v1032
      %1130 = vmatprep.subr.mxu0 0.0
      %1131 = vmatpush1.msra.mxu0 %v1033
      %1132 = vmatprep.subr.mxu0 0.0
      %1133 = vmatpush1.msra.mxu0 %v1034
      %1134 = vmatprep.subr.mxu0 0.0
      %1135 = vmatpush1.msra.mxu0 %v1035
      %1136 = vmatprep.subr.mxu0 0.0
      %1137 = vmatpush1.msra.mxu0 %v1036
      %1138 = vmatprep.subr.mxu0 0.0
      %1139 = vmatpush1.msra.mxu0 0.0
      %1140 = vmatprep.subr.mxu0 0.0
      %1141 = vmatpush1.msra.mxu0 0.0
      %1142 = vmatprep.subr.mxu0 0.0
      %1143 = vmatpush1.msra.mxu0 0.0
      %1144 = vmatprep.subr.mxu0 0.0
      %1145 = vmatpush1.msra.mxu0 0.0
      %1146 = vmatprep.subr.mxu0 0.0
      %1147 = vmatpush1.msra.mxu0 0.0
      %1148 = vmatprep.subr.mxu0 0.0
      %1149 = vmatpush1.msra.mxu0 0.0
      %1150 = vmatprep.subr.mxu0 0.0
      %1151 = vmatpush1.msra.mxu0 0.0
      %1152 = vmatprep.subr.mxu0 0.0
      %1153 = vmatpush1.msra.mxu0 0.0
      %1154 = vmatprep.subr.mxu0 0.0
      %1155 = vmatpush1.msra.mxu0 0.0
      %1156 = vmatprep.subr.mxu0 0.0
      %1157 = vmatpush1.msra.mxu0 0.0
      %1158 = vmatprep.subr.mxu0 0.0
      %1159 = vmatpush1.msra.mxu0 0.0
      %1160 = vmatprep.subr.mxu0 0.0
      %1161 = vmatpush1.msra.mxu0 0.0
      %1162 = vmatprep.subr.mxu0 0.0
      %1163 = vmatpush1.msra.mxu0 0.0
      %1164 = vmatprep.subr.mxu0 0.0
      %1165 = vmatpush1.msra.mxu0 0.0
      %1166 = vmatprep.subr.mxu0 0.0
      %1167 = vmatpush1.msra.mxu0 0.0
      %1168 = vmatprep.subr.mxu0 0.0
      %1169 = vmatpush1.msra.mxu0 0.0
      %1170 = vmatprep.subr.mxu0 0.0
      %1171 = vmatpush1.msra.mxu0 0.0
      %1172 = vmatprep.subr.mxu0 0.0
      %1173 = vmatpush1.msra.mxu0 0.0
      %1174 = vmatprep.subr.mxu0 0.0
      %1175 = vmatpush1.msra.mxu0 0.0
      %1176 = vmatprep.subr.mxu0 0.0
      %1177 = vmatpush1.msra.mxu0 0.0
      %1178 = vmatprep.mubr.f32.mxu0 0.0
      %1179 = vmatmul.mubr.f32.gmra.mrb[0].mxu0 %v942
      %v1180 = vpop.f32.mrb[0].mxu0
      %v1181 = vadd.f32 0.0, %v1180
      %v1182 = vpop.f32.mrb[0].mxu0
      %1183 = vmatprep.mubr.f32.mxu0 0.0
      %1184 = vmatmul.mubr.f32.gmra.mrb[0].mxu0 %v945
      %v1185 = vpop.f32.mrb[0].mxu0
      %v1186 = vadd.f32 0.0, %v1185
      %v1187 = vpop.f32.mrb[0].mxu0
      %1188 = vdwg.mxu0
      %v1189 = vadd.f32 %v841, %v1181
      %v1190 = vadd.f32 %v846, %v1186
      %v1191 = vld [vmem:[%s165 + $0x2] sm:$0xff]
      %v1192 = vld [vmem:[%s165 + $0xa] sm:$0x3f]
      %s1193 = scalar_lea.vmem %s1, 576
      %v1194 = vld [vmem:[%s1193] sm:$0xff]
      %v1195 = vld [vmem:[%s1193 + $0x8] sm:$0xff]
      %v1196 = vld [vmem:[%s1193 + $0x10] sm:$0xff]
      %v1197 = vld [vmem:[%s1193 + $0x18] sm:$0xff]
      %v1198 = vld [vmem:[%s1193 + $0x20] sm:$0xff]
      %v1199 = vld [vmem:[%s1193 + $0x28] sm:$0xff]
      %v1200 = vld [vmem:[%s1193 + $0x30] sm:$0xff]
      %v1201 = vld [vmem:[%s1193 + $0x38] sm:$0xff]
      %v1202 = vld [vmem:[%s1193 + $0x40] sm:$0xff]
      %v1203 = vld [vmem:[%s1193 + $0x48] sm:$0xff]
      %v1204 = vld [vmem:[%s1193 + $0x50] sm:$0xff]
      %v1205 = vld [vmem:[%s1193 + $0x58] sm:$0xff]
      %1206 = vmatprep.subr.mxu0 0.0
      %1207 = vmatpush1.msra.mxu0 %v1194
      %1208 = vmatprep.subr.mxu0 0.0
      %1209 = vmatpush1.msra.mxu0 %v1195
      %1210 = vmatprep.subr.mxu0 0.0
      %1211 = vmatpush1.msra.mxu0 %v1196
      %1212 = vmatprep.subr.mxu0 0.0
      %1213 = vmatpush1.msra.mxu0 %v1197
      %1214 = vmatprep.subr.mxu0 0.0
      %1215 = vmatpush1.msra.mxu0 %v1198
      %1216 = vmatprep.subr.mxu0 0.0
      %1217 = vmatpush1.msra.mxu0 %v1199
      %1218 = vmatprep.subr.mxu0 0.0
      %1219 = vmatpush1.msra.mxu0 %v1200
      %1220 = vmatprep.subr.mxu0 0.0
      %1221 = vmatpush1.msra.mxu0 %v1201
      %1222 = vmatprep.subr.mxu0 0.0
      %1223 = vmatpush1.msra.mxu0 %v1202
      %1224 = vmatprep.subr.mxu0 0.0
      %1225 = vmatpush1.msra.mxu0 %v1203
      %1226 = vmatprep.subr.mxu0 0.0
      %1227 = vmatpush1.msra.mxu0 %v1204
      %1228 = vmatprep.subr.mxu0 0.0
      %1229 = vmatpush1.msra.mxu0 %v1205
      %1230 = vmatprep.subr.mxu0 0.0
      %1231 = vmatpush1.msra.mxu0 0.0
      %1232 = vmatprep.subr.mxu0 0.0
      %1233 = vmatpush1.msra.mxu0 0.0
      %1234 = vmatprep.subr.mxu0 0.0
      %1235 = vmatpush1.msra.mxu0 0.0
      %1236 = vmatprep.subr.mxu0 0.0
      %1237 = vmatpush1.msra.mxu0 0.0
      %1238 = vmatprep.subr.mxu0 0.0
      %1239 = vmatpush1.msra.mxu0 0.0
      %1240 = vmatprep.subr.mxu0 0.0
      %1241 = vmatpush1.msra.mxu0 0.0
      %1242 = vmatprep.subr.mxu0 0.0
      %1243 = vmatpush1.msra.mxu0 0.0
      %1244 = vmatprep.subr.mxu0 0.0
      %1245 = vmatpush1.msra.mxu0 0.0
      %1246 = vmatprep.subr.mxu0 0.0
      %1247 = vmatpush1.msra.mxu0 0.0
      %1248 = vmatprep.subr.mxu0 0.0
      %1249 = vmatpush1.msra.mxu0 0.0
      %1250 = vmatprep.subr.mxu0 0.0
      %1251 = vmatpush1.msra.mxu0 0.0
      %1252 = vmatprep.subr.mxu0 0.0
      %1253 = vmatpush1.msra.mxu0 0.0
      %1254 = vmatprep.subr.mxu0 0.0
      %1255 = vmatpush1.msra.mxu0 0.0
      %1256 = vmatprep.subr.mxu0 0.0
      %1257 = vmatpush1.msra.mxu0 0.0
      %1258 = vmatprep.subr.mxu0 0.0
      %1259 = vmatpush1.msra.mxu0 0.0
      %1260 = vmatprep.subr.mxu0 0.0
      %1261 = vmatpush1.msra.mxu0 0.0
      %1262 = vmatprep.subr.mxu0 0.0
      %1263 = vmatpush1.msra.mxu0 0.0
      %1264 = vmatprep.subr.mxu0 0.0
      %1265 = vmatpush1.msra.mxu0 0.0
      %1266 = vmatprep.subr.mxu0 0.0
      %1267 = vmatpush1.msra.mxu0 0.0
      %1268 = vmatprep.subr.mxu0 0.0
      %1269 = vmatpush1.msra.mxu0 0.0
      %1270 = vmatprep.mubr.f32.mxu0 0.0
      %1271 = vmatmul.mubr.f32.gmra.mrb[0].mxu0 %v942
      %v1272 = vpop.f32.mrb[0].mxu0
      %v1273 = vadd.f32 0.0, %v1272
      %v1274 = vpop.f32.mrb[0].mxu0
      %1275 = vmatprep.mubr.f32.mxu0 0.0
      %1276 = vmatmul.mubr.f32.gmra.mrb[0].mxu0 %v945
      %v1277 = vpop.f32.mrb[0].mxu0
      %v1278 = vadd.f32 0.0, %v1277
      %v1279 = vpop.f32.mrb[0].mxu0
      %1280 = vdwg.mxu0
      %v1281 = vadd.f32 %v939, %v1273
      %v1282 = vadd.f32 %v940, %v1278
      %v1284 = vsel %vm217, %v1191, 0
      %v1287 = vsel %vm217, %v1192, 0
      %1289 = vmatprep.subr.mxu0 0.0
      %1290 = vmatpush1.msra.mxu0 %v1194
      %1291 = vmatprep.subr.mxu0 0.0
      %1292 = vmatpush1.msra.mxu0 %v1195
      %1293 = vmatprep.subr.mxu0 0.0
      %1294 = vmatpush1.msra.mxu0 %v1196
      %1295 = vmatprep.subr.mxu0 0.0
      %1296 = vmatpush1.msra.mxu0 %v1197
      %1297 = vmatprep.subr.mxu0 0.0
      %1298 = vmatpush1.msra.mxu0 %v1198
      %1299 = vmatprep.subr.mxu0 0.0
      %1300 = vmatpush1.msra.mxu0 %v1199
      %1301 = vmatprep.subr.mxu0 0.0
      %1302 = vmatpush1.msra.mxu0 %v1200
      %1303 = vmatprep.subr.mxu0 0.0
      %1304 = vmatpush1.msra.mxu0 %v1201
      %1305 = vmatprep.subr.mxu0 0.0
      %1306 = vmatpush1.msra.mxu0 %v1202
      %1307 = vmatprep.subr.mxu0 0.0
      %1308 = vmatpush1.msra.mxu0 %v1203
      %1309 = vmatprep.subr.mxu0 0.0
      %1310 = vmatpush1.msra.mxu0 %v1204
      %1311 = vmatprep.subr.mxu0 0.0
      %1312 = vmatpush1.msra.mxu0 %v1205
      %1313 = vmatprep.subr.mxu0 0.0
      %1314 = vmatpush1.msra.mxu0 0.0
      %1315 = vmatprep.subr.mxu0 0.0
      %1316 = vmatpush1.msra.mxu0 0.0
      %1317 = vmatprep.subr.mxu0 0.0
      %1318 = vmatpush1.msra.mxu0 0.0
      %1319 = vmatprep.subr.mxu0 0.0
      %1320 = vmatpush1.msra.mxu0 0.0
      %1321 = vmatprep.subr.mxu0 0.0
      %1322 = vmatpush1.msra.mxu0 0.0
      %1323 = vmatprep.subr.mxu0 0.0
      %1324 = vmatpush1.msra.mxu0 0.0
      %1325 = vmatprep.subr.mxu0 0.0
      %1326 = vmatpush1.msra.mxu0 0.0
      %1327 = vmatprep.subr.mxu0 0.0
      %1328 = vmatpush1.msra.mxu0 0.0
      %1329 = vmatprep.subr.mxu0 0.0
      %1330 = vmatpush1.msra.mxu0 0.0
      %1331 = vmatprep.subr.mxu0 0.0
      %1332 = vmatpush1.msra.mxu0 0.0
      %1333 = vmatprep.subr.mxu0 0.0
      %1334 = vmatpush1.msra.mxu0 0.0
      %1335 = vmatprep.subr.mxu0 0.0
      %1336 = vmatpush1.msra.mxu0 0.0
      %1337 = vmatprep.subr.mxu0 0.0
      %1338 = vmatpush1.msra.mxu0 0.0
      %1339 = vmatprep.subr.mxu0 0.0
      %1340 = vmatpush1.msra.mxu0 0.0
      %1341 = vmatprep.subr.mxu0 0.0
      %1342 = vmatpush1.msra.mxu0 0.0
      %1343 = vmatprep.subr.mxu0 0.0
      %1344 = vmatpush1.msra.mxu0 0.0
      %1345 = vmatprep.subr.mxu0 0.0
      %1346 = vmatpush1.msra.mxu0 0.0
      %1347 = vmatprep.subr.mxu0 0.0
      %1348 = vmatpush1.msra.mxu0 0.0
      %1349 = vmatprep.subr.mxu0 0.0
      %1350 = vmatpush1.msra.mxu0 0.0
      %1351 = vmatprep.subr.mxu0 0.0
      %1352 = vmatpush1.msra.mxu0 0.0
      %1353 = vmatprep.mubr.f32.mxu0 0.0
      %1354 = vmatmul.mubr.f32.gmra.mrb[0].mxu0 %v1284
      %v1355 = vpop.f32.mrb[0].mxu0
      %v1356 = vadd.f32 0.0, %v1355
      %v1357 = vpop.f32.mrb[0].mxu0
      %1358 = vmatprep.mubr.f32.mxu0 0.0
      %1359 = vmatmul.mubr.f32.gmra.mrb[0].mxu0 %v1287
      %v1360 = vpop.f32.mrb[0].mxu0
      %v1361 = vadd.f32 0.0, %v1360
      %v1362 = vpop.f32.mrb[0].mxu0
      %1363 = vdwg.mxu0
      %v1364 = vadd.f32 %v1022, %v1356
      %v1365 = vadd.f32 %v1023, %v1361
      %s1366 = scalar_lea.vmem %s1, 672
      %v1367 = vld [vmem:[%s1366] sm:$0xff]
      %v1368 = vld [vmem:[%s1366 + $0x8] sm:$0xff]
      %v1369 = vld [vmem:[%s1366 + $0x10] sm:$0xff]
      %v1370 = vld [vmem:[%s1366 + $0x18] sm:$0xff]
      %v1371 = vld [vmem:[%s1366 + $0x20] sm:$0xff]
      %v1372 = vld [vmem:[%s1366 + $0x28] sm:$0xff]
      %v1373 = vld [vmem:[%s1366 + $0x30] sm:$0xff]
      %v1374 = vld [vmem:[%s1366 + $0x38] sm:$0xff]
      %v1375 = vld [vmem:[%s1366 + $0x40] sm:$0xff]
      %v1376 = vld [vmem:[%s1366 + $0x48] sm:$0xff]
      %v1377 = vld [vmem:[%s1366 + $0x50] sm:$0xff]
      %v1378 = vld [vmem:[%s1366 + $0x58] sm:$0xff]
      %1379 = vmatprep.subr.mxu0 0.0
      %1380 = vmatpush1.msra.mxu0 %v1367
      %1381 = vmatprep.subr.mxu0 0.0
      %1382 = vmatpush1.msra.mxu0 %v1368
      %1383 = vmatprep.subr.mxu0 0.0
      %1384 = vmatpush1.msra.mxu0 %v1369
      %1385 = vmatprep.subr.mxu0 0.0
      %1386 = vmatpush1.msra.mxu0 %v1370
      %1387 = vmatprep.subr.mxu0 0.0
      %1388 = vmatpush1.msra.mxu0 %v1371
      %1389 = vmatprep.subr.mxu0 0.0
      %1390 = vmatpush1.msra.mxu0 %v1372
      %1391 = vmatprep.subr.mxu0 0.0
      %1392 = vmatpush1.msra.mxu0 %v1373
      %1393 = vmatprep.subr.mxu0 0.0
      %1394 = vmatpush1.msra.mxu0 %v1374
      %1395 = vmatprep.subr.mxu0 0.0
      %1396 = vmatpush1.msra.mxu0 %v1375
      %1397 = vmatprep.subr.mxu0 0.0
      %1398 = vmatpush1.msra.mxu0 %v1376
      %1399 = vmatprep.subr.mxu0 0.0
      %1400 = vmatpush1.msra.mxu0 %v1377
      %1401 = vmatprep.subr.mxu0 0.0
      %1402 = vmatpush1.msra.mxu0 %v1378
      %1403 = vmatprep.subr.mxu0 0.0
      %1404 = vmatpush1.msra.mxu0 0.0
      %1405 = vmatprep.subr.mxu0 0.0
      %1406 = vmatpush1.msra.mxu0 0.0
      %1407 = vmatprep.subr.mxu0 0.0
      %1408 = vmatpush1.msra.mxu0 0.0
      %1409 = vmatprep.subr.mxu0 0.0
      %1410 = vmatpush1.msra.mxu0 0.0
      %1411 = vmatprep.subr.mxu0 0.0
      %1412 = vmatpush1.msra.mxu0 0.0
      %1413 = vmatprep.subr.mxu0 0.0
      %1414 = vmatpush1.msra.mxu0 0.0
      %1415 = vmatprep.subr.mxu0 0.0
      %1416 = vmatpush1.msra.mxu0 0.0
      %1417 = vmatprep.subr.mxu0 0.0
      %1418 = vmatpush1.msra.mxu0 0.0
      %1419 = vmatprep.subr.mxu0 0.0
      %1420 = vmatpush1.msra.mxu0 0.0
      %1421 = vmatprep.subr.mxu0 0.0
      %1422 = vmatpush1.msra.mxu0 0.0
      %1423 = vmatprep.subr.mxu0 0.0
      %1424 = vmatpush1.msra.mxu0 0.0
      %1425 = vmatprep.subr.mxu0 0.0
      %1426 = vmatpush1.msra.mxu0 0.0
      %1427 = vmatprep.subr.mxu0 0.0
      %1428 = vmatpush1.msra.mxu0 0.0
      %1429 = vmatprep.subr.mxu0 0.0
      %1430 = vmatpush1.msra.mxu0 0.0
      %1431 = vmatprep.subr.mxu0 0.0
      %1432 = vmatpush1.msra.mxu0 0.0
      %1433 = vmatprep.subr.mxu0 0.0
      %1434 = vmatpush1.msra.mxu0 0.0
      %1435 = vmatprep.subr.mxu0 0.0
      %1436 = vmatpush1.msra.mxu0 0.0
      %1437 = vmatprep.subr.mxu0 0.0
      %1438 = vmatpush1.msra.mxu0 0.0
      %1439 = vmatprep.subr.mxu0 0.0
      %1440 = vmatpush1.msra.mxu0 0.0
      %1441 = vmatprep.subr.mxu0 0.0
      %1442 = vmatpush1.msra.mxu0 0.0
      %1443 = vmatprep.mubr.f32.mxu0 0.0
      %1444 = vmatmul.mubr.f32.gmra.mrb[0].mxu0 %v942
      %v1445 = vpop.f32.mrb[0].mxu0
      %v1446 = vadd.f32 0.0, %v1445
      %v1447 = vpop.f32.mrb[0].mxu0
      %1448 = vmatprep.mubr.f32.mxu0 0.0
      %1449 = vmatmul.mubr.f32.gmra.mrb[0].mxu0 %v945
      %v1450 = vpop.f32.mrb[0].mxu0
      %v1451 = vadd.f32 0.0, %v1450
      %v1452 = vpop.f32.mrb[0].mxu0
      %1453 = vdwg.mxu0
      %v1454 = vadd.f32 %v1112, %v1446
      %v1455 = vadd.f32 %v1113, %v1451
      %1456 = vmatprep.subr.mxu0 0.0
      %1457 = vmatpush1.msra.mxu0 %v1367
      %1458 = vmatprep.subr.mxu0 0.0
      %1459 = vmatpush1.msra.mxu0 %v1368
      %1460 = vmatprep.subr.mxu0 0.0
      %1461 = vmatpush1.msra.mxu0 %v1369
      %1462 = vmatprep.subr.mxu0 0.0
      %1463 = vmatpush1.msra.mxu0 %v1370
      %1464 = vmatprep.subr.mxu0 0.0
      %1465 = vmatpush1.msra.mxu0 %v1371
      %1466 = vmatprep.subr.mxu0 0.0
      %1467 = vmatpush1.msra.mxu0 %v1372
      %1468 = vmatprep.subr.mxu0 0.0
      %1469 = vmatpush1.msra.mxu0 %v1373
      %1470 = vmatprep.subr.mxu0 0.0
      %1471 = vmatpush1.msra.mxu0 %v1374
      %1472 = vmatprep.subr.mxu0 0.0
      %1473 = vmatpush1.msra.mxu0 %v1375
      %1474 = vmatprep.subr.mxu0 0.0
      %1475 = vmatpush1.msra.mxu0 %v1376
      %1476 = vmatprep.subr.mxu0 0.0
      %1477 = vmatpush1.msra.mxu0 %v1377
      %1478 = vmatprep.subr.mxu0 0.0
      %1479 = vmatpush1.msra.mxu0 %v1378
      %1480 = vmatprep.subr.mxu0 0.0
      %1481 = vmatpush1.msra.mxu0 0.0
      %1482 = vmatprep.subr.mxu0 0.0
      %1483 = vmatpush1.msra.mxu0 0.0
      %1484 = vmatprep.subr.mxu0 0.0
      %1485 = vmatpush1.msra.mxu0 0.0
      %1486 = vmatprep.subr.mxu0 0.0
      %1487 = vmatpush1.msra.mxu0 0.0
      %1488 = vmatprep.subr.mxu0 0.0
      %1489 = vmatpush1.msra.mxu0 0.0
      %1490 = vmatprep.subr.mxu0 0.0
      %1491 = vmatpush1.msra.mxu0 0.0
      %1492 = vmatprep.subr.mxu0 0.0
      %1493 = vmatpush1.msra.mxu0 0.0
      %1494 = vmatprep.subr.mxu0 0.0
      %1495 = vmatpush1.msra.mxu0 0.0
      %1496 = vmatprep.subr.mxu0 0.0
      %1497 = vmatpush1.msra.mxu0 0.0
      %1498 = vmatprep.subr.mxu0 0.0
      %1499 = vmatpush1.msra.mxu0 0.0
      %1500 = vmatprep.subr.mxu0 0.0
      %1501 = vmatpush1.msra.mxu0 0.0
      %1502 = vmatprep.subr.mxu0 0.0
      %1503 = vmatpush1.msra.mxu0 0.0
      %1504 = vmatprep.subr.mxu0 0.0
      %1505 = vmatpush1.msra.mxu0 0.0
      %1506 = vmatprep.subr.mxu0 0.0
      %1507 = vmatpush1.msra.mxu0 0.0
      %1508 = vmatprep.subr.mxu0 0.0
      %1509 = vmatpush1.msra.mxu0 0.0
      %1510 = vmatprep.subr.mxu0 0.0
      %1511 = vmatpush1.msra.mxu0 0.0
      %1512 = vmatprep.subr.mxu0 0.0
      %1513 = vmatpush1.msra.mxu0 0.0
      %1514 = vmatprep.subr.mxu0 0.0
      %1515 = vmatpush1.msra.mxu0 0.0
      %1516 = vmatprep.subr.mxu0 0.0
      %1517 = vmatpush1.msra.mxu0 0.0
      %1518 = vmatprep.subr.mxu0 0.0
      %1519 = vmatpush1.msra.mxu0 0.0
      %1520 = vmatprep.mubr.f32.mxu0 0.0
      %1521 = vmatmul.mubr.f32.gmra.mrb[0].mxu0 %v1284
      %v1522 = vpop.f32.mrb[0].mxu0
      %v1523 = vadd.f32 0.0, %v1522
      %v1524 = vpop.f32.mrb[0].mxu0
      %1525 = vmatprep.mubr.f32.mxu0 0.0
      %1526 = vmatmul.mubr.f32.gmra.mrb[0].mxu0 %v1287
      %v1527 = vpop.f32.mrb[0].mxu0
      %v1528 = vadd.f32 0.0, %v1527
      %v1529 = vpop.f32.mrb[0].mxu0
      %1530 = vdwg.mxu0
      %v1531 = vadd.f32 %v1189, %v1523
      %v1532 = vadd.f32 %v1190, %v1528
      %v1533 = vld [vmem:[%s174 + $0x2] sm:$0xff]
      %v1534 = vld [vmem:[%s174 + $0xa] sm:$0x3f]
      %s1535 = scalar_lea.vmem %s1, 768
      %v1536 = vld [vmem:[%s1535] sm:$0xff]
      %v1537 = vld [vmem:[%s1535 + $0x8] sm:$0xff]
      %v1538 = vld [vmem:[%s1535 + $0x10] sm:$0xff]
      %v1539 = vld [vmem:[%s1535 + $0x18] sm:$0xff]
      %v1540 = vld [vmem:[%s1535 + $0x20] sm:$0xff]
      %v1541 = vld [vmem:[%s1535 + $0x28] sm:$0xff]
      %v1542 = vld [vmem:[%s1535 + $0x30] sm:$0xff]
      %v1543 = vld [vmem:[%s1535 + $0x38] sm:$0xff]
      %v1544 = vld [vmem:[%s1535 + $0x40] sm:$0xff]
      %v1545 = vld [vmem:[%s1535 + $0x48] sm:$0xff]
      %v1546 = vld [vmem:[%s1535 + $0x50] sm:$0xff]
      %v1547 = vld [vmem:[%s1535 + $0x58] sm:$0xff]
      %1548 = vmatprep.subr.mxu0 0.0
      %1549 = vmatpush1.msra.mxu0 %v1536
      %1550 = vmatprep.subr.mxu0 0.0
      %1551 = vmatpush1.msra.mxu0 %v1537
      %1552 = vmatprep.subr.mxu0 0.0
      %1553 = vmatpush1.msra.mxu0 %v1538
      %1554 = vmatprep.subr.mxu0 0.0
      %1555 = vmatpush1.msra.mxu0 %v1539
      %1556 = vmatprep.subr.mxu0 0.0
      %1557 = vmatpush1.msra.mxu0 %v1540
      %1558 = vmatprep.subr.mxu0 0.0
      %1559 = vmatpush1.msra.mxu0 %v1541
      %1560 = vmatprep.subr.mxu0 0.0
      %1561 = vmatpush1.msra.mxu0 %v1542
      %1562 = vmatprep.subr.mxu0 0.0
      %1563 = vmatpush1.msra.mxu0 %v1543
      %1564 = vmatprep.subr.mxu0 0.0
      %1565 = vmatpush1.msra.mxu0 %v1544
      %1566 = vmatprep.subr.mxu0 0.0
      %1567 = vmatpush1.msra.mxu0 %v1545
      %1568 = vmatprep.subr.mxu0 0.0
      %1569 = vmatpush1.msra.mxu0 %v1546
      %1570 = vmatprep.subr.mxu0 0.0
      %1571 = vmatpush1.msra.mxu0 %v1547
      %1572 = vmatprep.subr.mxu0 0.0
      %1573 = vmatpush1.msra.mxu0 0.0
      %1574 = vmatprep.subr.mxu0 0.0
      %1575 = vmatpush1.msra.mxu0 0.0
      %1576 = vmatprep.subr.mxu0 0.0
      %1577 = vmatpush1.msra.mxu0 0.0
      %1578 = vmatprep.subr.mxu0 0.0
      %1579 = vmatpush1.msra.mxu0 0.0
      %1580 = vmatprep.subr.mxu0 0.0
      %1581 = vmatpush1.msra.mxu0 0.0
      %1582 = vmatprep.subr.mxu0 0.0
      %1583 = vmatpush1.msra.mxu0 0.0
      %1584 = vmatprep.subr.mxu0 0.0
      %1585 = vmatpush1.msra.mxu0 0.0
      %1586 = vmatprep.subr.mxu0 0.0
      %1587 = vmatpush1.msra.mxu0 0.0
      %1588 = vmatprep.subr.mxu0 0.0
      %1589 = vmatpush1.msra.mxu0 0.0
      %1590 = vmatprep.subr.mxu0 0.0
      %1591 = vmatpush1.msra.mxu0 0.0
      %1592 = vmatprep.subr.mxu0 0.0
      %1593 = vmatpush1.msra.mxu0 0.0
      %1594 = vmatprep.subr.mxu0 0.0
      %1595 = vmatpush1.msra.mxu0 0.0
      %1596 = vmatprep.subr.mxu0 0.0
      %1597 = vmatpush1.msra.mxu0 0.0
      %1598 = vmatprep.subr.mxu0 0.0
      %1599 = vmatpush1.msra.mxu0 0.0
      %1600 = vmatprep.subr.mxu0 0.0
      %1601 = vmatpush1.msra.mxu0 0.0
      %1602 = vmatprep.subr.mxu0 0.0
      %1603 = vmatpush1.msra.mxu0 0.0
      %1604 = vmatprep.subr.mxu0 0.0
      %1605 = vmatpush1.msra.mxu0 0.0
      %1606 = vmatprep.subr.mxu0 0.0
      %1607 = vmatpush1.msra.mxu0 0.0
      %1608 = vmatprep.subr.mxu0 0.0
      %1609 = vmatpush1.msra.mxu0 0.0
      %1610 = vmatprep.subr.mxu0 0.0
      %1611 = vmatpush1.msra.mxu0 0.0
      %1612 = vmatprep.mubr.f32.mxu0 0.0
      %1613 = vmatmul.mubr.f32.gmra.mrb[0].mxu0 %v1284
      %v1614 = vpop.f32.mrb[0].mxu0
      %v1615 = vadd.f32 0.0, %v1614
      %v1616 = vpop.f32.mrb[0].mxu0
      %1617 = vmatprep.mubr.f32.mxu0 0.0
      %1618 = vmatmul.mubr.f32.gmra.mrb[0].mxu0 %v1287
      %v1619 = vpop.f32.mrb[0].mxu0
      %v1620 = vadd.f32 0.0, %v1619
      %v1621 = vpop.f32.mrb[0].mxu0
      %1622 = vdwg.mxu0
      %v1623 = vadd.f32 %v1281, %v1615
      %v1624 = vadd.f32 %v1282, %v1620
      %v1626 = vsel %vm217, %v1533, 0
      %v1629 = vsel %vm217, %v1534, 0
      %1631 = vmatprep.subr.mxu0 0.0
      %1632 = vmatpush1.msra.mxu0 %v1536
      %1633 = vmatprep.subr.mxu0 0.0
      %1634 = vmatpush1.msra.mxu0 %v1537
      %1635 = vmatprep.subr.mxu0 0.0
      %1636 = vmatpush1.msra.mxu0 %v1538
      %1637 = vmatprep.subr.mxu0 0.0
      %1638 = vmatpush1.msra.mxu0 %v1539
      %1639 = vmatprep.subr.mxu0 0.0
      %1640 = vmatpush1.msra.mxu0 %v1540
      %1641 = vmatprep.subr.mxu0 0.0
      %1642 = vmatpush1.msra.mxu0 %v1541
      %1643 = vmatprep.subr.mxu0 0.0
      %1644 = vmatpush1.msra.mxu0 %v1542
      %1645 = vmatprep.subr.mxu0 0.0
      %1646 = vmatpush1.msra.mxu0 %v1543
      %1647 = vmatprep.subr.mxu0 0.0
      %1648 = vmatpush1.msra.mxu0 %v1544
      %1649 = vmatprep.subr.mxu0 0.0
      %1650 = vmatpush1.msra.mxu0 %v1545
      %1651 = vmatprep.subr.mxu0 0.0
      %1652 = vmatpush1.msra.mxu0 %v1546
      %1653 = vmatprep.subr.mxu0 0.0
      %1654 = vmatpush1.msra.mxu0 %v1547
      %1655 = vmatprep.subr.mxu0 0.0
      %1656 = vmatpush1.msra.mxu0 0.0
      %1657 = vmatprep.subr.mxu0 0.0
      %1658 = vmatpush1.msra.mxu0 0.0
      %1659 = vmatprep.subr.mxu0 0.0
      %1660 = vmatpush1.msra.mxu0 0.0
      %1661 = vmatprep.subr.mxu0 0.0
      %1662 = vmatpush1.msra.mxu0 0.0
      %1663 = vmatprep.subr.mxu0 0.0
      %1664 = vmatpush1.msra.mxu0 0.0
      %1665 = vmatprep.subr.mxu0 0.0
      %1666 = vmatpush1.msra.mxu0 0.0
      %1667 = vmatprep.subr.mxu0 0.0
      %1668 = vmatpush1.msra.mxu0 0.0
      %1669 = vmatprep.subr.mxu0 0.0
      %1670 = vmatpush1.msra.mxu0 0.0
      %1671 = vmatprep.subr.mxu0 0.0
      %1672 = vmatpush1.msra.mxu0 0.0
      %1673 = vmatprep.subr.mxu0 0.0
      %1674 = vmatpush1.msra.mxu0 0.0
      %1675 = vmatprep.subr.mxu0 0.0
      %1676 = vmatpush1.msra.mxu0 0.0
      %1677 = vmatprep.subr.mxu0 0.0
      %1678 = vmatpush1.msra.mxu0 0.0
      %1679 = vmatprep.subr.mxu0 0.0
      %1680 = vmatpush1.msra.mxu0 0.0
      %1681 = vmatprep.subr.mxu0 0.0
      %1682 = vmatpush1.msra.mxu0 0.0
      %1683 = vmatprep.subr.mxu0 0.0
      %1684 = vmatpush1.msra.mxu0 0.0
      %1685 = vmatprep.subr.mxu0 0.0
      %1686 = vmatpush1.msra.mxu0 0.0
      %1687 = vmatprep.subr.mxu0 0.0
      %1688 = vmatpush1.msra.mxu0 0.0
      %1689 = vmatprep.subr.mxu0 0.0
      %1690 = vmatpush1.msra.mxu0 0.0
      %1691 = vmatprep.subr.mxu0 0.0
      %1692 = vmatpush1.msra.mxu0 0.0
      %1693 = vmatprep.subr.mxu0 0.0
      %1694 = vmatpush1.msra.mxu0 0.0
      %1695 = vmatprep.mubr.f32.mxu0 0.0
      %1696 = vmatmul.mubr.f32.gmra.mrb[0].mxu0 %v1626
      %v1697 = vpop.f32.mrb[0].mxu0
      %v1698 = vadd.f32 0.0, %v1697
      %v1699 = vpop.f32.mrb[0].mxu0
      %1700 = vmatprep.mubr.f32.mxu0 0.0
      %1701 = vmatmul.mubr.f32.gmra.mrb[0].mxu0 %v1629
      %v1702 = vpop.f32.mrb[0].mxu0
      %v1703 = vadd.f32 0.0, %v1702
      %v1704 = vpop.f32.mrb[0].mxu0
      %1705 = vdwg.mxu0
      %v1706 = vadd.f32 %v1364, %v1698
      %v1707 = vadd.f32 %v1365, %v1703
      %s1708 = scalar_lea.vmem %s1, 864
      %v1709 = vld [vmem:[%s1708] sm:$0xff]
      %v1710 = vld [vmem:[%s1708 + $0x8] sm:$0xff]
      %v1711 = vld [vmem:[%s1708 + $0x10] sm:$0xff]
      %v1712 = vld [vmem:[%s1708 + $0x18] sm:$0xff]
      %v1713 = vld [vmem:[%s1708 + $0x20] sm:$0xff]
      %v1714 = vld [vmem:[%s1708 + $0x28] sm:$0xff]
      %v1715 = vld [vmem:[%s1708 + $0x30] sm:$0xff]
      %v1716 = vld [vmem:[%s1708 + $0x38] sm:$0xff]
      %v1717 = vld [vmem:[%s1708 + $0x40] sm:$0xff]
      %v1718 = vld [vmem:[%s1708 + $0x48] sm:$0xff]
      %v1719 = vld [vmem:[%s1708 + $0x50] sm:$0xff]
      %v1720 = vld [vmem:[%s1708 + $0x58] sm:$0xff]
      %1721 = vmatprep.subr.mxu0 0.0
      %1722 = vmatpush1.msra.mxu0 %v1709
      %1723 = vmatprep.subr.mxu0 0.0
      %1724 = vmatpush1.msra.mxu0 %v1710
      %1725 = vmatprep.subr.mxu0 0.0
      %1726 = vmatpush1.msra.mxu0 %v1711
      %1727 = vmatprep.subr.mxu0 0.0
      %1728 = vmatpush1.msra.mxu0 %v1712
      %1729 = vmatprep.subr.mxu0 0.0
      %1730 = vmatpush1.msra.mxu0 %v1713
      %1731 = vmatprep.subr.mxu0 0.0
      %1732 = vmatpush1.msra.mxu0 %v1714
      %1733 = vmatprep.subr.mxu0 0.0
      %1734 = vmatpush1.msra.mxu0 %v1715
      %1735 = vmatprep.subr.mxu0 0.0
      %1736 = vmatpush1.msra.mxu0 %v1716
      %1737 = vmatprep.subr.mxu0 0.0
      %1738 = vmatpush1.msra.mxu0 %v1717
      %1739 = vmatprep.subr.mxu0 0.0
      %1740 = vmatpush1.msra.mxu0 %v1718
      %1741 = vmatprep.subr.mxu0 0.0
      %1742 = vmatpush1.msra.mxu0 %v1719
      %1743 = vmatprep.subr.mxu0 0.0
      %1744 = vmatpush1.msra.mxu0 %v1720
      %1745 = vmatprep.subr.mxu0 0.0
      %1746 = vmatpush1.msra.mxu0 0.0
      %1747 = vmatprep.subr.mxu0 0.0
      %1748 = vmatpush1.msra.mxu0 0.0
      %1749 = vmatprep.subr.mxu0 0.0
      %1750 = vmatpush1.msra.mxu0 0.0
      %1751 = vmatprep.subr.mxu0 0.0
      %1752 = vmatpush1.msra.mxu0 0.0
      %1753 = vmatprep.subr.mxu0 0.0
      %1754 = vmatpush1.msra.mxu0 0.0
      %1755 = vmatprep.subr.mxu0 0.0
      %1756 = vmatpush1.msra.mxu0 0.0
      %1757 = vmatprep.subr.mxu0 0.0
      %1758 = vmatpush1.msra.mxu0 0.0
      %1759 = vmatprep.subr.mxu0 0.0
      %1760 = vmatpush1.msra.mxu0 0.0
      %1761 = vmatprep.subr.mxu0 0.0
      %1762 = vmatpush1.msra.mxu0 0.0
      %1763 = vmatprep.subr.mxu0 0.0
      %1764 = vmatpush1.msra.mxu0 0.0
      %1765 = vmatprep.subr.mxu0 0.0
      %1766 = vmatpush1.msra.mxu0 0.0
      %1767 = vmatprep.subr.mxu0 0.0
      %1768 = vmatpush1.msra.mxu0 0.0
      %1769 = vmatprep.subr.mxu0 0.0
      %1770 = vmatpush1.msra.mxu0 0.0
      %1771 = vmatprep.subr.mxu0 0.0
      %1772 = vmatpush1.msra.mxu0 0.0
      %1773 = vmatprep.subr.mxu0 0.0
      %1774 = vmatpush1.msra.mxu0 0.0
      %1775 = vmatprep.subr.mxu0 0.0
      %1776 = vmatpush1.msra.mxu0 0.0
      %1777 = vmatprep.subr.mxu0 0.0
      %1778 = vmatpush1.msra.mxu0 0.0
      %1779 = vmatprep.subr.mxu0 0.0
      %1780 = vmatpush1.msra.mxu0 0.0
      %1781 = vmatprep.subr.mxu0 0.0
      %1782 = vmatpush1.msra.mxu0 0.0
      %1783 = vmatprep.subr.mxu0 0.0
      %1784 = vmatpush1.msra.mxu0 0.0
      %1785 = vmatprep.mubr.f32.mxu0 0.0
      %1786 = vmatmul.mubr.f32.gmra.mrb[0].mxu0 %v1284
      %v1787 = vpop.f32.mrb[0].mxu0
      %v1788 = vadd.f32 0.0, %v1787
      %v1789 = vpop.f32.mrb[0].mxu0
      %1790 = vmatprep.mubr.f32.mxu0 0.0
      %1791 = vmatmul.mubr.f32.gmra.mrb[0].mxu0 %v1287
      %v1792 = vpop.f32.mrb[0].mxu0
      %v1793 = vadd.f32 0.0, %v1792
      %v1794 = vpop.f32.mrb[0].mxu0
      %1795 = vdwg.mxu0
      %v1796 = vadd.f32 %v1454, %v1788
      %v1797 = vadd.f32 %v1455, %v1793
      %1798 = vmatprep.subr.mxu0 0.0
      %1799 = vmatpush1.msra.mxu0 %v1709
      %1800 = vmatprep.subr.mxu0 0.0
      %1801 = vmatpush1.msra.mxu0 %v1710
      %1802 = vmatprep.subr.mxu0 0.0
      %1803 = vmatpush1.msra.mxu0 %v1711
      %1804 = vmatprep.subr.mxu0 0.0
      %1805 = vmatpush1.msra.mxu0 %v1712
      %1806 = vmatprep.subr.mxu0 0.0
      %1807 = vmatpush1.msra.mxu0 %v1713
      %1808 = vmatprep.subr.mxu0 0.0
      %1809 = vmatpush1.msra.mxu0 %v1714
      %1810 = vmatprep.subr.mxu0 0.0
      %1811 = vmatpush1.msra.mxu0 %v1715
      %1812 = vmatprep.subr.mxu0 0.0
      %1813 = vmatpush1.msra.mxu0 %v1716
      %1814 = vmatprep.subr.mxu0 0.0
      %1815 = vmatpush1.msra.mxu0 %v1717
      %1816 = vmatprep.subr.mxu0 0.0
      %1817 = vmatpush1.msra.mxu0 %v1718
      %1818 = vmatprep.subr.mxu0 0.0
      %1819 = vmatpush1.msra.mxu0 %v1719
      %1820 = vmatprep.subr.mxu0 0.0
      %1821 = vmatpush1.msra.mxu0 %v1720
      %1822 = vmatprep.subr.mxu0 0.0
      %1823 = vmatpush1.msra.mxu0 0.0
      %1824 = vmatprep.subr.mxu0 0.0
      %1825 = vmatpush1.msra.mxu0 0.0
      %1826 = vmatprep.subr.mxu0 0.0
      %1827 = vmatpush1.msra.mxu0 0.0
      %1828 = vmatprep.subr.mxu0 0.0
      %1829 = vmatpush1.msra.mxu0 0.0
      %1830 = vmatprep.subr.mxu0 0.0
      %1831 = vmatpush1.msra.mxu0 0.0
      %1832 = vmatprep.subr.mxu0 0.0
      %1833 = vmatpush1.msra.mxu0 0.0
      %1834 = vmatprep.subr.mxu0 0.0
      %1835 = vmatpush1.msra.mxu0 0.0
      %1836 = vmatprep.subr.mxu0 0.0
      %1837 = vmatpush1.msra.mxu0 0.0
      %1838 = vmatprep.subr.mxu0 0.0
      %1839 = vmatpush1.msra.mxu0 0.0
      %1840 = vmatprep.subr.mxu0 0.0
      %1841 = vmatpush1.msra.mxu0 0.0
      %1842 = vmatprep.subr.mxu0 0.0
      %1843 = vmatpush1.msra.mxu0 0.0
      %1844 = vmatprep.subr.mxu0 0.0
      %1845 = vmatpush1.msra.mxu0 0.0
      %1846 = vmatprep.subr.mxu0 0.0
      %1847 = vmatpush1.msra.mxu0 0.0
      %1848 = vmatprep.subr.mxu0 0.0
      %1849 = vmatpush1.msra.mxu0 0.0
      %1850 = vmatprep.subr.mxu0 0.0
      %1851 = vmatpush1.msra.mxu0 0.0
      %1852 = vmatprep.subr.mxu0 0.0
      %1853 = vmatpush1.msra.mxu0 0.0
      %1854 = vmatprep.subr.mxu0 0.0
      %1855 = vmatpush1.msra.mxu0 0.0
      %1856 = vmatprep.subr.mxu0 0.0
      %1857 = vmatpush1.msra.mxu0 0.0
      %1858 = vmatprep.subr.mxu0 0.0
      %1859 = vmatpush1.msra.mxu0 0.0
      %1860 = vmatprep.subr.mxu0 0.0
      %1861 = vmatpush1.msra.mxu0 0.0
      %1862 = vmatprep.mubr.f32.mxu0 0.0
      %1863 = vmatmul.mubr.f32.gmra.mrb[0].mxu0 %v1626
      %v1864 = vpop.f32.mrb[0].mxu0
      %v1865 = vadd.f32 0.0, %v1864
      %v1866 = vpop.f32.mrb[0].mxu0
      %1867 = vmatprep.mubr.f32.mxu0 0.0
      %1868 = vmatmul.mubr.f32.gmra.mrb[0].mxu0 %v1629
      %v1869 = vpop.f32.mrb[0].mxu0
      %v1870 = vadd.f32 0.0, %v1869
      %v1871 = vpop.f32.mrb[0].mxu0
      %1872 = vdwg.mxu0
      %v1873 = vadd.f32 %v1531, %v1865
      %v1874 = vadd.f32 %v1532, %v1870
      %v1876 = vlaneseq
      %v1877 = vshrl.u32 %v1876, 7
      %v1878 = vsub.s32 0, %v1877
      %v1879 = vrot.slane %v171, %v1878
      %v1881 = vadd.f32 %v1623, %v1879
      %v1882 = vadd.f32 %v1624, %v1879
      %v1883 = vmax.f32 %v1881, 0.0
      %v1884 = vmax.f32 %v1882, 0.0
      %v1885 = vadd.f32 %v1796, %v1879
      %v1886 = vadd.f32 %v1797, %v1879
      %v1887 = vmax.f32 %v1885, 0.0
      %v1888 = vmax.f32 %v1886, 0.0
      %v1889 = vmax.f32 %v1883, %v1887
      %v1890 = vmax.f32 %v1884, %v1888
      %v1891 = vadd.f32 %v1706, %v1879
      %v1892 = vadd.f32 %v1707, %v1879
      %v1893 = vmax.f32 %v1891, 0.0
      %v1894 = vmax.f32 %v1892, 0.0
      %v1895 = vmax.f32 %v1889, %v1893
      %v1896 = vmax.f32 %v1890, %v1894
      %v1897 = vadd.f32 %v1873, %v1879
      %v1898 = vadd.f32 %v1874, %v1879
      %v1899 = vmax.f32 %v1897, 0.0
      %v1900 = vmax.f32 %v1898, 0.0
      %v1901 = vmax.f32 %v1895, %v1899
      %v1902 = vmax.f32 %v1896, %v1900
      %vm1903 = vcmask 687104
      %1904 = vst.msk [vmem:[%s170] sm:$0xff] %vm1903, %v1901
      %vm1905 = vcmask 685056
      %1906 = vst.msk [vmem:[%s170 + $0x8] sm:$0x3f] %vm1905, %v1902
      %p1907 = scmp.lt.s32.totalorder %s14, 1
      %s1908 = scalar_select %p1907, %s14, 1
      %s1909 = smul.addr %s1908, 2
      %s1910 = smul.addr %s1909, 8
      %s1911 = scalar_lea.vmem %s3, %s1910
      // Predicated region
      $region33: #{cnn_cifar_forward.3} parent=31 // pred_check
        %p1912 = pneg %p100
      $region34: #{cnn_cifar_forward.3} parent=31 // pred_check_branch
        %1914 = sbr.rel (%p1912) target = $region36
      $region35: #{cnn_cifar_forward.3} parent=31 // pred_region
        _
      $region36: #{cnn_cifar_forward.3} parent=31 // pred_fallthru
        _
    $region32: #{cnn_cifar_forward.3} parent=5 // pred_fallthru
      _
    %p1915 = scmp.le.s32.totalorder 2, %s9
    // Predicated region
    $region37: #{cnn_cifar_forward.3} parent=5 // pred_check
      %p1916 = pneg %p1915
    $region38: #{cnn_cifar_forward.3} parent=5 // pred_check_branch
      %1918 = sbr.rel (%p1916) target = $region40
    $region39: #{cnn_cifar_forward.3} parent=5 // pred_region
      %s1919 = ssub.s32 %s9, 2
      // Predicated region
      $region41: #{cnn_cifar_forward.3} parent=39 // pred_check
        %p1920 = pneg %p106
      $region42: #{cnn_cifar_forward.3} parent=39 // pred_check_branch
        %1922 = sbr.rel (%p1920) target = $region44
      $region43: #{cnn_cifar_forward.3} parent=39 // pred_region
        %p1923 = scmp.lt.s32.totalorder %s15, 1
        %s1924 = scalar_select %p1923, %s15, 1
        %s1925 = smul.addr %s1924, 2
        %s1926 = smul.addr %s1925, 8
        %s1927 = scalar_lea.vmem %s3, %s1926
      $region44: #{cnn_cifar_forward.3} parent=39 // pred_fallthru
        _
    $region40: #{cnn_cifar_forward.3} parent=5 // pred_fallthru
      _
  $region6: #{cnn_cifar_forward.3} parent=0 // loop_footer
    %s13 = sadd.s32 1, %s9
  $region7: #{cnn_cifar_forward.3} parent=0 // loop_footer_branch
    %8 = sbr.rel target = $region3
  $region8: #{cnn_cifar_forward.3} parent=0 // loop_exit
    _

// kernel: cnn_cifar_forward.4
$region0: #{cnn_cifar_forward.4}
  #allocation0 [shape = 'u32[]', space=smem, size = 0x4, offset = 0x4, fixed_abs, tag = 'smem constant byte address 0x4 - core index']
  #allocation1 [shape = 'u32[144,128]{1,0:T(1,128)}', space=vmem, size = 0x12000, scoped, tag = 'internal scratch']
  %s0 = inlined_call_operand.vmem [shape: f32[2,2,7,84], index: 0, kind: input, shape index: {}]
  %s1 = inlined_call_operand.vmem [shape: f32[5,2,84,80], index: 1, kind: input, shape index: {}]
  %s2 = inlined_call_operand.vmem [shape: f32[1,80], index: 2, kind: input, shape index: {}]
  %s3 = inlined_call_operand.vmem [shape: f32[2,5,80], index: 3, kind: output, shape index: {}]
  %s4 = sld [smem:[#allocation0]]
  $region45: #{cnn_cifar_forward.4} parent=0
    _
  %s6 = ssub.s32 1, %s4
  %s7 = scalar_select 0, %s6, %s4
  loop: start=0, step=1, limit=4
  $region2: #{cnn_cifar_forward.4} parent=0 // loop_pre_header
    _
  $region3: #{cnn_cifar_forward.4} parent=0 // loop_header
    %s9 = sphi 0, %s13
    %p10 = scmp.ge.s32.totalorder %s9, 4
    %s19 = sphi 0, %s21
    %s22 = sphi 0, %s19
    %s23 = sphi 0, %s22
    %s39 = sphi 0, %s23
    %s43 = sphi 0, %s43
    %s45 = sphi 0, %s43
    %s46 = sphi 0, %s45
    %s60 = sphi 0, %s46
    %s64 = sphi 0, %s64
    %s66 = sphi 0, %s64
    %s67 = sphi 0, %s66
    %s81 = sphi 0, %s67
    %s87 = sphi 0, %s89
    %s90 = sphi 0, %s87
    %s91 = sphi 0, %s90
    %s107 = sphi 0, %s91
  $region4: #{cnn_cifar_forward.4} parent=0 // loop_header_branch
    %12 = sbr.rel (%p10) target = $region8
  $region5: #{cnn_cifar_forward.4} parent=0 // loop_body
    %s14 = ssub.s32 %s9, 1
    %s15 = ssub.s32 %s9, 2
    %s16 = sadd.s32 %s9, 1
    %s17 = ssub.s32 %s9, %s16
    %p18 = scmp.eq.s32.totalorder %s17, 0
    %s20 = sadd.s32 %s19, 1
    %s21 = scalar_select %p18, %s19, %s20
    %p24 = pneg %p18
    %p25 = scmp.eq.s32.totalorder %s9, 1
    %p26 = por %p24, %p25
    %p27 = scmp.ne.s32.totalorder %s19, %s22
    %p28 = scmp.eq.s32.totalorder %s9, 0
    %p29 = por %p27, %p28
    %p30 = scmp.ne.s32.totalorder %s19, %s22
    %p31 = scmp.eq.s32.totalorder %s14, 1
    %p32 = por %p30, %p31
    %p33 = scmp.ne.s32.totalorder %s22, %s23
    %p34 = scmp.eq.s32.totalorder %s14, 0
    %p35 = por %p33, %p34
    %p36 = scmp.ne.s32.totalorder %s22, %s23
    %p37 = scmp.eq.s32.totalorder %s15, 1
    %p38 = por %p36, %p37
    %p40 = scmp.ne.s32.totalorder %s23, %s39
    %p41 = scmp.eq.s32.totalorder %s15, 0
    %p42 = por %p40, %p41
    %s44 = sadd.s32 %s43, 1
    %p47 = scmp.eq.s32.totalorder %s9, 1
    %p48 = scmp.ne.s32.totalorder %s43, %s45
    %p49 = scmp.eq.s32.totalorder %s9, 0
    %p50 = por %p48, %p49
    %p51 = scmp.ne.s32.totalorder %s43, %s45
    %p52 = scmp.eq.s32.totalorder %s14, 1
    %p53 = por %p51, %p52
    %p54 = scmp.ne.s32.totalorder %s45, %s46
    %p55 = scmp.eq.s32.totalorder %s14, 0
    %p56 = por %p54, %p55
    %p57 = scmp.ne.s32.totalorder %s45, %s46
    %p58 = scmp.eq.s32.totalorder %s15, 1
    %p59 = por %p57, %p58
    %p61 = scmp.ne.s32.totalorder %s46, %s60
    %p62 = scmp.eq.s32.totalorder %s15, 0
    %p63 = por %p61, %p62
    %s65 = sadd.s32 %s64, 1
    %p68 = scmp.eq.s32.totalorder %s9, 1
    %p69 = scmp.ne.s32.totalorder %s64, %s66
    %p70 = scmp.eq.s32.totalorder %s9, 0
    %p71 = por %p69, %p70
    %p72 = scmp.ne.s32.totalorder %s64, %s66
    %p73 = scmp.eq.s32.totalorder %s14, 1
    %p74 = por %p72, %p73
    %p75 = scmp.ne.s32.totalorder %s66, %s67
    %p76 = scmp.eq.s32.totalorder %s14, 0
    %p77 = por %p75, %p76
    %p78 = scmp.ne.s32.totalorder %s66, %s67
    %p79 = scmp.eq.s32.totalorder %s15, 1
    %p80 = por %p78, %p79
    %p82 = scmp.ne.s32.totalorder %s67, %s81
    %p83 = scmp.eq.s32.totalorder %s15, 0
    %p84 = por %p82, %p83
    %s85 = ssub.s32 %s9, %s16
    %p86 = scmp.eq.s32.totalorder %s85, 0
    %s88 = sadd.s32 %s87, 1
    %s89 = scalar_select %p86, %s87, %s88
    %p92 = pneg %p86
    %p93 = scmp.eq.s32.totalorder %s9, 1
    %p94 = por %p92, %p93
    %p95 = scmp.ne.s32.totalorder %s87, %s90
    %p96 = scmp.eq.s32.totalorder %s9, 0
    %p97 = por %p95, %p96
    %p98 = scmp.ne.s32.totalorder %s87, %s90
    %p99 = scmp.eq.s32.totalorder %s14, 1
    %p100 = por %p98, %p99
    %p101 = scmp.ne.s32.totalorder %s90, %s91
    %p102 = scmp.eq.s32.totalorder %s14, 0
    %p103 = por %p101, %p102
    %p104 = scmp.ne.s32.totalorder %s90, %s91
    %p105 = scmp.eq.s32.totalorder %s15, 1
    %p106 = por %p104, %p105
    %p108 = scmp.ne.s32.totalorder %s91, %s107
    %p109 = scmp.eq.s32.totalorder %s15, 0
    %p110 = por %p108, %p109
    %p111 = scmp.le.s32.totalorder 1, %s9
    %p112 = scmp.lt.s32.totalorder %s9, 3
    %p113 = pnand %p111, %p112
    %p114 = pneg %p113
    // Predicated region
    $region9: #{cnn_cifar_forward.4} parent=5 // pred_check
      _
    $region10: #{cnn_cifar_forward.4} parent=5 // pred_check_branch
      %116 = sbr.rel (%p113) target = $region12
    $region11: #{cnn_cifar_forward.4} parent=5 // pred_region
      %s117 = ssub.s32 %s9, 1
      // Predicated region
      $region13: #{cnn_cifar_forward.4} parent=11 // pred_check
        %p118 = pneg %p56
      $region14: #{cnn_cifar_forward.4} parent=11 // pred_check_branch
        %120 = sbr.rel (%p118) target = $region16
      $region15: #{cnn_cifar_forward.4} parent=11 // pred_region
        _
      $region16: #{cnn_cifar_forward.4} parent=11 // pred_fallthru
        _
      // Predicated region
      $region17: #{cnn_cifar_forward.4} parent=11 // pred_check
        %p121 = pneg %p77
      $region18: #{cnn_cifar_forward.4} parent=11 // pred_check_branch
        %123 = sbr.rel (%p121) target = $region20
      $region19: #{cnn_cifar_forward.4} parent=11 // pred_region
        _
      $region20: #{cnn_cifar_forward.4} parent=11 // pred_fallthru
        _
    $region12: #{cnn_cifar_forward.4} parent=5 // pred_fallthru
      _
    %p124 = scmp.lt.s32.totalorder %s9, 2
    // Predicated region
    $region21: #{cnn_cifar_forward.4} parent=5 // pred_check
      %p125 = pneg %p124
    $region22: #{cnn_cifar_forward.4} parent=5 // pred_check_branch
      %127 = sbr.rel (%p125) target = $region24
    $region23: #{cnn_cifar_forward.4} parent=5 // pred_region
      // Predicated region
      $region25: #{cnn_cifar_forward.4} parent=23 // pred_check
        %p128 = pneg %p29
      $region26: #{cnn_cifar_forward.4} parent=23 // pred_check_branch
        %130 = sbr.rel (%p128) target = $region28
      $region27: #{cnn_cifar_forward.4} parent=23 // pred_region
        %p131 = scmp.lt.s32.totalorder %s9, 1
        %s132 = scalar_select %p131, %s9, 1
        %s133 = smul.addr %s132, 2
        %s134 = smul.addr %s133, 8
        %s135 = scalar_lea.vmem %s0, %s134
      $region28: #{cnn_cifar_forward.4} parent=23 // pred_fallthru
        _
    $region24: #{cnn_cifar_forward.4} parent=5 // pred_fallthru
      _
    %p136 = scmp.le.s32.totalorder 1, %s9
    %p137 = scmp.lt.s32.totalorder %s9, 3
    %p138 = pnand %p136, %p137
    %p139 = pneg %p138
    // Predicated region
    $region29: #{cnn_cifar_forward.4} parent=5 // pred_check
      _
    $region30: #{cnn_cifar_forward.4} parent=5 // pred_check_branch
      %141 = sbr.rel (%p138) target = $region32
    $region31: #{cnn_cifar_forward.4} parent=5 // pred_region
      %s142 = ssub.s32 %s9, 1
      %p143 = scmp.lt.s32.totalorder %s14, 1
      %s144 = scalar_select %p143, %s14, 1
      %s145 = smul.addr %s144, 2
      %s146 = smul.addr %s145, 8
      %s147 = scalar_lea.vmem %s0, %s146
      %p148 = pneg %p35
      %p149 = pneg %p32
      %p150 = pneg %p56
      %p151 = pneg %p53
      %p152 = pneg %p77
      %p153 = pneg %p74
      %p154 = pneg %p103
      %p155 = pneg %p100
      %p156 = scmp.lt.s32.totalorder %s14, 1
      %s157 = scalar_select %p156, %s14, 1
      %s158 = smul.addr %s157, 8
      %s159 = scalar_lea.vmem %s3, %s158
      %p160 = scmp.lt.s32.totalorder %s14, 1
      %s161 = scalar_select %p160, %s14, 1
      %s162 = smul.addr %s161, 2
      %s163 = smul.addr %s162, 8
      %s164 = scalar_lea.vmem %s0, %s163
      %p165 = scmp.lt.s32.totalorder %s14, 1
      %s166 = scalar_select %p165, %s14, 1
      %s167 = smul.addr %s166, 8
      %s168 = scalar_lea.vmem %s3, %s167
      %v169 = vld [vmem:[%s2] sm:$0x1]
      %v170 = vld [vmem:[%s164] sm:$0x1f]
      %s171 = scalar_lea.vmem %s164, 8
      %v172 = vld [vmem:[%s171] sm:$0x1f]
      %v173 = vld [vmem:[%s1] sm:$0xff]
      %v174 = vld [vmem:[%s1 + $0x8] sm:$0xff]
      %v175 = vld [vmem:[%s1 + $0x10] sm:$0xff]
      %v176 = vld [vmem:[%s1 + $0x18] sm:$0xff]
      %v177 = vld [vmem:[%s1 + $0x20] sm:$0xff]
      %v178 = vld [vmem:[%s1 + $0x28] sm:$0xff]
      %v179 = vld [vmem:[%s1 + $0x30] sm:$0xff]
      %v180 = vld [vmem:[%s1 + $0x38] sm:$0xff]
      %v181 = vld [vmem:[%s1 + $0x40] sm:$0xff]
      %v182 = vld [vmem:[%s1 + $0x48] sm:$0xff]
      %v183 = vld [vmem:[%s1 + $0x50] sm:$0xf]
      %s184 = scalar_lea.vmem %s1, 88
      %v185 = vld [vmem:[%s184] sm:$0xff]
      %v186 = vld [vmem:[%s184 + $0x8] sm:$0xff]
      %v187 = vld [vmem:[%s184 + $0x10] sm:$0xff]
      %v188 = vld [vmem:[%s184 + $0x18] sm:$0xff]
      %v189 = vld [vmem:[%s184 + $0x20] sm:$0xff]
      %v190 = vld [vmem:[%s184 + $0x28] sm:$0xff]
      %v191 = vld [vmem:[%s184 + $0x30] sm:$0xff]
      %v192 = vld [vmem:[%s184 + $0x38] sm:$0xff]
      %v193 = vld [vmem:[%s184 + $0x40] sm:$0xff]
      %v194 = vld [vmem:[%s184 + $0x48] sm:$0xff]
      %v195 = vld [vmem:[%s184 + $0x50] sm:$0xf]
      %v196 = vld [vmem:[%s164 + $0x1] sm:$0x1f]
      %s197 = scalar_lea.vmem %s1, 176
      %v198 = vld [vmem:[%s197] sm:$0xff]
      %v199 = vld [vmem:[%s197 + $0x8] sm:$0xff]
      %v200 = vld [vmem:[%s197 + $0x10] sm:$0xff]
      %v201 = vld [vmem:[%s197 + $0x18] sm:$0xff]
      %v202 = vld [vmem:[%s197 + $0x20] sm:$0xff]
      %v203 = vld [vmem:[%s197 + $0x28] sm:$0xff]
      %v204 = vld [vmem:[%s197 + $0x30] sm:$0xff]
      %v205 = vld [vmem:[%s197 + $0x38] sm:$0xff]
      %v206 = vld [vmem:[%s197 + $0x40] sm:$0xff]
      %v207 = vld [vmem:[%s197 + $0x48] sm:$0xff]
      %v208 = vld [vmem:[%s197 + $0x50] sm:$0xf]
      %vm209 = vcmask 687104
      %v211 = vsel %vm209, %v172, 0
      %vm213 = vcmask 1043456
      %v215 = vsel %vm213, %v208, 0
      %217 = vmatprep.subr.mxu0 0.0
      %218 = vmatpush1.msra.mxu0 %v198
      %219 = vmatprep.subr.mxu0 0.0
      %220 = vmatpush1.msra.mxu0 %v199
      %221 = vmatprep.subr.mxu0 0.0
      %222 = vmatpush1.msra.mxu0 %v200
      %223 = vmatprep.subr.mxu0 0.0
      %224 = vmatpush1.msra.mxu0 %v201
      %225 = vmatprep.subr.mxu0 0.0
      %226 = vmatpush1.msra.mxu0 %v202
      %227 = vmatprep.subr.mxu0 0.0
      %228 = vmatpush1.msra.mxu0 %v203
      %229 = vmatprep.subr.mxu0 0.0
      %230 = vmatpush1.msra.mxu0 %v204
      %231 = vmatprep.subr.mxu0 0.0
      %232 = vmatpush1.msra.mxu0 %v205
      %233 = vmatprep.subr.mxu0 0.0
      %234 = vmatpush1.msra.mxu0 %v206
      %235 = vmatprep.subr.mxu0 0.0
      %236 = vmatpush1.msra.mxu0 %v207
      %237 = vmatprep.subr.mxu0 0.0
      %238 = vmatpush1.msra.mxu0 %v215
      %239 = vmatprep.subr.mxu0 0.0
      %240 = vmatpush1.msra.mxu0 0.0
      %241 = vmatprep.subr.mxu0 0.0
      %242 = vmatpush1.msra.mxu0 0.0
      %243 = vmatprep.subr.mxu0 0.0
      %244 = vmatpush1.msra.mxu0 0.0
      %245 = vmatprep.subr.mxu0 0.0
      %246 = vmatpush1.msra.mxu0 0.0
      %247 = vmatprep.subr.mxu0 0.0
      %248 = vmatpush1.msra.mxu0 0.0
      %249 = vmatprep.subr.mxu0 0.0
      %250 = vmatpush1.msra.mxu0 0.0
      %251 = vmatprep.subr.mxu0 0.0
      %252 = vmatpush1.msra.mxu0 0.0
      %253 = vmatprep.subr.mxu0 0.0
      %254 = vmatpush1.msra.mxu0 0.0
      %255 = vmatprep.subr.mxu0 0.0
      %256 = vmatpush1.msra.mxu0 0.0
      %257 = vmatprep.subr.mxu0 0.0
      %258 = vmatpush1.msra.mxu0 0.0
      %259 = vmatprep.subr.mxu0 0.0
      %260 = vmatpush1.msra.mxu0 0.0
      %261 = vmatprep.subr.mxu0 0.0
      %262 = vmatpush1.msra.mxu0 0.0
      %263 = vmatprep.subr.mxu0 0.0
      %264 = vmatpush1.msra.mxu0 0.0
      %265 = vmatprep.subr.mxu0 0.0
      %266 = vmatpush1.msra.mxu0 0.0
      %267 = vmatprep.subr.mxu0 0.0
      %268 = vmatpush1.msra.mxu0 0.0
      %269 = vmatprep.subr.mxu0 0.0
      %270 = vmatpush1.msra.mxu0 0.0
      %271 = vmatprep.subr.mxu0 0.0
      %272 = vmatpush1.msra.mxu0 0.0
      %273 = vmatprep.subr.mxu0 0.0
      %274 = vmatpush1.msra.mxu0 0.0
      %275 = vmatprep.subr.mxu0 0.0
      %276 = vmatpush1.msra.mxu0 0.0
      %277 = vmatprep.subr.mxu0 0.0
      %278 = vmatpush1.msra.mxu0 0.0
      %279 = vmatprep.subr.mxu0 0.0
      %280 = vmatpush1.msra.mxu0 0.0
      %281 = vmatprep.mubr.f32.mxu0 0.0
      %282 = vmatmul.mubr.f32.gmra.mrb[0].mxu0 %v211
      %v283 = vpop.f32.mrb[0].mxu0
      %v284 = vadd.f32 0.0, %v283
      %v285 = vpop.f32.mrb[0].mxu0
      %286 = vdwg.mxu0
      %v288 = vsel %vm209, %v170, 0
      %v291 = vsel %vm213, %v183, 0
      %293 = vmatprep.subr.mxu0 0.0
      %294 = vmatpush1.msra.mxu0 %v173
      %295 = vmatprep.subr.mxu0 0.0
      %296 = vmatpush1.msra.mxu0 %v174
      %297 = vmatprep.subr.mxu0 0.0
      %298 = vmatpush1.msra.mxu0 %v175
      %299 = vmatprep.subr.mxu0 0.0
      %300 = vmatpush1.msra.mxu0 %v176
      %301 = vmatprep.subr.mxu0 0.0
      %302 = vmatpush1.msra.mxu0 %v177
      %303 = vmatprep.subr.mxu0 0.0
      %304 = vmatpush1.msra.mxu0 %v178
      %305 = vmatprep.subr.mxu0 0.0
      %306 = vmatpush1.msra.mxu0 %v179
      %307 = vmatprep.subr.mxu0 0.0
      %308 = vmatpush1.msra.mxu0 %v180
      %309 = vmatprep.subr.mxu0 0.0
      %310 = vmatpush1.msra.mxu0 %v181
      %311 = vmatprep.subr.mxu0 0.0
      %312 = vmatpush1.msra.mxu0 %v182
      %313 = vmatprep.subr.mxu0 0.0
      %314 = vmatpush1.msra.mxu0 %v291
      %315 = vmatprep.subr.mxu0 0.0
      %316 = vmatpush1.msra.mxu0 0.0
      %317 = vmatprep.subr.mxu0 0.0
      %318 = vmatpush1.msra.mxu0 0.0
      %319 = vmatprep.subr.mxu0 0.0
      %320 = vmatpush1.msra.mxu0 0.0
      %321 = vmatprep.subr.mxu0 0.0
      %322 = vmatpush1.msra.mxu0 0.0
      %323 = vmatprep.subr.mxu0 0.0
      %324 = vmatpush1.msra.mxu0 0.0
      %325 = vmatprep.subr.mxu0 0.0
      %326 = vmatpush1.msra.mxu0 0.0
      %327 = vmatprep.subr.mxu0 0.0
      %328 = vmatpush1.msra.mxu0 0.0
      %329 = vmatprep.subr.mxu0 0.0
      %330 = vmatpush1.msra.mxu0 0.0
      %331 = vmatprep.subr.mxu0 0.0
      %332 = vmatpush1.msra.mxu0 0.0
      %333 = vmatprep.subr.mxu0 0.0
      %334 = vmatpush1.msra.mxu0 0.0
      %335 = vmatprep.subr.mxu0 0.0
      %336 = vmatpush1.msra.mxu0 0.0
      %337 = vmatprep.subr.mxu0 0.0
      %338 = vmatpush1.msra.mxu0 0.0
      %339 = vmatprep.subr.mxu0 0.0
      %340 = vmatpush1.msra.mxu0 0.0
      %341 = vmatprep.subr.mxu0 0.0
      %342 = vmatpush1.msra.mxu0 0.0
      %343 = vmatprep.subr.mxu0 0.0
      %344 = vmatpush1.msra.mxu0 0.0
      %345 = vmatprep.subr.mxu0 0.0
      %346 = vmatpush1.msra.mxu0 0.0
      %347 = vmatprep.subr.mxu0 0.0
      %348 = vmatpush1.msra.mxu0 0.0
      %349 = vmatprep.subr.mxu0 0.0
      %350 = vmatpush1.msra.mxu0 0.0
      %351 = vmatprep.subr.mxu0 0.0
      %352 = vmatpush1.msra.mxu0 0.0
      %353 = vmatprep.subr.mxu0 0.0
      %354 = vmatpush1.msra.mxu0 0.0
      %355 = vmatprep.subr.mxu0 0.0
      %356 = vmatpush1.msra.mxu0 0.0
      %357 = vmatprep.mubr.f32.mxu0 0.0
      %358 = vmatmul.mubr.f32.gmra.mrb[0].mxu0 %v288
      %v359 = vpop.f32.mrb[0].mxu0
      %v360 = vadd.f32 %v284, %v359
      %v361 = vpop.f32.mrb[0].mxu0
      %362 = vdwg.mxu0
      %v364 = vsel %vm209, %v196, 0
      %366 = vmatprep.subr.mxu0 0.0
      %367 = vmatpush1.msra.mxu0 %v198
      %368 = vmatprep.subr.mxu0 0.0
      %369 = vmatpush1.msra.mxu0 %v199
      %370 = vmatprep.subr.mxu0 0.0
      %371 = vmatpush1.msra.mxu0 %v200
      %372 = vmatprep.subr.mxu0 0.0
      %373 = vmatpush1.msra.mxu0 %v201
      %374 = vmatprep.subr.mxu0 0.0
      %375 = vmatpush1.msra.mxu0 %v202
      %376 = vmatprep.subr.mxu0 0.0
      %377 = vmatpush1.msra.mxu0 %v203
      %378 = vmatprep.subr.mxu0 0.0
      %379 = vmatpush1.msra.mxu0 %v204
      %380 = vmatprep.subr.mxu0 0.0
      %381 = vmatpush1.msra.mxu0 %v205
      %382 = vmatprep.subr.mxu0 0.0
      %383 = vmatpush1.msra.mxu0 %v206
      %384 = vmatprep.subr.mxu0 0.0
      %385 = vmatpush1.msra.mxu0 %v207
      %386 = vmatprep.subr.mxu0 0.0
      %387 = vmatpush1.msra.mxu0 %v215
      %388 = vmatprep.subr.mxu0 0.0
      %389 = vmatpush1.msra.mxu0 0.0
      %390 = vmatprep.subr.mxu0 0.0
      %391 = vmatpush1.msra.mxu0 0.0
      %392 = vmatprep.subr.mxu0 0.0
      %393 = vmatpush1.msra.mxu0 0.0
      %394 = vmatprep.subr.mxu0 0.0
      %395 = vmatpush1.msra.mxu0 0.0
      %396 = vmatprep.subr.mxu0 0.0
      %397 = vmatpush1.msra.mxu0 0.0
      %398 = vmatprep.subr.mxu0 0.0
      %399 = vmatpush1.msra.mxu0 0.0
      %400 = vmatprep.subr.mxu0 0.0
      %401 = vmatpush1.msra.mxu0 0.0
      %402 = vmatprep.subr.mxu0 0.0
      %403 = vmatpush1.msra.mxu0 0.0
      %404 = vmatprep.subr.mxu0 0.0
      %405 = vmatpush1.msra.mxu0 0.0
      %406 = vmatprep.subr.mxu0 0.0
      %407 = vmatpush1.msra.mxu0 0.0
      %408 = vmatprep.subr.mxu0 0.0
      %409 = vmatpush1.msra.mxu0 0.0
      %410 = vmatprep.subr.mxu0 0.0
      %411 = vmatpush1.msra.mxu0 0.0
      %412 = vmatprep.subr.mxu0 0.0
      %413 = vmatpush1.msra.mxu0 0.0
      %414 = vmatprep.subr.mxu0 0.0
      %415 = vmatpush1.msra.mxu0 0.0
      %416 = vmatprep.subr.mxu0 0.0
      %417 = vmatpush1.msra.mxu0 0.0
      %418 = vmatprep.subr.mxu0 0.0
      %419 = vmatpush1.msra.mxu0 0.0
      %420 = vmatprep.subr.mxu0 0.0
      %421 = vmatpush1.msra.mxu0 0.0
      %422 = vmatprep.subr.mxu0 0.0
      %423 = vmatpush1.msra.mxu0 0.0
      %424 = vmatprep.subr.mxu0 0.0
      %425 = vmatpush1.msra.mxu0 0.0
      %426 = vmatprep.subr.mxu0 0.0
      %427 = vmatpush1.msra.mxu0 0.0
      %428 = vmatprep.subr.mxu0 0.0
      %429 = vmatpush1.msra.mxu0 0.0
      %430 = vmatprep.mubr.f32.mxu0 0.0
      %431 = vmatmul.mubr.f32.gmra.mrb[0].mxu0 %v364
      %v432 = vpop.f32.mrb[0].mxu0
      %v433 = vadd.f32 0.0, %v432
      %v434 = vpop.f32.mrb[0].mxu0
      %435 = vdwg.mxu0
      %436 = vmatprep.subr.mxu0 0.0
      %437 = vmatpush1.msra.mxu0 %v173
      %438 = vmatprep.subr.mxu0 0.0
      %439 = vmatpush1.msra.mxu0 %v174
      %440 = vmatprep.subr.mxu0 0.0
      %441 = vmatpush1.msra.mxu0 %v175
      %442 = vmatprep.subr.mxu0 0.0
      %443 = vmatpush1.msra.mxu0 %v176
      %444 = vmatprep.subr.mxu0 0.0
      %445 = vmatpush1.msra.mxu0 %v177
      %446 = vmatprep.subr.mxu0 0.0
      %447 = vmatpush1.msra.mxu0 %v178
      %448 = vmatprep.subr.mxu0 0.0
      %449 = vmatpush1.msra.mxu0 %v179
      %450 = vmatprep.subr.mxu0 0.0
      %451 = vmatpush1.msra.mxu0 %v180
      %452 = vmatprep.subr.mxu0 0.0
      %453 = vmatpush1.msra.mxu0 %v181
      %454 = vmatprep.subr.mxu0 0.0
      %455 = vmatpush1.msra.mxu0 %v182
      %456 = vmatprep.subr.mxu0 0.0
      %457 = vmatpush1.msra.mxu0 %v291
      %458 = vmatprep.subr.mxu0 0.0
      %459 = vmatpush1.msra.mxu0 0.0
      %460 = vmatprep.subr.mxu0 0.0
      %461 = vmatpush1.msra.mxu0 0.0
      %462 = vmatprep.subr.mxu0 0.0
      %463 = vmatpush1.msra.mxu0 0.0
      %464 = vmatprep.subr.mxu0 0.0
      %465 = vmatpush1.msra.mxu0 0.0
      %466 = vmatprep.subr.mxu0 0.0
      %467 = vmatpush1.msra.mxu0 0.0
      %468 = vmatprep.subr.mxu0 0.0
      %469 = vmatpush1.msra.mxu0 0.0
      %470 = vmatprep.subr.mxu0 0.0
      %471 = vmatpush1.msra.mxu0 0.0
      %472 = vmatprep.subr.mxu0 0.0
      %473 = vmatpush1.msra.mxu0 0.0
      %474 = vmatprep.subr.mxu0 0.0
      %475 = vmatpush1.msra.mxu0 0.0
      %476 = vmatprep.subr.mxu0 0.0
      %477 = vmatpush1.msra.mxu0 0.0
      %478 = vmatprep.subr.mxu0 0.0
      %479 = vmatpush1.msra.mxu0 0.0
      %480 = vmatprep.subr.mxu0 0.0
      %481 = vmatpush1.msra.mxu0 0.0
      %482 = vmatprep.subr.mxu0 0.0
      %483 = vmatpush1.msra.mxu0 0.0
      %484 = vmatprep.subr.mxu0 0.0
      %485 = vmatpush1.msra.mxu0 0.0
      %486 = vmatprep.subr.mxu0 0.0
      %487 = vmatpush1.msra.mxu0 0.0
      %488 = vmatprep.subr.mxu0 0.0
      %489 = vmatpush1.msra.mxu0 0.0
      %490 = vmatprep.subr.mxu0 0.0
      %491 = vmatpush1.msra.mxu0 0.0
      %492 = vmatprep.subr.mxu0 0.0
      %493 = vmatpush1.msra.mxu0 0.0
      %494 = vmatprep.subr.mxu0 0.0
      %495 = vmatpush1.msra.mxu0 0.0
      %496 = vmatprep.subr.mxu0 0.0
      %497 = vmatpush1.msra.mxu0 0.0
      %498 = vmatprep.subr.mxu0 0.0
      %499 = vmatpush1.msra.mxu0 0.0
      %500 = vmatprep.mubr.f32.mxu0 0.0
      %501 = vmatmul.mubr.f32.gmra.mrb[0].mxu0 %v211
      %v502 = vpop.f32.mrb[0].mxu0
      %v503 = vadd.f32 %v433, %v502
      %v504 = vpop.f32.mrb[0].mxu0
      %505 = vdwg.mxu0
      %s506 = scalar_lea.vmem %s1, 264
      %v507 = vld [vmem:[%s506] sm:$0xff]
      %v508 = vld [vmem:[%s506 + $0x8] sm:$0xff]
      %v509 = vld [vmem:[%s506 + $0x10] sm:$0xff]
      %v510 = vld [vmem:[%s506 + $0x18] sm:$0xff]
      %v511 = vld [vmem:[%s506 + $0x20] sm:$0xff]
      %v512 = vld [vmem:[%s506 + $0x28] sm:$0xff]
      %v513 = vld [vmem:[%s506 + $0x30] sm:$0xff]
      %v514 = vld [vmem:[%s506 + $0x38] sm:$0xff]
      %v515 = vld [vmem:[%s506 + $0x40] sm:$0xff]
      %v516 = vld [vmem:[%s506 + $0x48] sm:$0xff]
      %v517 = vld [vmem:[%s506 + $0x50] sm:$0xf]
      %v519 = vsel %vm213, %v517, 0
      %521 = vmatprep.subr.mxu0 0.0
      %522 = vmatpush1.msra.mxu0 %v507
      %523 = vmatprep.subr.mxu0 0.0
      %524 = vmatpush1.msra.mxu0 %v508
      %525 = vmatprep.subr.mxu0 0.0
      %526 = vmatpush1.msra.mxu0 %v509
      %527 = vmatprep.subr.mxu0 0.0
      %528 = vmatpush1.msra.mxu0 %v510
      %529 = vmatprep.subr.mxu0 0.0
      %530 = vmatpush1.msra.mxu0 %v511
      %531 = vmatprep.subr.mxu0 0.0
      %532 = vmatpush1.msra.mxu0 %v512
      %533 = vmatprep.subr.mxu0 0.0
      %534 = vmatpush1.msra.mxu0 %v513
      %535 = vmatprep.subr.mxu0 0.0
      %536 = vmatpush1.msra.mxu0 %v514
      %537 = vmatprep.subr.mxu0 0.0
      %538 = vmatpush1.msra.mxu0 %v515
      %539 = vmatprep.subr.mxu0 0.0
      %540 = vmatpush1.msra.mxu0 %v516
      %541 = vmatprep.subr.mxu0 0.0
      %542 = vmatpush1.msra.mxu0 %v519
      %543 = vmatprep.subr.mxu0 0.0
      %544 = vmatpush1.msra.mxu0 0.0
      %545 = vmatprep.subr.mxu0 0.0
      %546 = vmatpush1.msra.mxu0 0.0
      %547 = vmatprep.subr.mxu0 0.0
      %548 = vmatpush1.msra.mxu0 0.0
      %549 = vmatprep.subr.mxu0 0.0
      %550 = vmatpush1.msra.mxu0 0.0
      %551 = vmatprep.subr.mxu0 0.0
      %552 = vmatpush1.msra.mxu0 0.0
      %553 = vmatprep.subr.mxu0 0.0
      %554 = vmatpush1.msra.mxu0 0.0
      %555 = vmatprep.subr.mxu0 0.0
      %556 = vmatpush1.msra.mxu0 0.0
      %557 = vmatprep.subr.mxu0 0.0
      %558 = vmatpush1.msra.mxu0 0.0
      %559 = vmatprep.subr.mxu0 0.0
      %560 = vmatpush1.msra.mxu0 0.0
      %561 = vmatprep.subr.mxu0 0.0
      %562 = vmatpush1.msra.mxu0 0.0
      %563 = vmatprep.subr.mxu0 0.0
      %564 = vmatpush1.msra.mxu0 0.0
      %565 = vmatprep.subr.mxu0 0.0
      %566 = vmatpush1.msra.mxu0 0.0
      %567 = vmatprep.subr.mxu0 0.0
      %568 = vmatpush1.msra.mxu0 0.0
      %569 = vmatprep.subr.mxu0 0.0
      %570 = vmatpush1.msra.mxu0 0.0
      %571 = vmatprep.subr.mxu0 0.0
      %572 = vmatpush1.msra.mxu0 0.0
      %573 = vmatprep.subr.mxu0 0.0
      %574 = vmatpush1.msra.mxu0 0.0
      %575 = vmatprep.subr.mxu0 0.0
      %576 = vmatpush1.msra.mxu0 0.0
      %577 = vmatprep.subr.mxu0 0.0
      %578 = vmatpush1.msra.mxu0 0.0
      %579 = vmatprep.subr.mxu0 0.0
      %580 = vmatpush1.msra.mxu0 0.0
      %581 = vmatprep.subr.mxu0 0.0
      %582 = vmatpush1.msra.mxu0 0.0
      %583 = vmatprep.subr.mxu0 0.0
      %584 = vmatpush1.msra.mxu0 0.0
      %585 = vmatprep.mubr.f32.mxu0 0.0
      %586 = vmatmul.mubr.f32.gmra.mrb[0].mxu0 %v211
      %v587 = vpop.f32.mrb[0].mxu0
      %v588 = vadd.f32 0.0, %v587
      %v589 = vpop.f32.mrb[0].mxu0
      %590 = vdwg.mxu0
      %v592 = vsel %vm213, %v195, 0
      %594 = vmatprep.subr.mxu0 0.0
      %595 = vmatpush1.msra.mxu0 %v185
      %596 = vmatprep.subr.mxu0 0.0
      %597 = vmatpush1.msra.mxu0 %v186
      %598 = vmatprep.subr.mxu0 0.0
      %599 = vmatpush1.msra.mxu0 %v187
      %600 = vmatprep.subr.mxu0 0.0
      %601 = vmatpush1.msra.mxu0 %v188
      %602 = vmatprep.subr.mxu0 0.0
      %603 = vmatpush1.msra.mxu0 %v189
      %604 = vmatprep.subr.mxu0 0.0
      %605 = vmatpush1.msra.mxu0 %v190
      %606 = vmatprep.subr.mxu0 0.0
      %607 = vmatpush1.msra.mxu0 %v191
      %608 = vmatprep.subr.mxu0 0.0
      %609 = vmatpush1.msra.mxu0 %v192
      %610 = vmatprep.subr.mxu0 0.0
      %611 = vmatpush1.msra.mxu0 %v193
      %612 = vmatprep.subr.mxu0 0.0
      %613 = vmatpush1.msra.mxu0 %v194
      %614 = vmatprep.subr.mxu0 0.0
      %615 = vmatpush1.msra.mxu0 %v592
      %616 = vmatprep.subr.mxu0 0.0
      %617 = vmatpush1.msra.mxu0 0.0
      %618 = vmatprep.subr.mxu0 0.0
      %619 = vmatpush1.msra.mxu0 0.0
      %620 = vmatprep.subr.mxu0 0.0
      %621 = vmatpush1.msra.mxu0 0.0
      %622 = vmatprep.subr.mxu0 0.0
      %623 = vmatpush1.msra.mxu0 0.0
      %624 = vmatprep.subr.mxu0 0.0
      %625 = vmatpush1.msra.mxu0 0.0
      %626 = vmatprep.subr.mxu0 0.0
      %627 = vmatpush1.msra.mxu0 0.0
      %628 = vmatprep.subr.mxu0 0.0
      %629 = vmatpush1.msra.mxu0 0.0
      %630 = vmatprep.subr.mxu0 0.0
      %631 = vmatpush1.msra.mxu0 0.0
      %632 = vmatprep.subr.mxu0 0.0
      %633 = vmatpush1.msra.mxu0 0.0
      %634 = vmatprep.subr.mxu0 0.0
      %635 = vmatpush1.msra.mxu0 0.0
      %636 = vmatprep.subr.mxu0 0.0
      %637 = vmatpush1.msra.mxu0 0.0
      %638 = vmatprep.subr.mxu0 0.0
      %639 = vmatpush1.msra.mxu0 0.0
      %640 = vmatprep.subr.mxu0 0.0
      %641 = vmatpush1.msra.mxu0 0.0
      %642 = vmatprep.subr.mxu0 0.0
      %643 = vmatpush1.msra.mxu0 0.0
      %644 = vmatprep.subr.mxu0 0.0
      %645 = vmatpush1.msra.mxu0 0.0
      %646 = vmatprep.subr.mxu0 0.0
      %647 = vmatpush1.msra.mxu0 0.0
      %648 = vmatprep.subr.mxu0 0.0
      %649 = vmatpush1.msra.mxu0 0.0
      %650 = vmatprep.subr.mxu0 0.0
      %651 = vmatpush1.msra.mxu0 0.0
      %652 = vmatprep.subr.mxu0 0.0
      %653 = vmatpush1.msra.mxu0 0.0
      %654 = vmatprep.subr.mxu0 0.0
      %655 = vmatpush1.msra.mxu0 0.0
      %656 = vmatprep.subr.mxu0 0.0
      %657 = vmatpush1.msra.mxu0 0.0
      %658 = vmatprep.mubr.f32.mxu0 0.0
      %659 = vmatmul.mubr.f32.gmra.mrb[0].mxu0 %v288
      %v660 = vpop.f32.mrb[0].mxu0
      %v661 = vadd.f32 %v588, %v660
      %v662 = vpop.f32.mrb[0].mxu0
      %663 = vdwg.mxu0
      %664 = vmatprep.subr.mxu0 0.0
      %665 = vmatpush1.msra.mxu0 %v507
      %666 = vmatprep.subr.mxu0 0.0
      %667 = vmatpush1.msra.mxu0 %v508
      %668 = vmatprep.subr.mxu0 0.0
      %669 = vmatpush1.msra.mxu0 %v509
      %670 = vmatprep.subr.mxu0 0.0
      %671 = vmatpush1.msra.mxu0 %v510
      %672 = vmatprep.subr.mxu0 0.0
      %673 = vmatpush1.msra.mxu0 %v511
      %674 = vmatprep.subr.mxu0 0.0
      %675 = vmatpush1.msra.mxu0 %v512
      %676 = vmatprep.subr.mxu0 0.0
      %677 = vmatpush1.msra.mxu0 %v513
      %678 = vmatprep.subr.mxu0 0.0
      %679 = vmatpush1.msra.mxu0 %v514
      %680 = vmatprep.subr.mxu0 0.0
      %681 = vmatpush1.msra.mxu0 %v515
      %682 = vmatprep.subr.mxu0 0.0
      %683 = vmatpush1.msra.mxu0 %v516
      %684 = vmatprep.subr.mxu0 0.0
      %685 = vmatpush1.msra.mxu0 %v519
      %686 = vmatprep.subr.mxu0 0.0
      %687 = vmatpush1.msra.mxu0 0.0
      %688 = vmatprep.subr.mxu0 0.0
      %689 = vmatpush1.msra.mxu0 0.0
      %690 = vmatprep.subr.mxu0 0.0
      %691 = vmatpush1.msra.mxu0 0.0
      %692 = vmatprep.subr.mxu0 0.0
      %693 = vmatpush1.msra.mxu0 0.0
      %694 = vmatprep.subr.mxu0 0.0
      %695 = vmatpush1.msra.mxu0 0.0
      %696 = vmatprep.subr.mxu0 0.0
      %697 = vmatpush1.msra.mxu0 0.0
      %698 = vmatprep.subr.mxu0 0.0
      %699 = vmatpush1.msra.mxu0 0.0
      %700 = vmatprep.subr.mxu0 0.0
      %701 = vmatpush1.msra.mxu0 0.0
      %702 = vmatprep.subr.mxu0 0.0
      %703 = vmatpush1.msra.mxu0 0.0
      %704 = vmatprep.subr.mxu0 0.0
      %705 = vmatpush1.msra.mxu0 0.0
      %706 = vmatprep.subr.mxu0 0.0
      %707 = vmatpush1.msra.mxu0 0.0
      %708 = vmatprep.subr.mxu0 0.0
      %709 = vmatpush1.msra.mxu0 0.0
      %710 = vmatprep.subr.mxu0 0.0
      %711 = vmatpush1.msra.mxu0 0.0
      %712 = vmatprep.subr.mxu0 0.0
      %713 = vmatpush1.msra.mxu0 0.0
      %714 = vmatprep.subr.mxu0 0.0
      %715 = vmatpush1.msra.mxu0 0.0
      %716 = vmatprep.subr.mxu0 0.0
      %717 = vmatpush1.msra.mxu0 0.0
      %718 = vmatprep.subr.mxu0 0.0
      %719 = vmatpush1.msra.mxu0 0.0
      %720 = vmatprep.subr.mxu0 0.0
      %721 = vmatpush1.msra.mxu0 0.0
      %722 = vmatprep.subr.mxu0 0.0
      %723 = vmatpush1.msra.mxu0 0.0
      %724 = vmatprep.subr.mxu0 0.0
      %725 = vmatpush1.msra.mxu0 0.0
      %726 = vmatprep.subr.mxu0 0.0
      %727 = vmatpush1.msra.mxu0 0.0
      %728 = vmatprep.mubr.f32.mxu0 0.0
      %729 = vmatmul.mubr.f32.gmra.mrb[0].mxu0 %v364
      %v730 = vpop.f32.mrb[0].mxu0
      %v731 = vadd.f32 0.0, %v730
      %v732 = vpop.f32.mrb[0].mxu0
      %733 = vdwg.mxu0
      %734 = vmatprep.subr.mxu0 0.0
      %735 = vmatpush1.msra.mxu0 %v185
      %736 = vmatprep.subr.mxu0 0.0
      %737 = vmatpush1.msra.mxu0 %v186
      %738 = vmatprep.subr.mxu0 0.0
      %739 = vmatpush1.msra.mxu0 %v187
      %740 = vmatprep.subr.mxu0 0.0
      %741 = vmatpush1.msra.mxu0 %v188
      %742 = vmatprep.subr.mxu0 0.0
      %743 = vmatpush1.msra.mxu0 %v189
      %744 = vmatprep.subr.mxu0 0.0
      %745 = vmatpush1.msra.mxu0 %v190
      %746 = vmatprep.subr.mxu0 0.0
      %747 = vmatpush1.msra.mxu0 %v191
      %748 = vmatprep.subr.mxu0 0.0
      %749 = vmatpush1.msra.mxu0 %v192
      %750 = vmatprep.subr.mxu0 0.0
      %751 = vmatpush1.msra.mxu0 %v193
      %752 = vmatprep.subr.mxu0 0.0
      %753 = vmatpush1.msra.mxu0 %v194
      %754 = vmatprep.subr.mxu0 0.0
      %755 = vmatpush1.msra.mxu0 %v592
      %756 = vmatprep.subr.mxu0 0.0
      %757 = vmatpush1.msra.mxu0 0.0
      %758 = vmatprep.subr.mxu0 0.0
      %759 = vmatpush1.msra.mxu0 0.0
      %760 = vmatprep.subr.mxu0 0.0
      %761 = vmatpush1.msra.mxu0 0.0
      %762 = vmatprep.subr.mxu0 0.0
      %763 = vmatpush1.msra.mxu0 0.0
      %764 = vmatprep.subr.mxu0 0.0
      %765 = vmatpush1.msra.mxu0 0.0
      %766 = vmatprep.subr.mxu0 0.0
      %767 = vmatpush1.msra.mxu0 0.0
      %768 = vmatprep.subr.mxu0 0.0
      %769 = vmatpush1.msra.mxu0 0.0
      %770 = vmatprep.subr.mxu0 0.0
      %771 = vmatpush1.msra.mxu0 0.0
      %772 = vmatprep.subr.mxu0 0.0
      %773 = vmatpush1.msra.mxu0 0.0
      %774 = vmatprep.subr.mxu0 0.0
      %775 = vmatpush1.msra.mxu0 0.0
      %776 = vmatprep.subr.mxu0 0.0
      %777 = vmatpush1.msra.mxu0 0.0
      %778 = vmatprep.subr.mxu0 0.0
      %779 = vmatpush1.msra.mxu0 0.0
      %780 = vmatprep.subr.mxu0 0.0
      %781 = vmatpush1.msra.mxu0 0.0
      %782 = vmatprep.subr.mxu0 0.0
      %783 = vmatpush1.msra.mxu0 0.0
      %784 = vmatprep.subr.mxu0 0.0
      %785 = vmatpush1.msra.mxu0 0.0
      %786 = vmatprep.subr.mxu0 0.0
      %787 = vmatpush1.msra.mxu0 0.0
      %788 = vmatprep.subr.mxu0 0.0
      %789 = vmatpush1.msra.mxu0 0.0
      %790 = vmatprep.subr.mxu0 0.0
      %791 = vmatpush1.msra.mxu0 0.0
      %792 = vmatprep.subr.mxu0 0.0
      %793 = vmatpush1.msra.mxu0 0.0
      %794 = vmatprep.subr.mxu0 0.0
      %795 = vmatpush1.msra.mxu0 0.0
      %796 = vmatprep.subr.mxu0 0.0
      %797 = vmatpush1.msra.mxu0 0.0
      %798 = vmatprep.mubr.f32.mxu0 0.0
      %799 = vmatmul.mubr.f32.gmra.mrb[0].mxu0 %v211
      %v800 = vpop.f32.mrb[0].mxu0
      %v801 = vadd.f32 %v731, %v800
      %v802 = vpop.f32.mrb[0].mxu0
      %803 = vdwg.mxu0
      %v804 = vld [vmem:[%s171 + $0x1] sm:$0x1f]
      %s805 = scalar_lea.vmem %s1, 352
      %v806 = vld [vmem:[%s805] sm:$0xff]
      %v807 = vld [vmem:[%s805 + $0x8] sm:$0xff]
      %v808 = vld [vmem:[%s805 + $0x10] sm:$0xff]
      %v809 = vld [vmem:[%s805 + $0x18] sm:$0xff]
      %v810 = vld [vmem:[%s805 + $0x20] sm:$0xff]
      %v811 = vld [vmem:[%s805 + $0x28] sm:$0xff]
      %v812 = vld [vmem:[%s805 + $0x30] sm:$0xff]
      %v813 = vld [vmem:[%s805 + $0x38] sm:$0xff]
      %v814 = vld [vmem:[%s805 + $0x40] sm:$0xff]
      %v815 = vld [vmem:[%s805 + $0x48] sm:$0xff]
      %v816 = vld [vmem:[%s805 + $0x50] sm:$0xf]
      %v818 = vsel %vm213, %v816, 0
      %820 = vmatprep.subr.mxu0 0.0
      %821 = vmatpush1.msra.mxu0 %v806
      %822 = vmatprep.subr.mxu0 0.0
      %823 = vmatpush1.msra.mxu0 %v807
      %824 = vmatprep.subr.mxu0 0.0
      %825 = vmatpush1.msra.mxu0 %v808
      %826 = vmatprep.subr.mxu0 0.0
      %827 = vmatpush1.msra.mxu0 %v809
      %828 = vmatprep.subr.mxu0 0.0
      %829 = vmatpush1.msra.mxu0 %v810
      %830 = vmatprep.subr.mxu0 0.0
      %831 = vmatpush1.msra.mxu0 %v811
      %832 = vmatprep.subr.mxu0 0.0
      %833 = vmatpush1.msra.mxu0 %v812
      %834 = vmatprep.subr.mxu0 0.0
      %835 = vmatpush1.msra.mxu0 %v813
      %836 = vmatprep.subr.mxu0 0.0
      %837 = vmatpush1.msra.mxu0 %v814
      %838 = vmatprep.subr.mxu0 0.0
      %839 = vmatpush1.msra.mxu0 %v815
      %840 = vmatprep.subr.mxu0 0.0
      %841 = vmatpush1.msra.mxu0 %v818
      %842 = vmatprep.subr.mxu0 0.0
      %843 = vmatpush1.msra.mxu0 0.0
      %844 = vmatprep.subr.mxu0 0.0
      %845 = vmatpush1.msra.mxu0 0.0
      %846 = vmatprep.subr.mxu0 0.0
      %847 = vmatpush1.msra.mxu0 0.0
      %848 = vmatprep.subr.mxu0 0.0
      %849 = vmatpush1.msra.mxu0 0.0
      %850 = vmatprep.subr.mxu0 0.0
      %851 = vmatpush1.msra.mxu0 0.0
      %852 = vmatprep.subr.mxu0 0.0
      %853 = vmatpush1.msra.mxu0 0.0
      %854 = vmatprep.subr.mxu0 0.0
      %855 = vmatpush1.msra.mxu0 0.0
      %856 = vmatprep.subr.mxu0 0.0
      %857 = vmatpush1.msra.mxu0 0.0
      %858 = vmatprep.subr.mxu0 0.0
      %859 = vmatpush1.msra.mxu0 0.0
      %860 = vmatprep.subr.mxu0 0.0
      %861 = vmatpush1.msra.mxu0 0.0
      %862 = vmatprep.subr.mxu0 0.0
      %863 = vmatpush1.msra.mxu0 0.0
      %864 = vmatprep.subr.mxu0 0.0
      %865 = vmatpush1.msra.mxu0 0.0
      %866 = vmatprep.subr.mxu0 0.0
      %867 = vmatpush1.msra.mxu0 0.0
      %868 = vmatprep.subr.mxu0 0.0
      %869 = vmatpush1.msra.mxu0 0.0
      %870 = vmatprep.subr.mxu0 0.0
      %871 = vmatpush1.msra.mxu0 0.0
      %872 = vmatprep.subr.mxu0 0.0
      %873 = vmatpush1.msra.mxu0 0.0
      %874 = vmatprep.subr.mxu0 0.0
      %875 = vmatpush1.msra.mxu0 0.0
      %876 = vmatprep.subr.mxu0 0.0
      %877 = vmatpush1.msra.mxu0 0.0
      %878 = vmatprep.subr.mxu0 0.0
      %879 = vmatpush1.msra.mxu0 0.0
      %880 = vmatprep.subr.mxu0 0.0
      %881 = vmatpush1.msra.mxu0 0.0
      %882 = vmatprep.subr.mxu0 0.0
      %883 = vmatpush1.msra.mxu0 0.0
      %884 = vmatprep.mubr.f32.mxu0 0.0
      %885 = vmatmul.mubr.f32.gmra.mrb[0].mxu0 %v364
      %v886 = vpop.f32.mrb[0].mxu0
      %v887 = vadd.f32 0.0, %v886
      %v888 = vpop.f32.mrb[0].mxu0
      %889 = vdwg.mxu0
      %v890 = vadd.f32 %v360, %v887
      %v892 = vsel %vm209, %v804, 0
      %894 = vmatprep.subr.mxu0 0.0
      %895 = vmatpush1.msra.mxu0 %v806
      %896 = vmatprep.subr.mxu0 0.0
      %897 = vmatpush1.msra.mxu0 %v807
      %898 = vmatprep.subr.mxu0 0.0
      %899 = vmatpush1.msra.mxu0 %v808
      %900 = vmatprep.subr.mxu0 0.0
      %901 = vmatpush1.msra.mxu0 %v809
      %902 = vmatprep.subr.mxu0 0.0
      %903 = vmatpush1.msra.mxu0 %v810
      %904 = vmatprep.subr.mxu0 0.0
      %905 = vmatpush1.msra.mxu0 %v811
      %906 = vmatprep.subr.mxu0 0.0
      %907 = vmatpush1.msra.mxu0 %v812
      %908 = vmatprep.subr.mxu0 0.0
      %909 = vmatpush1.msra.mxu0 %v813
      %910 = vmatprep.subr.mxu0 0.0
      %911 = vmatpush1.msra.mxu0 %v814
      %912 = vmatprep.subr.mxu0 0.0
      %913 = vmatpush1.msra.mxu0 %v815
      %914 = vmatprep.subr.mxu0 0.0
      %915 = vmatpush1.msra.mxu0 %v818
      %916 = vmatprep.subr.mxu0 0.0
      %917 = vmatpush1.msra.mxu0 0.0
      %918 = vmatprep.subr.mxu0 0.0
      %919 = vmatpush1.msra.mxu0 0.0
      %920 = vmatprep.subr.mxu0 0.0
      %921 = vmatpush1.msra.mxu0 0.0
      %922 = vmatprep.subr.mxu0 0.0
      %923 = vmatpush1.msra.mxu0 0.0
      %924 = vmatprep.subr.mxu0 0.0
      %925 = vmatpush1.msra.mxu0 0.0
      %926 = vmatprep.subr.mxu0 0.0
      %927 = vmatpush1.msra.mxu0 0.0
      %928 = vmatprep.subr.mxu0 0.0
      %929 = vmatpush1.msra.mxu0 0.0
      %930 = vmatprep.subr.mxu0 0.0
      %931 = vmatpush1.msra.mxu0 0.0
      %932 = vmatprep.subr.mxu0 0.0
      %933 = vmatpush1.msra.mxu0 0.0
      %934 = vmatprep.subr.mxu0 0.0
      %935 = vmatpush1.msra.mxu0 0.0
      %936 = vmatprep.subr.mxu0 0.0
      %937 = vmatpush1.msra.mxu0 0.0
      %938 = vmatprep.subr.mxu0 0.0
      %939 = vmatpush1.msra.mxu0 0.0
      %940 = vmatprep.subr.mxu0 0.0
      %941 = vmatpush1.msra.mxu0 0.0
      %942 = vmatprep.subr.mxu0 0.0
      %943 = vmatpush1.msra.mxu0 0.0
      %944 = vmatprep.subr.mxu0 0.0
      %945 = vmatpush1.msra.mxu0 0.0
      %946 = vmatprep.subr.mxu0 0.0
      %947 = vmatpush1.msra.mxu0 0.0
      %948 = vmatprep.subr.mxu0 0.0
      %949 = vmatpush1.msra.mxu0 0.0
      %950 = vmatprep.subr.mxu0 0.0
      %951 = vmatpush1.msra.mxu0 0.0
      %952 = vmatprep.subr.mxu0 0.0
      %953 = vmatpush1.msra.mxu0 0.0
      %954 = vmatprep.subr.mxu0 0.0
      %955 = vmatpush1.msra.mxu0 0.0
      %956 = vmatprep.subr.mxu0 0.0
      %957 = vmatpush1.msra.mxu0 0.0
      %958 = vmatprep.mubr.f32.mxu0 0.0
      %959 = vmatmul.mubr.f32.gmra.mrb[0].mxu0 %v892
      %v960 = vpop.f32.mrb[0].mxu0
      %v961 = vadd.f32 0.0, %v960
      %v962 = vpop.f32.mrb[0].mxu0
      %963 = vdwg.mxu0
      %v964 = vadd.f32 %v503, %v961
      %s965 = scalar_lea.vmem %s1, 440
      %v966 = vld [vmem:[%s965] sm:$0xff]
      %v967 = vld [vmem:[%s965 + $0x8] sm:$0xff]
      %v968 = vld [vmem:[%s965 + $0x10] sm:$0xff]
      %v969 = vld [vmem:[%s965 + $0x18] sm:$0xff]
      %v970 = vld [vmem:[%s965 + $0x20] sm:$0xff]
      %v971 = vld [vmem:[%s965 + $0x28] sm:$0xff]
      %v972 = vld [vmem:[%s965 + $0x30] sm:$0xff]
      %v973 = vld [vmem:[%s965 + $0x38] sm:$0xff]
      %v974 = vld [vmem:[%s965 + $0x40] sm:$0xff]
      %v975 = vld [vmem:[%s965 + $0x48] sm:$0xff]
      %v976 = vld [vmem:[%s965 + $0x50] sm:$0xf]
      %v978 = vsel %vm213, %v976, 0
      %980 = vmatprep.subr.mxu0 0.0
      %981 = vmatpush1.msra.mxu0 %v966
      %982 = vmatprep.subr.mxu0 0.0
      %983 = vmatpush1.msra.mxu0 %v967
      %984 = vmatprep.subr.mxu0 0.0
      %985 = vmatpush1.msra.mxu0 %v968
      %986 = vmatprep.subr.mxu0 0.0
      %987 = vmatpush1.msra.mxu0 %v969
      %988 = vmatprep.subr.mxu0 0.0
      %989 = vmatpush1.msra.mxu0 %v970
      %990 = vmatprep.subr.mxu0 0.0
      %991 = vmatpush1.msra.mxu0 %v971
      %992 = vmatprep.subr.mxu0 0.0
      %993 = vmatpush1.msra.mxu0 %v972
      %994 = vmatprep.subr.mxu0 0.0
      %995 = vmatpush1.msra.mxu0 %v973
      %996 = vmatprep.subr.mxu0 0.0
      %997 = vmatpush1.msra.mxu0 %v974
      %998 = vmatprep.subr.mxu0 0.0
      %999 = vmatpush1.msra.mxu0 %v975
      %1000 = vmatprep.subr.mxu0 0.0
      %1001 = vmatpush1.msra.mxu0 %v978
      %1002 = vmatprep.subr.mxu0 0.0
      %1003 = vmatpush1.msra.mxu0 0.0
      %1004 = vmatprep.subr.mxu0 0.0
      %1005 = vmatpush1.msra.mxu0 0.0
      %1006 = vmatprep.subr.mxu0 0.0
      %1007 = vmatpush1.msra.mxu0 0.0
      %1008 = vmatprep.subr.mxu0 0.0
      %1009 = vmatpush1.msra.mxu0 0.0
      %1010 = vmatprep.subr.mxu0 0.0
      %1011 = vmatpush1.msra.mxu0 0.0
      %1012 = vmatprep.subr.mxu0 0.0
      %1013 = vmatpush1.msra.mxu0 0.0
      %1014 = vmatprep.subr.mxu0 0.0
      %1015 = vmatpush1.msra.mxu0 0.0
      %1016 = vmatprep.subr.mxu0 0.0
      %1017 = vmatpush1.msra.mxu0 0.0
      %1018 = vmatprep.subr.mxu0 0.0
      %1019 = vmatpush1.msra.mxu0 0.0
      %1020 = vmatprep.subr.mxu0 0.0
      %1021 = vmatpush1.msra.mxu0 0.0
      %1022 = vmatprep.subr.mxu0 0.0
      %1023 = vmatpush1.msra.mxu0 0.0
      %1024 = vmatprep.subr.mxu0 0.0
      %1025 = vmatpush1.msra.mxu0 0.0
      %1026 = vmatprep.subr.mxu0 0.0
      %1027 = vmatpush1.msra.mxu0 0.0
      %1028 = vmatprep.subr.mxu0 0.0
      %1029 = vmatpush1.msra.mxu0 0.0
      %1030 = vmatprep.subr.mxu0 0.0
      %1031 = vmatpush1.msra.mxu0 0.0
      %1032 = vmatprep.subr.mxu0 0.0
      %1033 = vmatpush1.msra.mxu0 0.0
      %1034 = vmatprep.subr.mxu0 0.0
      %1035 = vmatpush1.msra.mxu0 0.0
      %1036 = vmatprep.subr.mxu0 0.0
      %1037 = vmatpush1.msra.mxu0 0.0
      %1038 = vmatprep.subr.mxu0 0.0
      %1039 = vmatpush1.msra.mxu0 0.0
      %1040 = vmatprep.subr.mxu0 0.0
      %1041 = vmatpush1.msra.mxu0 0.0
      %1042 = vmatprep.subr.mxu0 0.0
      %1043 = vmatpush1.msra.mxu0 0.0
      %1044 = vmatprep.mubr.f32.mxu0 0.0
      %1045 = vmatmul.mubr.f32.gmra.mrb[0].mxu0 %v364
      %v1046 = vpop.f32.mrb[0].mxu0
      %v1047 = vadd.f32 0.0, %v1046
      %v1048 = vpop.f32.mrb[0].mxu0
      %1049 = vdwg.mxu0
      %v1050 = vadd.f32 %v661, %v1047
      %1051 = vmatprep.subr.mxu0 0.0
      %1052 = vmatpush1.msra.mxu0 %v966
      %1053 = vmatprep.subr.mxu0 0.0
      %1054 = vmatpush1.msra.mxu0 %v967
      %1055 = vmatprep.subr.mxu0 0.0
      %1056 = vmatpush1.msra.mxu0 %v968
      %1057 = vmatprep.subr.mxu0 0.0
      %1058 = vmatpush1.msra.mxu0 %v969
      %1059 = vmatprep.subr.mxu0 0.0
      %1060 = vmatpush1.msra.mxu0 %v970
      %1061 = vmatprep.subr.mxu0 0.0
      %1062 = vmatpush1.msra.mxu0 %v971
      %1063 = vmatprep.subr.mxu0 0.0
      %1064 = vmatpush1.msra.mxu0 %v972
      %1065 = vmatprep.subr.mxu0 0.0
      %1066 = vmatpush1.msra.mxu0 %v973
      %1067 = vmatprep.subr.mxu0 0.0
      %1068 = vmatpush1.msra.mxu0 %v974
      %1069 = vmatprep.subr.mxu0 0.0
      %1070 = vmatpush1.msra.mxu0 %v975
      %1071 = vmatprep.subr.mxu0 0.0
      %1072 = vmatpush1.msra.mxu0 %v978
      %1073 = vmatprep.subr.mxu0 0.0
      %1074 = vmatpush1.msra.mxu0 0.0
      %1075 = vmatprep.subr.mxu0 0.0
      %1076 = vmatpush1.msra.mxu0 0.0
      %1077 = vmatprep.subr.mxu0 0.0
      %1078 = vmatpush1.msra.mxu0 0.0
      %1079 = vmatprep.subr.mxu0 0.0
      %1080 = vmatpush1.msra.mxu0 0.0
      %1081 = vmatprep.subr.mxu0 0.0
      %1082 = vmatpush1.msra.mxu0 0.0
      %1083 = vmatprep.subr.mxu0 0.0
      %1084 = vmatpush1.msra.mxu0 0.0
      %1085 = vmatprep.subr.mxu0 0.0
      %1086 = vmatpush1.msra.mxu0 0.0
      %1087 = vmatprep.subr.mxu0 0.0
      %1088 = vmatpush1.msra.mxu0 0.0
      %1089 = vmatprep.subr.mxu0 0.0
      %1090 = vmatpush1.msra.mxu0 0.0
      %1091 = vmatprep.subr.mxu0 0.0
      %1092 = vmatpush1.msra.mxu0 0.0
      %1093 = vmatprep.subr.mxu0 0.0
      %1094 = vmatpush1.msra.mxu0 0.0
      %1095 = vmatprep.subr.mxu0 0.0
      %1096 = vmatpush1.msra.mxu0 0.0
      %1097 = vmatprep.subr.mxu0 0.0
      %1098 = vmatpush1.msra.mxu0 0.0
      %1099 = vmatprep.subr.mxu0 0.0
      %1100 = vmatpush1.msra.mxu0 0.0
      %1101 = vmatprep.subr.mxu0 0.0
      %1102 = vmatpush1.msra.mxu0 0.0
      %1103 = vmatprep.subr.mxu0 0.0
      %1104 = vmatpush1.msra.mxu0 0.0
      %1105 = vmatprep.subr.mxu0 0.0
      %1106 = vmatpush1.msra.mxu0 0.0
      %1107 = vmatprep.subr.mxu0 0.0
      %1108 = vmatpush1.msra.mxu0 0.0
      %1109 = vmatprep.subr.mxu0 0.0
      %1110 = vmatpush1.msra.mxu0 0.0
      %1111 = vmatprep.subr.mxu0 0.0
      %1112 = vmatpush1.msra.mxu0 0.0
      %1113 = vmatprep.subr.mxu0 0.0
      %1114 = vmatpush1.msra.mxu0 0.0
      %1115 = vmatprep.mubr.f32.mxu0 0.0
      %1116 = vmatmul.mubr.f32.gmra.mrb[0].mxu0 %v892
      %v1117 = vpop.f32.mrb[0].mxu0
      %v1118 = vadd.f32 0.0, %v1117
      %v1119 = vpop.f32.mrb[0].mxu0
      %1120 = vdwg.mxu0
      %v1121 = vadd.f32 %v801, %v1118
      %v1122 = vld [vmem:[%s164 + $0x2] sm:$0x1f]
      %s1123 = scalar_lea.vmem %s1, 528
      %v1124 = vld [vmem:[%s1123] sm:$0xff]
      %v1125 = vld [vmem:[%s1123 + $0x8] sm:$0xff]
      %v1126 = vld [vmem:[%s1123 + $0x10] sm:$0xff]
      %v1127 = vld [vmem:[%s1123 + $0x18] sm:$0xff]
      %v1128 = vld [vmem:[%s1123 + $0x20] sm:$0xff]
      %v1129 = vld [vmem:[%s1123 + $0x28] sm:$0xff]
      %v1130 = vld [vmem:[%s1123 + $0x30] sm:$0xff]
      %v1131 = vld [vmem:[%s1123 + $0x38] sm:$0xff]
      %v1132 = vld [vmem:[%s1123 + $0x40] sm:$0xff]
      %v1133 = vld [vmem:[%s1123 + $0x48] sm:$0xff]
      %v1134 = vld [vmem:[%s1123 + $0x50] sm:$0xf]
      %v1136 = vsel %vm213, %v1134, 0
      %1138 = vmatprep.subr.mxu0 0.0
      %1139 = vmatpush1.msra.mxu0 %v1124
      %1140 = vmatprep.subr.mxu0 0.0
      %1141 = vmatpush1.msra.mxu0 %v1125
      %1142 = vmatprep.subr.mxu0 0.0
      %1143 = vmatpush1.msra.mxu0 %v1126
      %1144 = vmatprep.subr.mxu0 0.0
      %1145 = vmatpush1.msra.mxu0 %v1127
      %1146 = vmatprep.subr.mxu0 0.0
      %1147 = vmatpush1.msra.mxu0 %v1128
      %1148 = vmatprep.subr.mxu0 0.0
      %1149 = vmatpush1.msra.mxu0 %v1129
      %1150 = vmatprep.subr.mxu0 0.0
      %1151 = vmatpush1.msra.mxu0 %v1130
      %1152 = vmatprep.subr.mxu0 0.0
      %1153 = vmatpush1.msra.mxu0 %v1131
      %1154 = vmatprep.subr.mxu0 0.0
      %1155 = vmatpush1.msra.mxu0 %v1132
      %1156 = vmatprep.subr.mxu0 0.0
      %1157 = vmatpush1.msra.mxu0 %v1133
      %1158 = vmatprep.subr.mxu0 0.0
      %1159 = vmatpush1.msra.mxu0 %v1136
      %1160 = vmatprep.subr.mxu0 0.0
      %1161 = vmatpush1.msra.mxu0 0.0
      %1162 = vmatprep.subr.mxu0 0.0
      %1163 = vmatpush1.msra.mxu0 0.0
      %1164 = vmatprep.subr.mxu0 0.0
      %1165 = vmatpush1.msra.mxu0 0.0
      %1166 = vmatprep.subr.mxu0 0.0
      %1167 = vmatpush1.msra.mxu0 0.0
      %1168 = vmatprep.subr.mxu0 0.0
      %1169 = vmatpush1.msra.mxu0 0.0
      %1170 = vmatprep.subr.mxu0 0.0
      %1171 = vmatpush1.msra.mxu0 0.0
      %1172 = vmatprep.subr.mxu0 0.0
      %1173 = vmatpush1.msra.mxu0 0.0
      %1174 = vmatprep.subr.mxu0 0.0
      %1175 = vmatpush1.msra.mxu0 0.0
      %1176 = vmatprep.subr.mxu0 0.0
      %1177 = vmatpush1.msra.mxu0 0.0
      %1178 = vmatprep.subr.mxu0 0.0
      %1179 = vmatpush1.msra.mxu0 0.0
      %1180 = vmatprep.subr.mxu0 0.0
      %1181 = vmatpush1.msra.mxu0 0.0
      %1182 = vmatprep.subr.mxu0 0.0
      %1183 = vmatpush1.msra.mxu0 0.0
      %1184 = vmatprep.subr.mxu0 0.0
      %1185 = vmatpush1.msra.mxu0 0.0
      %1186 = vmatprep.subr.mxu0 0.0
      %1187 = vmatpush1.msra.mxu0 0.0
      %1188 = vmatprep.subr.mxu0 0.0
      %1189 = vmatpush1.msra.mxu0 0.0
      %1190 = vmatprep.subr.mxu0 0.0
      %1191 = vmatpush1.msra.mxu0 0.0
      %1192 = vmatprep.subr.mxu0 0.0
      %1193 = vmatpush1.msra.mxu0 0.0
      %1194 = vmatprep.subr.mxu0 0.0
      %1195 = vmatpush1.msra.mxu0 0.0
      %1196 = vmatprep.subr.mxu0 0.0
      %1197 = vmatpush1.msra.mxu0 0.0
      %1198 = vmatprep.subr.mxu0 0.0
      %1199 = vmatpush1.msra.mxu0 0.0
      %1200 = vmatprep.subr.mxu0 0.0
      %1201 = vmatpush1.msra.mxu0 0.0
      %1202 = vmatprep.mubr.f32.mxu0 0.0
      %1203 = vmatmul.mubr.f32.gmra.mrb[0].mxu0 %v892
      %v1204 = vpop.f32.mrb[0].mxu0
      %v1205 = vadd.f32 0.0, %v1204
      %v1206 = vpop.f32.mrb[0].mxu0
      %1207 = vdwg.mxu0
      %v1208 = vadd.f32 %v890, %v1205
      %v1210 = vsel %vm209, %v1122, 0
      %1212 = vmatprep.subr.mxu0 0.0
      %1213 = vmatpush1.msra.mxu0 %v1124
      %1214 = vmatprep.subr.mxu0 0.0
      %1215 = vmatpush1.msra.mxu0 %v1125
      %1216 = vmatprep.subr.mxu0 0.0
      %1217 = vmatpush1.msra.mxu0 %v1126
      %1218 = vmatprep.subr.mxu0 0.0
      %1219 = vmatpush1.msra.mxu0 %v1127
      %1220 = vmatprep.subr.mxu0 0.0
      %1221 = vmatpush1.msra.mxu0 %v1128
      %1222 = vmatprep.subr.mxu0 0.0
      %1223 = vmatpush1.msra.mxu0 %v1129
      %1224 = vmatprep.subr.mxu0 0.0
      %1225 = vmatpush1.msra.mxu0 %v1130
      %1226 = vmatprep.subr.mxu0 0.0
      %1227 = vmatpush1.msra.mxu0 %v1131
      %1228 = vmatprep.subr.mxu0 0.0
      %1229 = vmatpush1.msra.mxu0 %v1132
      %1230 = vmatprep.subr.mxu0 0.0
      %1231 = vmatpush1.msra.mxu0 %v1133
      %1232 = vmatprep.subr.mxu0 0.0
      %1233 = vmatpush1.msra.mxu0 %v1136
      %1234 = vmatprep.subr.mxu0 0.0
      %1235 = vmatpush1.msra.mxu0 0.0
      %1236 = vmatprep.subr.mxu0 0.0
      %1237 = vmatpush1.msra.mxu0 0.0
      %1238 = vmatprep.subr.mxu0 0.0
      %1239 = vmatpush1.msra.mxu0 0.0
      %1240 = vmatprep.subr.mxu0 0.0
      %1241 = vmatpush1.msra.mxu0 0.0
      %1242 = vmatprep.subr.mxu0 0.0
      %1243 = vmatpush1.msra.mxu0 0.0
      %1244 = vmatprep.subr.mxu0 0.0
      %1245 = vmatpush1.msra.mxu0 0.0
      %1246 = vmatprep.subr.mxu0 0.0
      %1247 = vmatpush1.msra.mxu0 0.0
      %1248 = vmatprep.subr.mxu0 0.0
      %1249 = vmatpush1.msra.mxu0 0.0
      %1250 = vmatprep.subr.mxu0 0.0
      %1251 = vmatpush1.msra.mxu0 0.0
      %1252 = vmatprep.subr.mxu0 0.0
      %1253 = vmatpush1.msra.mxu0 0.0
      %1254 = vmatprep.subr.mxu0 0.0
      %1255 = vmatpush1.msra.mxu0 0.0
      %1256 = vmatprep.subr.mxu0 0.0
      %1257 = vmatpush1.msra.mxu0 0.0
      %1258 = vmatprep.subr.mxu0 0.0
      %1259 = vmatpush1.msra.mxu0 0.0
      %1260 = vmatprep.subr.mxu0 0.0
      %1261 = vmatpush1.msra.mxu0 0.0
      %1262 = vmatprep.subr.mxu0 0.0
      %1263 = vmatpush1.msra.mxu0 0.0
      %1264 = vmatprep.subr.mxu0 0.0
      %1265 = vmatpush1.msra.mxu0 0.0
      %1266 = vmatprep.subr.mxu0 0.0
      %1267 = vmatpush1.msra.mxu0 0.0
      %1268 = vmatprep.subr.mxu0 0.0
      %1269 = vmatpush1.msra.mxu0 0.0
      %1270 = vmatprep.subr.mxu0 0.0
      %1271 = vmatpush1.msra.mxu0 0.0
      %1272 = vmatprep.subr.mxu0 0.0
      %1273 = vmatpush1.msra.mxu0 0.0
      %1274 = vmatprep.subr.mxu0 0.0
      %1275 = vmatpush1.msra.mxu0 0.0
      %1276 = vmatprep.mubr.f32.mxu0 0.0
      %1277 = vmatmul.mubr.f32.gmra.mrb[0].mxu0 %v1210
      %v1278 = vpop.f32.mrb[0].mxu0
      %v1279 = vadd.f32 0.0, %v1278
      %v1280 = vpop.f32.mrb[0].mxu0
      %1281 = vdwg.mxu0
      %v1282 = vadd.f32 %v964, %v1279
      %s1283 = scalar_lea.vmem %s1, 616
      %v1284 = vld [vmem:[%s1283] sm:$0xff]
      %v1285 = vld [vmem:[%s1283 + $0x8] sm:$0xff]
      %v1286 = vld [vmem:[%s1283 + $0x10] sm:$0xff]
      %v1287 = vld [vmem:[%s1283 + $0x18] sm:$0xff]
      %v1288 = vld [vmem:[%s1283 + $0x20] sm:$0xff]
      %v1289 = vld [vmem:[%s1283 + $0x28] sm:$0xff]
      %v1290 = vld [vmem:[%s1283 + $0x30] sm:$0xff]
      %v1291 = vld [vmem:[%s1283 + $0x38] sm:$0xff]
      %v1292 = vld [vmem:[%s1283 + $0x40] sm:$0xff]
      %v1293 = vld [vmem:[%s1283 + $0x48] sm:$0xff]
      %v1294 = vld [vmem:[%s1283 + $0x50] sm:$0xf]
      %v1296 = vsel %vm213, %v1294, 0
      %1298 = vmatprep.subr.mxu0 0.0
      %1299 = vmatpush1.msra.mxu0 %v1284
      %1300 = vmatprep.subr.mxu0 0.0
      %1301 = vmatpush1.msra.mxu0 %v1285
      %1302 = vmatprep.subr.mxu0 0.0
      %1303 = vmatpush1.msra.mxu0 %v1286
      %1304 = vmatprep.subr.mxu0 0.0
      %1305 = vmatpush1.msra.mxu0 %v1287
      %1306 = vmatprep.subr.mxu0 0.0
      %1307 = vmatpush1.msra.mxu0 %v1288
      %1308 = vmatprep.subr.mxu0 0.0
      %1309 = vmatpush1.msra.mxu0 %v1289
      %1310 = vmatprep.subr.mxu0 0.0
      %1311 = vmatpush1.msra.mxu0 %v1290
      %1312 = vmatprep.subr.mxu0 0.0
      %1313 = vmatpush1.msra.mxu0 %v1291
      %1314 = vmatprep.subr.mxu0 0.0
      %1315 = vmatpush1.msra.mxu0 %v1292
      %1316 = vmatprep.subr.mxu0 0.0
      %1317 = vmatpush1.msra.mxu0 %v1293
      %1318 = vmatprep.subr.mxu0 0.0
      %1319 = vmatpush1.msra.mxu0 %v1296
      %1320 = vmatprep.subr.mxu0 0.0
      %1321 = vmatpush1.msra.mxu0 0.0
      %1322 = vmatprep.subr.mxu0 0.0
      %1323 = vmatpush1.msra.mxu0 0.0
      %1324 = vmatprep.subr.mxu0 0.0
      %1325 = vmatpush1.msra.mxu0 0.0
      %1326 = vmatprep.subr.mxu0 0.0
      %1327 = vmatpush1.msra.mxu0 0.0
      %1328 = vmatprep.subr.mxu0 0.0
      %1329 = vmatpush1.msra.mxu0 0.0
      %1330 = vmatprep.subr.mxu0 0.0
      %1331 = vmatpush1.msra.mxu0 0.0
      %1332 = vmatprep.subr.mxu0 0.0
      %1333 = vmatpush1.msra.mxu0 0.0
      %1334 = vmatprep.subr.mxu0 0.0
      %1335 = vmatpush1.msra.mxu0 0.0
      %1336 = vmatprep.subr.mxu0 0.0
      %1337 = vmatpush1.msra.mxu0 0.0
      %1338 = vmatprep.subr.mxu0 0.0
      %1339 = vmatpush1.msra.mxu0 0.0
      %1340 = vmatprep.subr.mxu0 0.0
      %1341 = vmatpush1.msra.mxu0 0.0
      %1342 = vmatprep.subr.mxu0 0.0
      %1343 = vmatpush1.msra.mxu0 0.0
      %1344 = vmatprep.subr.mxu0 0.0
      %1345 = vmatpush1.msra.mxu0 0.0
      %1346 = vmatprep.subr.mxu0 0.0
      %1347 = vmatpush1.msra.mxu0 0.0
      %1348 = vmatprep.subr.mxu0 0.0
      %1349 = vmatpush1.msra.mxu0 0.0
      %1350 = vmatprep.subr.mxu0 0.0
      %1351 = vmatpush1.msra.mxu0 0.0
      %1352 = vmatprep.subr.mxu0 0.0
      %1353 = vmatpush1.msra.mxu0 0.0
      %1354 = vmatprep.subr.mxu0 0.0
      %1355 = vmatpush1.msra.mxu0 0.0
      %1356 = vmatprep.subr.mxu0 0.0
      %1357 = vmatpush1.msra.mxu0 0.0
      %1358 = vmatprep.subr.mxu0 0.0
      %1359 = vmatpush1.msra.mxu0 0.0
      %1360 = vmatprep.subr.mxu0 0.0
      %1361 = vmatpush1.msra.mxu0 0.0
      %1362 = vmatprep.mubr.f32.mxu0 0.0
      %1363 = vmatmul.mubr.f32.gmra.mrb[0].mxu0 %v892
      %v1364 = vpop.f32.mrb[0].mxu0
      %v1365 = vadd.f32 0.0, %v1364
      %v1366 = vpop.f32.mrb[0].mxu0
      %1367 = vdwg.mxu0
      %v1368 = vadd.f32 %v1050, %v1365
      %1369 = vmatprep.subr.mxu0 0.0
      %1370 = vmatpush1.msra.mxu0 %v1284
      %1371 = vmatprep.subr.mxu0 0.0
      %1372 = vmatpush1.msra.mxu0 %v1285
      %1373 = vmatprep.subr.mxu0 0.0
      %1374 = vmatpush1.msra.mxu0 %v1286
      %1375 = vmatprep.subr.mxu0 0.0
      %1376 = vmatpush1.msra.mxu0 %v1287
      %1377 = vmatprep.subr.mxu0 0.0
      %1378 = vmatpush1.msra.mxu0 %v1288
      %1379 = vmatprep.subr.mxu0 0.0
      %1380 = vmatpush1.msra.mxu0 %v1289
      %1381 = vmatprep.subr.mxu0 0.0
      %1382 = vmatpush1.msra.mxu0 %v1290
      %1383 = vmatprep.subr.mxu0 0.0
      %1384 = vmatpush1.msra.mxu0 %v1291
      %1385 = vmatprep.subr.mxu0 0.0
      %1386 = vmatpush1.msra.mxu0 %v1292
      %1387 = vmatprep.subr.mxu0 0.0
      %1388 = vmatpush1.msra.mxu0 %v1293
      %1389 = vmatprep.subr.mxu0 0.0
      %1390 = vmatpush1.msra.mxu0 %v1296
      %1391 = vmatprep.subr.mxu0 0.0
      %1392 = vmatpush1.msra.mxu0 0.0
      %1393 = vmatprep.subr.mxu0 0.0
      %1394 = vmatpush1.msra.mxu0 0.0
      %1395 = vmatprep.subr.mxu0 0.0
      %1396 = vmatpush1.msra.mxu0 0.0
      %1397 = vmatprep.subr.mxu0 0.0
      %1398 = vmatpush1.msra.mxu0 0.0
      %1399 = vmatprep.subr.mxu0 0.0
      %1400 = vmatpush1.msra.mxu0 0.0
      %1401 = vmatprep.subr.mxu0 0.0
      %1402 = vmatpush1.msra.mxu0 0.0
      %1403 = vmatprep.subr.mxu0 0.0
      %1404 = vmatpush1.msra.mxu0 0.0
      %1405 = vmatprep.subr.mxu0 0.0
      %1406 = vmatpush1.msra.mxu0 0.0
      %1407 = vmatprep.subr.mxu0 0.0
      %1408 = vmatpush1.msra.mxu0 0.0
      %1409 = vmatprep.subr.mxu0 0.0
      %1410 = vmatpush1.msra.mxu0 0.0
      %1411 = vmatprep.subr.mxu0 0.0
      %1412 = vmatpush1.msra.mxu0 0.0
      %1413 = vmatprep.subr.mxu0 0.0
      %1414 = vmatpush1.msra.mxu0 0.0
      %1415 = vmatprep.subr.mxu0 0.0
      %1416 = vmatpush1.msra.mxu0 0.0
      %1417 = vmatprep.subr.mxu0 0.0
      %1418 = vmatpush1.msra.mxu0 0.0
      %1419 = vmatprep.subr.mxu0 0.0
      %1420 = vmatpush1.msra.mxu0 0.0
      %1421 = vmatprep.subr.mxu0 0.0
      %1422 = vmatpush1.msra.mxu0 0.0
      %1423 = vmatprep.subr.mxu0 0.0
      %1424 = vmatpush1.msra.mxu0 0.0
      %1425 = vmatprep.subr.mxu0 0.0
      %1426 = vmatpush1.msra.mxu0 0.0
      %1427 = vmatprep.subr.mxu0 0.0
      %1428 = vmatpush1.msra.mxu0 0.0
      %1429 = vmatprep.subr.mxu0 0.0
      %1430 = vmatpush1.msra.mxu0 0.0
      %1431 = vmatprep.subr.mxu0 0.0
      %1432 = vmatpush1.msra.mxu0 0.0
      %1433 = vmatprep.mubr.f32.mxu0 0.0
      %1434 = vmatmul.mubr.f32.gmra.mrb[0].mxu0 %v1210
      %v1435 = vpop.f32.mrb[0].mxu0
      %v1436 = vadd.f32 0.0, %v1435
      %v1437 = vpop.f32.mrb[0].mxu0
      %1438 = vdwg.mxu0
      %v1439 = vadd.f32 %v1121, %v1436
      %v1440 = vld [vmem:[%s171 + $0x2] sm:$0x1f]
      %s1441 = scalar_lea.vmem %s1, 704
      %v1442 = vld [vmem:[%s1441] sm:$0xff]
      %v1443 = vld [vmem:[%s1441 + $0x8] sm:$0xff]
      %v1444 = vld [vmem:[%s1441 + $0x10] sm:$0xff]
      %v1445 = vld [vmem:[%s1441 + $0x18] sm:$0xff]
      %v1446 = vld [vmem:[%s1441 + $0x20] sm:$0xff]
      %v1447 = vld [vmem:[%s1441 + $0x28] sm:$0xff]
      %v1448 = vld [vmem:[%s1441 + $0x30] sm:$0xff]
      %v1449 = vld [vmem:[%s1441 + $0x38] sm:$0xff]
      %v1450 = vld [vmem:[%s1441 + $0x40] sm:$0xff]
      %v1451 = vld [vmem:[%s1441 + $0x48] sm:$0xff]
      %v1452 = vld [vmem:[%s1441 + $0x50] sm:$0xf]
      %v1454 = vsel %vm213, %v1452, 0
      %1456 = vmatprep.subr.mxu0 0.0
      %1457 = vmatpush1.msra.mxu0 %v1442
      %1458 = vmatprep.subr.mxu0 0.0
      %1459 = vmatpush1.msra.mxu0 %v1443
      %1460 = vmatprep.subr.mxu0 0.0
      %1461 = vmatpush1.msra.mxu0 %v1444
      %1462 = vmatprep.subr.mxu0 0.0
      %1463 = vmatpush1.msra.mxu0 %v1445
      %1464 = vmatprep.subr.mxu0 0.0
      %1465 = vmatpush1.msra.mxu0 %v1446
      %1466 = vmatprep.subr.mxu0 0.0
      %1467 = vmatpush1.msra.mxu0 %v1447
      %1468 = vmatprep.subr.mxu0 0.0
      %1469 = vmatpush1.msra.mxu0 %v1448
      %1470 = vmatprep.subr.mxu0 0.0
      %1471 = vmatpush1.msra.mxu0 %v1449
      %1472 = vmatprep.subr.mxu0 0.0
      %1473 = vmatpush1.msra.mxu0 %v1450
      %1474 = vmatprep.subr.mxu0 0.0
      %1475 = vmatpush1.msra.mxu0 %v1451
      %1476 = vmatprep.subr.mxu0 0.0
      %1477 = vmatpush1.msra.mxu0 %v1454
      %1478 = vmatprep.subr.mxu0 0.0
      %1479 = vmatpush1.msra.mxu0 0.0
      %1480 = vmatprep.subr.mxu0 0.0
      %1481 = vmatpush1.msra.mxu0 0.0
      %1482 = vmatprep.subr.mxu0 0.0
      %1483 = vmatpush1.msra.mxu0 0.0
      %1484 = vmatprep.subr.mxu0 0.0
      %1485 = vmatpush1.msra.mxu0 0.0
      %1486 = vmatprep.subr.mxu0 0.0
      %1487 = vmatpush1.msra.mxu0 0.0
      %1488 = vmatprep.subr.mxu0 0.0
      %1489 = vmatpush1.msra.mxu0 0.0
      %1490 = vmatprep.subr.mxu0 0.0
      %1491 = vmatpush1.msra.mxu0 0.0
      %1492 = vmatprep.subr.mxu0 0.0
      %1493 = vmatpush1.msra.mxu0 0.0
      %1494 = vmatprep.subr.mxu0 0.0
      %1495 = vmatpush1.msra.mxu0 0.0
      %1496 = vmatprep.subr.mxu0 0.0
      %1497 = vmatpush1.msra.mxu0 0.0
      %1498 = vmatprep.subr.mxu0 0.0
      %1499 = vmatpush1.msra.mxu0 0.0
      %1500 = vmatprep.subr.mxu0 0.0
      %1501 = vmatpush1.msra.mxu0 0.0
      %1502 = vmatprep.subr.mxu0 0.0
      %1503 = vmatpush1.msra.mxu0 0.0
      %1504 = vmatprep.subr.mxu0 0.0
      %1505 = vmatpush1.msra.mxu0 0.0
      %1506 = vmatprep.subr.mxu0 0.0
      %1507 = vmatpush1.msra.mxu0 0.0
      %1508 = vmatprep.subr.mxu0 0.0
      %1509 = vmatpush1.msra.mxu0 0.0
      %1510 = vmatprep.subr.mxu0 0.0
      %1511 = vmatpush1.msra.mxu0 0.0
      %1512 = vmatprep.subr.mxu0 0.0
      %1513 = vmatpush1.msra.mxu0 0.0
      %1514 = vmatprep.subr.mxu0 0.0
      %1515 = vmatpush1.msra.mxu0 0.0
      %1516 = vmatprep.subr.mxu0 0.0
      %1517 = vmatpush1.msra.mxu0 0.0
      %1518 = vmatprep.subr.mxu0 0.0
      %1519 = vmatpush1.msra.mxu0 0.0
      %1520 = vmatprep.mubr.f32.mxu0 0.0
      %1521 = vmatmul.mubr.f32.gmra.mrb[0].mxu0 %v1210
      %v1522 = vpop.f32.mrb[0].mxu0
      %v1523 = vadd.f32 0.0, %v1522
      %v1524 = vpop.f32.mrb[0].mxu0
      %1525 = vdwg.mxu0
      %v1526 = vadd.f32 %v1208, %v1523
      %v1528 = vsel %vm209, %v1440, 0
      %1530 = vmatprep.subr.mxu0 0.0
      %1531 = vmatpush1.msra.mxu0 %v1442
      %1532 = vmatprep.subr.mxu0 0.0
      %1533 = vmatpush1.msra.mxu0 %v1443
      %1534 = vmatprep.subr.mxu0 0.0
      %1535 = vmatpush1.msra.mxu0 %v1444
      %1536 = vmatprep.subr.mxu0 0.0
      %1537 = vmatpush1.msra.mxu0 %v1445
      %1538 = vmatprep.subr.mxu0 0.0
      %1539 = vmatpush1.msra.mxu0 %v1446
      %1540 = vmatprep.subr.mxu0 0.0
      %1541 = vmatpush1.msra.mxu0 %v1447
      %1542 = vmatprep.subr.mxu0 0.0
      %1543 = vmatpush1.msra.mxu0 %v1448
      %1544 = vmatprep.subr.mxu0 0.0
      %1545 = vmatpush1.msra.mxu0 %v1449
      %1546 = vmatprep.subr.mxu0 0.0
      %1547 = vmatpush1.msra.mxu0 %v1450
      %1548 = vmatprep.subr.mxu0 0.0
      %1549 = vmatpush1.msra.mxu0 %v1451
      %1550 = vmatprep.subr.mxu0 0.0
      %1551 = vmatpush1.msra.mxu0 %v1454
      %1552 = vmatprep.subr.mxu0 0.0
      %1553 = vmatpush1.msra.mxu0 0.0
      %1554 = vmatprep.subr.mxu0 0.0
      %1555 = vmatpush1.msra.mxu0 0.0
      %1556 = vmatprep.subr.mxu0 0.0
      %1557 = vmatpush1.msra.mxu0 0.0
      %1558 = vmatprep.subr.mxu0 0.0
      %1559 = vmatpush1.msra.mxu0 0.0
      %1560 = vmatprep.subr.mxu0 0.0
      %1561 = vmatpush1.msra.mxu0 0.0
      %1562 = vmatprep.subr.mxu0 0.0
      %1563 = vmatpush1.msra.mxu0 0.0
      %1564 = vmatprep.subr.mxu0 0.0
      %1565 = vmatpush1.msra.mxu0 0.0
      %1566 = vmatprep.subr.mxu0 0.0
      %1567 = vmatpush1.msra.mxu0 0.0
      %1568 = vmatprep.subr.mxu0 0.0
      %1569 = vmatpush1.msra.mxu0 0.0
      %1570 = vmatprep.subr.mxu0 0.0
      %1571 = vmatpush1.msra.mxu0 0.0
      %1572 = vmatprep.subr.mxu0 0.0
      %1573 = vmatpush1.msra.mxu0 0.0
      %1574 = vmatprep.subr.mxu0 0.0
      %1575 = vmatpush1.msra.mxu0 0.0
      %1576 = vmatprep.subr.mxu0 0.0
      %1577 = vmatpush1.msra.mxu0 0.0
      %1578 = vmatprep.subr.mxu0 0.0
      %1579 = vmatpush1.msra.mxu0 0.0
      %1580 = vmatprep.subr.mxu0 0.0
      %1581 = vmatpush1.msra.mxu0 0.0
      %1582 = vmatprep.subr.mxu0 0.0
      %1583 = vmatpush1.msra.mxu0 0.0
      %1584 = vmatprep.subr.mxu0 0.0
      %1585 = vmatpush1.msra.mxu0 0.0
      %1586 = vmatprep.subr.mxu0 0.0
      %1587 = vmatpush1.msra.mxu0 0.0
      %1588 = vmatprep.subr.mxu0 0.0
      %1589 = vmatpush1.msra.mxu0 0.0
      %1590 = vmatprep.subr.mxu0 0.0
      %1591 = vmatpush1.msra.mxu0 0.0
      %1592 = vmatprep.subr.mxu0 0.0
      %1593 = vmatpush1.msra.mxu0 0.0
      %1594 = vmatprep.mubr.f32.mxu0 0.0
      %1595 = vmatmul.mubr.f32.gmra.mrb[0].mxu0 %v1528
      %v1596 = vpop.f32.mrb[0].mxu0
      %v1597 = vadd.f32 0.0, %v1596
      %v1598 = vpop.f32.mrb[0].mxu0
      %1599 = vdwg.mxu0
      %v1600 = vadd.f32 %v1282, %v1597
      %s1601 = scalar_lea.vmem %s1, 792
      %v1602 = vld [vmem:[%s1601] sm:$0xff]
      %v1603 = vld [vmem:[%s1601 + $0x8] sm:$0xff]
      %v1604 = vld [vmem:[%s1601 + $0x10] sm:$0xff]
      %v1605 = vld [vmem:[%s1601 + $0x18] sm:$0xff]
      %v1606 = vld [vmem:[%s1601 + $0x20] sm:$0xff]
      %v1607 = vld [vmem:[%s1601 + $0x28] sm:$0xff]
      %v1608 = vld [vmem:[%s1601 + $0x30] sm:$0xff]
      %v1609 = vld [vmem:[%s1601 + $0x38] sm:$0xff]
      %v1610 = vld [vmem:[%s1601 + $0x40] sm:$0xff]
      %v1611 = vld [vmem:[%s1601 + $0x48] sm:$0xff]
      %v1612 = vld [vmem:[%s1601 + $0x50] sm:$0xf]
      %v1614 = vsel %vm213, %v1612, 0
      %1616 = vmatprep.subr.mxu0 0.0
      %1617 = vmatpush1.msra.mxu0 %v1602
      %1618 = vmatprep.subr.mxu0 0.0
      %1619 = vmatpush1.msra.mxu0 %v1603
      %1620 = vmatprep.subr.mxu0 0.0
      %1621 = vmatpush1.msra.mxu0 %v1604
      %1622 = vmatprep.subr.mxu0 0.0
      %1623 = vmatpush1.msra.mxu0 %v1605
      %1624 = vmatprep.subr.mxu0 0.0
      %1625 = vmatpush1.msra.mxu0 %v1606
      %1626 = vmatprep.subr.mxu0 0.0
      %1627 = vmatpush1.msra.mxu0 %v1607
      %1628 = vmatprep.subr.mxu0 0.0
      %1629 = vmatpush1.msra.mxu0 %v1608
      %1630 = vmatprep.subr.mxu0 0.0
      %1631 = vmatpush1.msra.mxu0 %v1609
      %1632 = vmatprep.subr.mxu0 0.0
      %1633 = vmatpush1.msra.mxu0 %v1610
      %1634 = vmatprep.subr.mxu0 0.0
      %1635 = vmatpush1.msra.mxu0 %v1611
      %1636 = vmatprep.subr.mxu0 0.0
      %1637 = vmatpush1.msra.mxu0 %v1614
      %1638 = vmatprep.subr.mxu0 0.0
      %1639 = vmatpush1.msra.mxu0 0.0
      %1640 = vmatprep.subr.mxu0 0.0
      %1641 = vmatpush1.msra.mxu0 0.0
      %1642 = vmatprep.subr.mxu0 0.0
      %1643 = vmatpush1.msra.mxu0 0.0
      %1644 = vmatprep.subr.mxu0 0.0
      %1645 = vmatpush1.msra.mxu0 0.0
      %1646 = vmatprep.subr.mxu0 0.0
      %1647 = vmatpush1.msra.mxu0 0.0
      %1648 = vmatprep.subr.mxu0 0.0
      %1649 = vmatpush1.msra.mxu0 0.0
      %1650 = vmatprep.subr.mxu0 0.0
      %1651 = vmatpush1.msra.mxu0 0.0
      %1652 = vmatprep.subr.mxu0 0.0
      %1653 = vmatpush1.msra.mxu0 0.0
      %1654 = vmatprep.subr.mxu0 0.0
      %1655 = vmatpush1.msra.mxu0 0.0
      %1656 = vmatprep.subr.mxu0 0.0
      %1657 = vmatpush1.msra.mxu0 0.0
      %1658 = vmatprep.subr.mxu0 0.0
      %1659 = vmatpush1.msra.mxu0 0.0
      %1660 = vmatprep.subr.mxu0 0.0
      %1661 = vmatpush1.msra.mxu0 0.0
      %1662 = vmatprep.subr.mxu0 0.0
      %1663 = vmatpush1.msra.mxu0 0.0
      %1664 = vmatprep.subr.mxu0 0.0
      %1665 = vmatpush1.msra.mxu0 0.0
      %1666 = vmatprep.subr.mxu0 0.0
      %1667 = vmatpush1.msra.mxu0 0.0
      %1668 = vmatprep.subr.mxu0 0.0
      %1669 = vmatpush1.msra.mxu0 0.0
      %1670 = vmatprep.subr.mxu0 0.0
      %1671 = vmatpush1.msra.mxu0 0.0
      %1672 = vmatprep.subr.mxu0 0.0
      %1673 = vmatpush1.msra.mxu0 0.0
      %1674 = vmatprep.subr.mxu0 0.0
      %1675 = vmatpush1.msra.mxu0 0.0
      %1676 = vmatprep.subr.mxu0 0.0
      %1677 = vmatpush1.msra.mxu0 0.0
      %1678 = vmatprep.subr.mxu0 0.0
      %1679 = vmatpush1.msra.mxu0 0.0
      %1680 = vmatprep.mubr.f32.mxu0 0.0
      %1681 = vmatmul.mubr.f32.gmra.mrb[0].mxu0 %v1210
      %v1682 = vpop.f32.mrb[0].mxu0
      %v1683 = vadd.f32 0.0, %v1682
      %v1684 = vpop.f32.mrb[0].mxu0
      %1685 = vdwg.mxu0
      %v1686 = vadd.f32 %v1368, %v1683
      %1687 = vmatprep.subr.mxu0 0.0
      %1688 = vmatpush1.msra.mxu0 %v1602
      %1689 = vmatprep.subr.mxu0 0.0
      %1690 = vmatpush1.msra.mxu0 %v1603
      %1691 = vmatprep.subr.mxu0 0.0
      %1692 = vmatpush1.msra.mxu0 %v1604
      %1693 = vmatprep.subr.mxu0 0.0
      %1694 = vmatpush1.msra.mxu0 %v1605
      %1695 = vmatprep.subr.mxu0 0.0
      %1696 = vmatpush1.msra.mxu0 %v1606
      %1697 = vmatprep.subr.mxu0 0.0
      %1698 = vmatpush1.msra.mxu0 %v1607
      %1699 = vmatprep.subr.mxu0 0.0
      %1700 = vmatpush1.msra.mxu0 %v1608
      %1701 = vmatprep.subr.mxu0 0.0
      %1702 = vmatpush1.msra.mxu0 %v1609
      %1703 = vmatprep.subr.mxu0 0.0
      %1704 = vmatpush1.msra.mxu0 %v1610
      %1705 = vmatprep.subr.mxu0 0.0
      %1706 = vmatpush1.msra.mxu0 %v1611
      %1707 = vmatprep.subr.mxu0 0.0
      %1708 = vmatpush1.msra.mxu0 %v1614
      %1709 = vmatprep.subr.mxu0 0.0
      %1710 = vmatpush1.msra.mxu0 0.0
      %1711 = vmatprep.subr.mxu0 0.0
      %1712 = vmatpush1.msra.mxu0 0.0
      %1713 = vmatprep.subr.mxu0 0.0
      %1714 = vmatpush1.msra.mxu0 0.0
      %1715 = vmatprep.subr.mxu0 0.0
      %1716 = vmatpush1.msra.mxu0 0.0
      %1717 = vmatprep.subr.mxu0 0.0
      %1718 = vmatpush1.msra.mxu0 0.0
      %1719 = vmatprep.subr.mxu0 0.0
      %1720 = vmatpush1.msra.mxu0 0.0
      %1721 = vmatprep.subr.mxu0 0.0
      %1722 = vmatpush1.msra.mxu0 0.0
      %1723 = vmatprep.subr.mxu0 0.0
      %1724 = vmatpush1.msra.mxu0 0.0
      %1725 = vmatprep.subr.mxu0 0.0
      %1726 = vmatpush1.msra.mxu0 0.0
      %1727 = vmatprep.subr.mxu0 0.0
      %1728 = vmatpush1.msra.mxu0 0.0
      %1729 = vmatprep.subr.mxu0 0.0
      %1730 = vmatpush1.msra.mxu0 0.0
      %1731 = vmatprep.subr.mxu0 0.0
      %1732 = vmatpush1.msra.mxu0 0.0
      %1733 = vmatprep.subr.mxu0 0.0
      %1734 = vmatpush1.msra.mxu0 0.0
      %1735 = vmatprep.subr.mxu0 0.0
      %1736 = vmatpush1.msra.mxu0 0.0
      %1737 = vmatprep.subr.mxu0 0.0
      %1738 = vmatpush1.msra.mxu0 0.0
      %1739 = vmatprep.subr.mxu0 0.0
      %1740 = vmatpush1.msra.mxu0 0.0
      %1741 = vmatprep.subr.mxu0 0.0
      %1742 = vmatpush1.msra.mxu0 0.0
      %1743 = vmatprep.subr.mxu0 0.0
      %1744 = vmatpush1.msra.mxu0 0.0
      %1745 = vmatprep.subr.mxu0 0.0
      %1746 = vmatpush1.msra.mxu0 0.0
      %1747 = vmatprep.subr.mxu0 0.0
      %1748 = vmatpush1.msra.mxu0 0.0
      %1749 = vmatprep.subr.mxu0 0.0
      %1750 = vmatpush1.msra.mxu0 0.0
      %1751 = vmatprep.mubr.f32.mxu0 0.0
      %1752 = vmatmul.mubr.f32.gmra.mrb[0].mxu0 %v1528
      %v1753 = vpop.f32.mrb[0].mxu0
      %v1754 = vadd.f32 0.0, %v1753
      %v1755 = vpop.f32.mrb[0].mxu0
      %1756 = vdwg.mxu0
      %v1757 = vadd.f32 %v1439, %v1754
      %v1759 = vlaneseq
      %v1760 = vshrl.u32 %v1759, 7
      %v1761 = vsub.s32 0, %v1760
      %v1762 = vrot.slane %v169, %v1761
      %v1764 = vadd.f32 %v1526, %v1762
      %v1765 = vmax.f32 %v1764, 0.0
      %v1766 = vadd.f32 %v1686, %v1762
      %v1767 = vmax.f32 %v1766, 0.0
      %v1768 = vmax.f32 %v1765, %v1767
      %v1769 = vadd.f32 %v1600, %v1762
      %v1770 = vmax.f32 %v1769, 0.0
      %v1771 = vmax.f32 %v1768, %v1770
      %v1772 = vadd.f32 %v1757, %v1762
      %v1773 = vmax.f32 %v1772, 0.0
      %v1774 = vmax.f32 %v1771, %v1773
      %vm1775 = vcmask 651264
      %1776 = vst.msk [vmem:[%s168] sm:$0x1f] %vm1775, %v1774
      %p1777 = scmp.lt.s32.totalorder %s14, 1
      %s1778 = scalar_select %p1777, %s14, 1
      %s1779 = smul.addr %s1778, 8
      %s1780 = scalar_lea.vmem %s3, %s1779
      // Predicated region
      $region33: #{cnn_cifar_forward.4} parent=31 // pred_check
        %p1781 = pneg %p100
      $region34: #{cnn_cifar_forward.4} parent=31 // pred_check_branch
        %1783 = sbr.rel (%p1781) target = $region36
      $region35: #{cnn_cifar_forward.4} parent=31 // pred_region
        _
      $region36: #{cnn_cifar_forward.4} parent=31 // pred_fallthru
        _
    $region32: #{cnn_cifar_forward.4} parent=5 // pred_fallthru
      _
    %p1784 = scmp.le.s32.totalorder 2, %s9
    // Predicated region
    $region37: #{cnn_cifar_forward.4} parent=5 // pred_check
      %p1785 = pneg %p1784
    $region38: #{cnn_cifar_forward.4} parent=5 // pred_check_branch
      %1787 = sbr.rel (%p1785) target = $region40
    $region39: #{cnn_cifar_forward.4} parent=5 // pred_region
      %s1788 = ssub.s32 %s9, 2
      // Predicated region
      $region41: #{cnn_cifar_forward.4} parent=39 // pred_check
        %p1789 = pneg %p106
      $region42: #{cnn_cifar_forward.4} parent=39 // pred_check_branch
        %1791 = sbr.rel (%p1789) target = $region44
      $region43: #{cnn_cifar_forward.4} parent=39 // pred_region
        %p1792 = scmp.lt.s32.totalorder %s15, 1
        %s1793 = scalar_select %p1792, %s15, 1
        %s1794 = smul.addr %s1793, 8
        %s1795 = scalar_lea.vmem %s3, %s1794
      $region44: #{cnn_cifar_forward.4} parent=39 // pred_fallthru
        _
    $region40: #{cnn_cifar_forward.4} parent=5 // pred_fallthru
      _
  $region6: #{cnn_cifar_forward.4} parent=0 // loop_footer
    %s13 = sadd.s32 1, %s9
  $region7: #{cnn_cifar_forward.4} parent=0 // loop_footer_branch
    %8 = sbr.rel target = $region3
  $region8: #{cnn_cifar_forward.4} parent=0 // loop_exit
    _

// kernel: cnn_cifar_forward.5
$region0: #{cnn_cifar_forward.5}
  #allocation0 [shape = 'u32[]', space=smem, size = 0x4, offset = 0x4, fixed_abs, tag = 'smem constant byte address 0x4 - core index']
  #allocation1 [shape = 'u32[144,128]{1,0:T(1,128)}', space=vmem, size = 0x12000, scoped, tag = 'internal scratch']
  %s0 = inlined_call_operand.vmem [shape: f32[2,400], index: 0, kind: input, shape index: {}]
  %s1 = inlined_call_operand.vmem [shape: f32[400,120], index: 1, kind: input, shape index: {}]
  %s2 = inlined_call_operand.vmem [shape: f32[1,120], index: 2, kind: input, shape index: {}]
  %s3 = inlined_call_operand.vmem [shape: f32[120,84], index: 3, kind: input, shape index: {}]
  %s4 = inlined_call_operand.vmem [shape: f32[1,84], index: 4, kind: input, shape index: {}]
  %s5 = inlined_call_operand.vmem [shape: f32[84,10], index: 5, kind: input, shape index: {}]
  %s6 = inlined_call_operand.vmem [shape: f32[1,10], index: 6, kind: input, shape index: {}]
  %s7 = inlined_call_operand.hbm [shape: f32[2,10], index: 7, kind: output, shape index: {}]
  %s8 = sld [smem:[#allocation0]]
  $region38: #{cnn_cifar_forward.5} parent=0
    _
  %s10 = ssub.s32 1, %s8
  %s11 = scalar_select 0, %s10, %s8
  $region1: #{cnn_cifar_forward.5} parent=0
    #allocation2 [shape = 'u8[1024]{0}', space=vmem, size = 0x400, scoped, tag = 'output window, operand 0, single buffered']
    #allocation3 [shape = 's32[1]{0}', space=sflag, size = 0x4, scoped, tag = 'scoped memory for cnn_cifar_forward.5']
    %12 = vsyncpa [#allocation3], 0
    // Predicated region
    $region2: #{cnn_cifar_forward.5} parent=1 // pred_check
      _
    $region3: #{cnn_cifar_forward.5} parent=1 // pred_check_branch
      %14 = sbr.rel (0) target = $region5
    $region4: #{cnn_cifar_forward.5} parent=1 // pred_region
      _
    $region5: #{cnn_cifar_forward.5} parent=1 // pred_fallthru
      _
    // Predicated region
    $region6: #{cnn_cifar_forward.5} parent=1 // pred_check
      _
    $region7: #{cnn_cifar_forward.5} parent=1 // pred_check_branch
      %16 = sbr.rel (0) target = $region9
    $region8: #{cnn_cifar_forward.5} parent=1 // pred_region
      _
    $region9: #{cnn_cifar_forward.5} parent=1 // pred_fallthru
      _
    // Predicated region
    $region10: #{cnn_cifar_forward.5} parent=1 // pred_check
      _
    $region11: #{cnn_cifar_forward.5} parent=1 // pred_check_branch
      %18 = sbr.rel (0) target = $region13
    $region12: #{cnn_cifar_forward.5} parent=1 // pred_region
      _
    $region13: #{cnn_cifar_forward.5} parent=1 // pred_fallthru
      _
    // Predicated region
    $region14: #{cnn_cifar_forward.5} parent=1 // pred_check
      _
    $region15: #{cnn_cifar_forward.5} parent=1 // pred_check_branch
      %20 = sbr.rel (0) target = $region17
    $region16: #{cnn_cifar_forward.5} parent=1 // pred_region
      _
    $region17: #{cnn_cifar_forward.5} parent=1 // pred_fallthru
      _
    // Predicated region
    $region18: #{cnn_cifar_forward.5} parent=1 // pred_check
      _
    $region19: #{cnn_cifar_forward.5} parent=1 // pred_check_branch
      %22 = sbr.rel (0) target = $region21
    $region20: #{cnn_cifar_forward.5} parent=1 // pred_region
      _
    $region21: #{cnn_cifar_forward.5} parent=1 // pred_fallthru
      _
    // Predicated region
    $region22: #{cnn_cifar_forward.5} parent=1 // pred_check
      _
    $region23: #{cnn_cifar_forward.5} parent=1 // pred_check_branch
      %24 = sbr.rel (0) target = $region25
    $region24: #{cnn_cifar_forward.5} parent=1 // pred_region
      _
    $region25: #{cnn_cifar_forward.5} parent=1 // pred_fallthru
      _
    // Predicated region
    $region26: #{cnn_cifar_forward.5} parent=1 // pred_check
      _
    $region27: #{cnn_cifar_forward.5} parent=1 // pred_check_branch
      %26 = sbr.rel (0) target = $region29
    $region28: #{cnn_cifar_forward.5} parent=1 // pred_region
      _
    $region29: #{cnn_cifar_forward.5} parent=1 // pred_fallthru
      _
    %v27 = vld [vmem:[%s0] sm:$0xff]
    %v28 = vld [vmem:[%s1] sm:$0xff]
    %v29 = vld [vmem:[%s1 + $0x8] sm:$0xff]
    %v30 = vld [vmem:[%s1 + $0x10] sm:$0xff]
    %v31 = vld [vmem:[%s1 + $0x18] sm:$0xff]
    %v32 = vld [vmem:[%s1 + $0x20] sm:$0xff]
    %v33 = vld [vmem:[%s1 + $0x28] sm:$0xff]
    %v34 = vld [vmem:[%s1 + $0x30] sm:$0xff]
    %v35 = vld [vmem:[%s1 + $0x38] sm:$0xff]
    %v36 = vld [vmem:[%s1 + $0x40] sm:$0xff]
    %v37 = vld [vmem:[%s1 + $0x48] sm:$0xff]
    %v38 = vld [vmem:[%s1 + $0x50] sm:$0xff]
    %v39 = vld [vmem:[%s1 + $0x58] sm:$0xff]
    %v40 = vld [vmem:[%s1 + $0x60] sm:$0xff]
    %v41 = vld [vmem:[%s1 + $0x68] sm:$0xff]
    %v42 = vld [vmem:[%s1 + $0x70] sm:$0xff]
    %v43 = vld [vmem:[%s1 + $0x78] sm:$0xff]
    %v44 = vld [vmem:[%s1 + $0x80] sm:$0xff]
    %v45 = vld [vmem:[%s1 + $0x88] sm:$0xff]
    %v46 = vld [vmem:[%s1 + $0x90] sm:$0xff]
    %v47 = vld [vmem:[%s1 + $0x98] sm:$0xff]
    %v48 = vld [vmem:[%s1 + $0xa0] sm:$0xff]
    %v49 = vld [vmem:[%s1 + $0xa8] sm:$0xff]
    %v50 = vld [vmem:[%s1 + $0xb0] sm:$0xff]
    %v51 = vld [vmem:[%s1 + $0xb8] sm:$0xff]
    %v52 = vld [vmem:[%s1 + $0xc0] sm:$0xff]
    %v53 = vld [vmem:[%s1 + $0xc8] sm:$0xff]
    %v54 = vld [vmem:[%s1 + $0xd0] sm:$0xff]
    %v55 = vld [vmem:[%s1 + $0xd8] sm:$0xff]
    %v56 = vld [vmem:[%s1 + $0xe0] sm:$0xff]
    %v57 = vld [vmem:[%s1 + $0xe8] sm:$0xff]
    %v58 = vld [vmem:[%s1 + $0xf0] sm:$0xff]
    %v59 = vld [vmem:[%s1 + $0xf8] sm:$0xff]
    %v60 = vld [vmem:[%s1 + $0x100] sm:$0xff]
    %v61 = vld [vmem:[%s1 + $0x108] sm:$0xff]
    %v62 = vld [vmem:[%s1 + $0x110] sm:$0xff]
    %v63 = vld [vmem:[%s1 + $0x118] sm:$0xff]
    %v64 = vld [vmem:[%s1 + $0x120] sm:$0xff]
    %v65 = vld [vmem:[%s1 + $0x128] sm:$0xff]
    %v66 = vld [vmem:[%s1 + $0x130] sm:$0xff]
    %v67 = vld [vmem:[%s1 + $0x138] sm:$0xff]
    %v68 = vld [vmem:[%s1 + $0x140] sm:$0xff]
    %v69 = vld [vmem:[%s1 + $0x148] sm:$0xff]
    %v70 = vld [vmem:[%s1 + $0x150] sm:$0xff]
    %v71 = vld [vmem:[%s1 + $0x158] sm:$0xff]
    %v72 = vld [vmem:[%s1 + $0x160] sm:$0xff]
    %v73 = vld [vmem:[%s1 + $0x168] sm:$0xff]
    %v74 = vld [vmem:[%s1 + $0x170] sm:$0xff]
    %v75 = vld [vmem:[%s1 + $0x178] sm:$0xff]
    %v76 = vld [vmem:[%s1 + $0x180] sm:$0xff]
    %v77 = vld [vmem:[%s1 + $0x188] sm:$0xff]
    %v78 = vld [vmem:[%s2] sm:$0x1]
    %v80 = vlaneseq
    %v81 = vshrl.u32 %v80, 7
    %v82 = vsub.s32 0, %v81
    %v83 = vrot.slane %v78, %v82
    %v86 = vcombine.high %v27, %v27
    %v88 = vunpack.c.l.s4 1983009808
    %v89 = vunpack.c.0.s8 %v88
    %v90 = vlaneseq
    %v91 = vshrl.u32 %v90, 7
    %v92 = vsub.s32 %v89, %v91
    %v93 = vrot.slane %v27, %v92
    %v95 = vunpack.c.l.s4 1983009808
    %v96 = vunpack.c.0.s8 %v95
    %v97 = vlaneseq
    %v98 = vshrl.u32 %v97, 7
    %v99 = vsub.s32 %v96, %v98
    %v100 = vrot.slane %v86, %v99
    %v101 = vcombine.high %v93, %v93
    %v102 = vcombine.high %v100, %v100
    %vm106 = vcmask 130048
    %v107 = vsel %vm106, %v102, 0
    %109 = vmatprep.subr.mxu0 0.0
    %110 = vmatpush1.msra.mxu0 %v28
    %111 = vmatprep.subr.mxu0 0.0
    %112 = vmatpush1.msra.mxu0 %v29
    %113 = vmatprep.subr.mxu0 0.0
    %114 = vmatpush1.msra.mxu0 %v30
    %115 = vmatprep.subr.mxu0 0.0
    %116 = vmatpush1.msra.mxu0 %v31
    %117 = vmatprep.subr.mxu0 0.0
    %118 = vmatpush1.msra.mxu0 %v32
    %119 = vmatprep.subr.mxu0 0.0
    %120 = vmatpush1.msra.mxu0 %v33
    %121 = vmatprep.subr.mxu0 0.0
    %122 = vmatpush1.msra.mxu0 %v34
    %123 = vmatprep.subr.mxu0 0.0
    %124 = vmatpush1.msra.mxu0 %v35
    %125 = vmatprep.subr.mxu0 0.0
    %126 = vmatpush1.msra.mxu0 %v36
    %127 = vmatprep.subr.mxu0 0.0
    %128 = vmatpush1.msra.mxu0 %v37
    %129 = vmatprep.subr.mxu0 0.0
    %130 = vmatpush1.msra.mxu0 %v38
    %131 = vmatprep.subr.mxu0 0.0
    %132 = vmatpush1.msra.mxu0 %v39
    %133 = vmatprep.subr.mxu0 0.0
    %134 = vmatpush1.msra.mxu0 %v40
    %135 = vmatprep.subr.mxu0 0.0
    %136 = vmatpush1.msra.mxu0 %v41
    %137 = vmatprep.subr.mxu0 0.0
    %138 = vmatpush1.msra.mxu0 %v42
    %139 = vmatprep.subr.mxu0 0.0
    %140 = vmatpush1.msra.mxu0 %v43
    %141 = vmatprep.subr.mxu0 0.0
    %142 = vmatpush1.msra.mxu0 %v44
    %143 = vmatprep.subr.mxu0 0.0
    %144 = vmatpush1.msra.mxu0 %v45
    %145 = vmatprep.subr.mxu0 0.0
    %146 = vmatpush1.msra.mxu0 %v46
    %147 = vmatprep.subr.mxu0 0.0
    %148 = vmatpush1.msra.mxu0 %v47
    %149 = vmatprep.subr.mxu0 0.0
    %150 = vmatpush1.msra.mxu0 %v48
    %151 = vmatprep.subr.mxu0 0.0
    %152 = vmatpush1.msra.mxu0 %v49
    %153 = vmatprep.subr.mxu0 0.0
    %154 = vmatpush1.msra.mxu0 %v50
    %155 = vmatprep.subr.mxu0 0.0
    %156 = vmatpush1.msra.mxu0 %v51
    %157 = vmatprep.subr.mxu0 0.0
    %158 = vmatpush1.msra.mxu0 %v52
    %159 = vmatprep.subr.mxu0 0.0
    %160 = vmatpush1.msra.mxu0 %v53
    %161 = vmatprep.subr.mxu0 0.0
    %162 = vmatpush1.msra.mxu0 %v54
    %163 = vmatprep.subr.mxu0 0.0
    %164 = vmatpush1.msra.mxu0 %v55
    %165 = vmatprep.subr.mxu0 0.0
    %166 = vmatpush1.msra.mxu0 %v56
    %167 = vmatprep.subr.mxu0 0.0
    %168 = vmatpush1.msra.mxu0 %v57
    %169 = vmatprep.subr.mxu0 0.0
    %170 = vmatpush1.msra.mxu0 %v58
    %171 = vmatprep.subr.mxu0 0.0
    %172 = vmatpush1.msra.mxu0 %v59
    %173 = vmatprep.mubr.f32.mxu0 %v101
    %174 = vmatmul.mubr.f32.gmra.mrb[0].mxu0 %v93
    %v175 = vpop.f32.mrb[0].mxu0
    %v176 = vadd.f32 %v83, %v175
    %v177 = vpop.f32.mrb[0].mxu0
    %178 = vdwg.mxu0
    %179 = vmatprep.subr.mxu0 0.0
    %180 = vmatpush1.msra.mxu0 %v60
    %181 = vmatprep.subr.mxu0 0.0
    %182 = vmatpush1.msra.mxu0 %v61
    %183 = vmatprep.subr.mxu0 0.0
    %184 = vmatpush1.msra.mxu0 %v62
    %185 = vmatprep.subr.mxu0 0.0
    %186 = vmatpush1.msra.mxu0 %v63
    %187 = vmatprep.subr.mxu0 0.0
    %188 = vmatpush1.msra.mxu0 %v64
    %189 = vmatprep.subr.mxu0 0.0
    %190 = vmatpush1.msra.mxu0 %v65
    %191 = vmatprep.subr.mxu0 0.0
    %192 = vmatpush1.msra.mxu0 %v66
    %193 = vmatprep.subr.mxu0 0.0
    %194 = vmatpush1.msra.mxu0 %v67
    %195 = vmatprep.subr.mxu0 0.0
    %196 = vmatpush1.msra.mxu0 %v68
    %197 = vmatprep.subr.mxu0 0.0
    %198 = vmatpush1.msra.mxu0 %v69
    %199 = vmatprep.subr.mxu0 0.0
    %200 = vmatpush1.msra.mxu0 %v70
    %201 = vmatprep.subr.mxu0 0.0
    %202 = vmatpush1.msra.mxu0 %v71
    %203 = vmatprep.subr.mxu0 0.0
    %204 = vmatpush1.msra.mxu0 %v72
    %205 = vmatprep.subr.mxu0 0.0
    %206 = vmatpush1.msra.mxu0 %v73
    %207 = vmatprep.subr.mxu0 0.0
    %208 = vmatpush1.msra.mxu0 %v74
    %209 = vmatprep.subr.mxu0 0.0
    %210 = vmatpush1.msra.mxu0 %v75
    %211 = vmatprep.subr.mxu0 0.0
    %212 = vmatpush1.msra.mxu0 %v76
    %213 = vmatprep.subr.mxu0 0.0
    %214 = vmatpush1.msra.mxu0 %v77
    %215 = vmatprep.subr.mxu0 0.0
    %216 = vmatpush1.msra.mxu0 0.0
    %217 = vmatprep.subr.mxu0 0.0
    %218 = vmatpush1.msra.mxu0 0.0
    %219 = vmatprep.subr.mxu0 0.0
    %220 = vmatpush1.msra.mxu0 0.0
    %221 = vmatprep.subr.mxu0 0.0
    %222 = vmatpush1.msra.mxu0 0.0
    %223 = vmatprep.subr.mxu0 0.0
    %224 = vmatpush1.msra.mxu0 0.0
    %225 = vmatprep.subr.mxu0 0.0
    %226 = vmatpush1.msra.mxu0 0.0
    %227 = vmatprep.subr.mxu0 0.0
    %228 = vmatpush1.msra.mxu0 0.0
    %229 = vmatprep.subr.mxu0 0.0
    %230 = vmatpush1.msra.mxu0 0.0
    %231 = vmatprep.subr.mxu0 0.0
    %232 = vmatpush1.msra.mxu0 0.0
    %233 = vmatprep.subr.mxu0 0.0
    %234 = vmatpush1.msra.mxu0 0.0
    %235 = vmatprep.subr.mxu0 0.0
    %236 = vmatpush1.msra.mxu0 0.0
    %237 = vmatprep.subr.mxu0 0.0
    %238 = vmatpush1.msra.mxu0 0.0
    %239 = vmatprep.subr.mxu0 0.0
    %240 = vmatpush1.msra.mxu0 0.0
    %241 = vmatprep.subr.mxu0 0.0
    %242 = vmatpush1.msra.mxu0 0.0
    %243 = vmatprep.mubr.f32.mxu0 %v107
    %244 = vmatmul.mubr.f32.gmra.mrb[0].mxu0 %v100
    %v245 = vpop.f32.mrb[0].mxu0
    %v246 = vadd.f32 %v176, %v245
    %v247 = vpop.f32.mrb[0].mxu0
    %248 = vdwg.mxu0
    %v249 = vmax.f32 %v246, 0.0
    %v250 = vld [vmem:[%s3] sm:$0xff]
    %v251 = vld [vmem:[%s3 + $0x8] sm:$0xff]
    %v252 = vld [vmem:[%s3 + $0x10] sm:$0xff]
    %v253 = vld [vmem:[%s3 + $0x18] sm:$0xff]
    %v254 = vld [vmem:[%s3 + $0x20] sm:$0xff]
    %v255 = vld [vmem:[%s3 + $0x28] sm:$0xff]
    %v256 = vld [vmem:[%s3 + $0x30] sm:$0xff]
    %v257 = vld [vmem:[%s3 + $0x38] sm:$0xff]
    %v258 = vld [vmem:[%s3 + $0x40] sm:$0xff]
    %v259 = vld [vmem:[%s3 + $0x48] sm:$0xff]
    %v260 = vld [vmem:[%s3 + $0x50] sm:$0xff]
    %v261 = vld [vmem:[%s3 + $0x58] sm:$0xff]
    %v262 = vld [vmem:[%s3 + $0x60] sm:$0xff]
    %v263 = vld [vmem:[%s3 + $0x68] sm:$0xff]
    %v264 = vld [vmem:[%s3 + $0x70] sm:$0xff]
    %v265 = vld [vmem:[%s4] sm:$0x1]
    %v267 = vlaneseq
    %v268 = vshrl.u32 %v267, 7
    %v269 = vsub.s32 0, %v268
    %v270 = vrot.slane %v265, %v269
    %vm272 = vcmask 982016
    %v274 = vsel %vm272, %v249, 0
    %276 = vmatprep.subr.mxu0 0.0
    %277 = vmatpush1.msra.mxu0 %v250
    %278 = vmatprep.subr.mxu0 0.0
    %279 = vmatpush1.msra.mxu0 %v251
    %280 = vmatprep.subr.mxu0 0.0
    %281 = vmatpush1.msra.mxu0 %v252
    %282 = vmatprep.subr.mxu0 0.0
    %283 = vmatpush1.msra.mxu0 %v253
    %284 = vmatprep.subr.mxu0 0.0
    %285 = vmatpush1.msra.mxu0 %v254
    %286 = vmatprep.subr.mxu0 0.0
    %287 = vmatpush1.msra.mxu0 %v255
    %288 = vmatprep.subr.mxu0 0.0
    %289 = vmatpush1.msra.mxu0 %v256
    %290 = vmatprep.subr.mxu0 0.0
    %291 = vmatpush1.msra.mxu0 %v257
    %292 = vmatprep.subr.mxu0 0.0
    %293 = vmatpush1.msra.mxu0 %v258
    %294 = vmatprep.subr.mxu0 0.0
    %295 = vmatpush1.msra.mxu0 %v259
    %296 = vmatprep.subr.mxu0 0.0
    %297 = vmatpush1.msra.mxu0 %v260
    %298 = vmatprep.subr.mxu0 0.0
    %299 = vmatpush1.msra.mxu0 %v261
    %300 = vmatprep.subr.mxu0 0.0
    %301 = vmatpush1.msra.mxu0 %v262
    %302 = vmatprep.subr.mxu0 0.0
    %303 = vmatpush1.msra.mxu0 %v263
    %304 = vmatprep.subr.mxu0 0.0
    %305 = vmatpush1.msra.mxu0 %v264
    %306 = vmatprep.subr.mxu0 0.0
    %307 = vmatpush1.msra.mxu0 0.0
    %308 = vmatprep.subr.mxu0 0.0
    %309 = vmatpush1.msra.mxu0 0.0
    %310 = vmatprep.subr.mxu0 0.0
    %311 = vmatpush1.msra.mxu0 0.0
    %312 = vmatprep.subr.mxu0 0.0
    %313 = vmatpush1.msra.mxu0 0.0
    %314 = vmatprep.subr.mxu0 0.0
    %315 = vmatpush1.msra.mxu0 0.0
    %316 = vmatprep.subr.mxu0 0.0
    %317 = vmatpush1.msra.mxu0 0.0
    %318 = vmatprep.subr.mxu0 0.0
    %319 = vmatpush1.msra.mxu0 0.0
    %320 = vmatprep.subr.mxu0 0.0
    %321 = vmatpush1.msra.mxu0 0.0
    %322 = vmatprep.subr.mxu0 0.0
    %323 = vmatpush1.msra.mxu0 0.0
    %324 = vmatprep.subr.mxu0 0.0
    %325 = vmatpush1.msra.mxu0 0.0
    %326 = vmatprep.subr.mxu0 0.0
    %327 = vmatpush1.msra.mxu0 0.0
    %328 = vmatprep.subr.mxu0 0.0
    %329 = vmatpush1.msra.mxu0 0.0
    %330 = vmatprep.subr.mxu0 0.0
    %331 = vmatpush1.msra.mxu0 0.0
    %332 = vmatprep.subr.mxu0 0.0
    %333 = vmatpush1.msra.mxu0 0.0
    %334 = vmatprep.subr.mxu0 0.0
    %335 = vmatpush1.msra.mxu0 0.0
    %336 = vmatprep.subr.mxu0 0.0
    %337 = vmatpush1.msra.mxu0 0.0
    %338 = vmatprep.subr.mxu0 0.0
    %339 = vmatpush1.msra.mxu0 0.0
    %340 = vmatprep.mubr.f32.mxu0 0.0
    %341 = vmatmul.mubr.f32.gmra.mrb[0].mxu0 %v274
    %v342 = vpop.f32.mrb[0].mxu0
    %v343 = vadd.f32 %v270, %v342
    %v344 = vpop.f32.mrb[0].mxu0
    %345 = vdwg.mxu0
    %v346 = vmax.f32 %v343, 0.0
    %v347 = vld [vmem:[%s5] sm:$0xff]
    %v348 = vld [vmem:[%s5 + $0x8] sm:$0xff]
    %v349 = vld [vmem:[%s5 + $0x10] sm:$0xff]
    %v350 = vld [vmem:[%s5 + $0x18] sm:$0xff]
    %v351 = vld [vmem:[%s5 + $0x20] sm:$0xff]
    %v352 = vld [vmem:[%s5 + $0x28] sm:$0xff]
    %v353 = vld [vmem:[%s5 + $0x30] sm:$0xff]
    %v354 = vld [vmem:[%s5 + $0x38] sm:$0xff]
    %v355 = vld [vmem:[%s5 + $0x40] sm:$0xff]
    %v356 = vld [vmem:[%s5 + $0x48] sm:$0xff]
    %v357 = vld [vmem:[%s5 + $0x50] sm:$0xf]
    %v358 = vld [vmem:[%s6] sm:$0x1]
    %v360 = vlaneseq
    %v361 = vshrl.u32 %v360, 7
    %v362 = vsub.s32 0, %v361
    %v363 = vrot.slane %v358, %v362
    %vm365 = vcmask 687104
    %v367 = vsel %vm365, %v346, 0
    %vm369 = vcmask 1043456
    %v371 = vsel %vm369, %v357, 0
    %373 = vmatprep.subr.mxu0 0.0
    %374 = vmatpush1.msra.mxu0 %v347
    %375 = vmatprep.subr.mxu0 0.0
    %376 = vmatpush1.msra.mxu0 %v348
    %377 = vmatprep.subr.mxu0 0.0
    %378 = vmatpush1.msra.mxu0 %v349
    %379 = vmatprep.subr.mxu0 0.0
    %380 = vmatpush1.msra.mxu0 %v350
    %381 = vmatprep.subr.mxu0 0.0
    %382 = vmatpush1.msra.mxu0 %v351
    %383 = vmatprep.subr.mxu0 0.0
    %384 = vmatpush1.msra.mxu0 %v352
    %385 = vmatprep.subr.mxu0 0.0
    %386 = vmatpush1.msra.mxu0 %v353
    %387 = vmatprep.subr.mxu0 0.0
    %388 = vmatpush1.msra.mxu0 %v354
    %389 = vmatprep.subr.mxu0 0.0
    %390 = vmatpush1.msra.mxu0 %v355
    %391 = vmatprep.subr.mxu0 0.0
    %392 = vmatpush1.msra.mxu0 %v356
    %393 = vmatprep.subr.mxu0 0.0
    %394 = vmatpush1.msra.mxu0 %v371
    %395 = vmatprep.subr.mxu0 0.0
    %396 = vmatpush1.msra.mxu0 0.0
    %397 = vmatprep.subr.mxu0 0.0
    %398 = vmatpush1.msra.mxu0 0.0
    %399 = vmatprep.subr.mxu0 0.0
    %400 = vmatpush1.msra.mxu0 0.0
    %401 = vmatprep.subr.mxu0 0.0
    %402 = vmatpush1.msra.mxu0 0.0
    %403 = vmatprep.subr.mxu0 0.0
    %404 = vmatpush1.msra.mxu0 0.0
    %405 = vmatprep.subr.mxu0 0.0
    %406 = vmatpush1.msra.mxu0 0.0
    %407 = vmatprep.subr.mxu0 0.0
    %408 = vmatpush1.msra.mxu0 0.0
    %409 = vmatprep.subr.mxu0 0.0
    %410 = vmatpush1.msra.mxu0 0.0
    %411 = vmatprep.subr.mxu0 0.0
    %412 = vmatpush1.msra.mxu0 0.0
    %413 = vmatprep.subr.mxu0 0.0
    %414 = vmatpush1.msra.mxu0 0.0
    %415 = vmatprep.subr.mxu0 0.0
    %416 = vmatpush1.msra.mxu0 0.0
    %417 = vmatprep.subr.mxu0 0.0
    %418 = vmatpush1.msra.mxu0 0.0
    %419 = vmatprep.subr.mxu0 0.0
    %420 = vmatpush1.msra.mxu0 0.0
    %421 = vmatprep.subr.mxu0 0.0
    %422 = vmatpush1.msra.mxu0 0.0
    %423 = vmatprep.subr.mxu0 0.0
    %424 = vmatpush1.msra.mxu0 0.0
    %425 = vmatprep.subr.mxu0 0.0
    %426 = vmatpush1.msra.mxu0 0.0
    %427 = vmatprep.subr.mxu0 0.0
    %428 = vmatpush1.msra.mxu0 0.0
    %429 = vmatprep.subr.mxu0 0.0
    %430 = vmatpush1.msra.mxu0 0.0
    %431 = vmatprep.subr.mxu0 0.0
    %432 = vmatpush1.msra.mxu0 0.0
    %433 = vmatprep.subr.mxu0 0.0
    %434 = vmatpush1.msra.mxu0 0.0
    %435 = vmatprep.subr.mxu0 0.0
    %436 = vmatpush1.msra.mxu0 0.0
    %437 = vmatprep.mubr.f32.mxu0 0.0
    %438 = vmatmul.mubr.f32.gmra.mrb[0].mxu0 %v367
    %v439 = vpop.f32.mrb[0].mxu0
    %v440 = vadd.f32 %v363, %v439
    %v441 = vpop.f32.mrb[0].mxu0
    %442 = vdwg.mxu0
    %vm443 = vcmask 74752
    %444 = vst.msk [vmem:[#allocation2] sm:$0x3] %vm443, %v440
    // Predicated region
    $region30: #{cnn_cifar_forward.5} parent=1 // pred_check
      _
    $region31: #{cnn_cifar_forward.5} parent=1 // pred_check_branch
      %446 = sbr.rel (0) target = $region33
    $region32: #{cnn_cifar_forward.5} parent=1 // pred_region
      %s448 = ssub.s32 32, 32
      %449 = vsyncadd [#allocation3], %s448
      %s451 = sshll.u32 [#allocation2], 4
      %s452 = int_to_ptr.vmem [resolvable:$true] %s451
      %454 = dma.vmem_to_hbm [thread:$0]  %s452, 32, %s7, [#allocation3]
    $region33: #{cnn_cifar_forward.5} parent=1 // pred_fallthru
      _
    // Predicated region
    $region34: #{cnn_cifar_forward.5} parent=1 // pred_check
      _
    $region35: #{cnn_cifar_forward.5} parent=1 // pred_check_branch
      %456 = sbr.rel (0) target = $region37
    $region36: #{cnn_cifar_forward.5} parent=1 // pred_region
      %457 = dma.done [#allocation3], 32
    $region37: #{cnn_cifar_forward.5} parent=1 // pred_fallthru
      _
    %458 = vsyncpa [#allocation3], 1

</llo_original>
